<compile_context>
chip_gen: v7x
topology: tpu7x:2x2x1
jax: 0.10.0
libtpu: 0.0.40
codegen_flags: <defaults>
</compile_context>

<pallas_src>
import jax
import jax.numpy as jnp
from jax.experimental import pallas as pl
from jax.experimental.pallas import tpu as pltpu


# ----------------------------------------------------------------------------------------------
# fused kernel factory
# ----------------------------------------------------------------------------------------------

def _make_fused_kernel(*, stride, tho, n_bands, W, Wrow, Wo, Chid,
                       has_expand, use_res, zero_last_row, left_col, right_col, col_off):
    """Fused expand -> dw3x3 -> project kernel for one (batch, output-row band) grid point."""
    band_in = stride * tho + (3 - stride)          # padded input rows needed by `tho` out rows

    def kernel(*refs):
        if has_expand:
            (x_ref, we_ref, sh1_ref, wd_ref, sh2_ref, wp_ref, sh3_ref,
             o_ref, h_scr, dw_scr) = refs
        else:
            (x_ref, wd_ref, sh2_ref, wp_ref, sh3_ref, o_ref, dw_scr) = refs
            h_scr = None

        b_idx = pl.program_id(1)
        base_row = b_idx * (tho * stride)          # first padded-image row of this band

        # ---- expand: 1x1 conv (BN scale folded) + shift + ReLU6 into VMEM hidden band ----
        if has_expand:
            xb = x_ref[0, pl.ds(base_row, band_in), :, :]          # (band_in, Wrow, Cin)
            xb = xb.reshape(band_in * Wrow, xb.shape[-1])          # Wrow % 8 == 0 -> free
            h = jnp.dot(xb, we_ref[...], preferred_element_type=jnp.float32)
            h = jnp.clip(h + sh1_ref[...], 0.0, 6.0)
            h_scr[...] = h.reshape(band_in, Wrow, Chid)

            # re-zero the 1px halo (x halo is 0, but "+shift, clip" made it clip(sh1,0,6)):
            #  * left / right pad column of every band row (2 tiny column stores),
            #  * top / bottom pad row only on the first / last band.
            zcol = jnp.zeros((band_in, 1, Chid), jnp.float32)
            h_scr[:, left_col:left_col + 1, :] = zcol
            h_scr[:, right_col:right_col + 1, :] = zcol
            zrow = jnp.zeros((1, Wrow, Chid), jnp.float32)

            def _zero_top():
                h_scr[0:1] = zrow

            def _zero_bot():
                h_scr[band_in - 1:band_in] = zrow

            if n_bands == 1:
                _zero_top()
                if zero_last_row:
                    _zero_bot()
            else:
                pl.when(b_idx == 0)(_zero_top)
                if zero_last_row:
                    pl.when(b_idx == n_bands - 1)(_zero_bot)

        # ---- depthwise 3x3 (+BN shift, ReLU6); weights hoisted, one row load per (r,kh) ----
        wk = [wd_ref[k:k + 1, :] for k in range(9)]                # hoisted out of row loop
        sh2 = sh2_ref[...]

        def load_row(local):
            if has_expand:
                return h_scr[local]                                # (Wrow, Chid), f32
            # expand_ratio == 1: read taps straight from the input block (no staging copy)
            v = x_ref[0, pl.ds(base_row + local, 1), :, :]
            return v.reshape(Wrow, Chid)

        for r in range(tho):
            acc = None
            for kh in range(3):
                row = load_row(r * stride + kh).astype(jnp.float32)
                for kw in range(3):
                    c0 = col_off[kw]
                    tap = row[c0:c0 + Wo, :] * wk[3 * kh + kw]
                    acc = tap if acc is None else acc + tap
            dw_scr[r * Wo:(r + 1) * Wo, :] = jnp.clip(acc + sh2, 0.0, 6.0).astype(dw_scr.dtype)

        # ---- project: single band-wide 1x1-conv matmul (+BN shift) + fused residual ----
        out = jnp.dot(dw_scr[...], wp_ref[...], preferred_element_type=jnp.float32)
        out = (out + sh3_ref[...]).reshape(tho, Wo, -1)
        if use_res:
            res = x_ref[0, pl.ds(base_row + 1, tho), 1:1 + W, :]   # (tho, W==Wo, Cin==Cout)
            out = out + res.astype(jnp.float32)
        o_ref[0] = out.astype(o_ref.dtype)                         # single band store

    return kernel


# ----------------------------------------------------------------------------------------------
# module wrapper
# ----------------------------------------------------------------------------------------------

def _fold_bn(gamma, beta, mean, var, eps=1e-5):
    inv = gamma / jnp.sqrt(var + eps)
    return inv, beta - mean * inv


def inverted_residual_forward(x_nchw, params, *, stride, expand_ratio, inp, oup,
                              compute_dtype=jnp.bfloat16, vmem_budget_mb=8,
                              max_band_rows=None, eps=1e-5):
    assert stride in (1, 2), "Stride must be 1 or 2"
    has_expand = expand_ratio != 1
    use_res = (stride == 1) and (inp == oup)

    x = jnp.transpose(x_nchw, (0, 2, 3, 1)).astype(jnp.float32)     # NCHW -> NHWC
    N, H, W, Cin = x.shape
    assert Cin == inp
    Chid = int(inp * expand_ratio) if has_expand else inp
    Cout = oup
    Ho = (H - 1) // stride + 1
    Wo = (W - 1) // stride + 1
    Wp2 = W + 2
    Wrow = ((Wp2 + 7) // 8) * 8                    # stored row length padded to x8 sublanes

    # ---- fold BN scale into conv weights; only the shifts enter the kernel ----
    sc2, sh2 = _fold_bn(*params["bn2"], eps=eps)
    sc3, sh3 = _fold_bn(*params["bn3"], eps=eps)
    # torch depthwise Conv2d(hidden,hidden,3,groups=hidden) weight stored here as (3,3,hidden)
    w_dw = (params["w_dw"] * sc2).reshape(9, Chid).astype(jnp.float32)
    sh2 = sh2.reshape(1, Chid).astype(jnp.float32)
    # torch Conv2d(hidden,oup,1) weight stored here as (hidden,oup)
    w_proj = (params["w_proj"] * sc3[None, :]).astype(compute_dtype)
    sh3 = sh3.reshape(1, Cout).astype(jnp.float32)

    # ---- 1px halo; stride-2 even/odd column de-interleave; pad rows to Wrow ----
    xp = jnp.pad(x, ((0, 0), (1, 1), (1, 1), (0, 0)))
    if stride == 2:
        n_even = (Wp2 + 1) // 2
        xp = jnp.concatenate([xp[:, :, 0::2, :], xp[:, :, 1::2, :]], axis=2)
        col_off = (0, n_even, 1)                   # kw=0 -> even, kw=1 -> odd, kw=2 -> even+1
        c = W + 1                                  # original right-pad column
        right_col = c // 2 if c % 2 == 0 else n_even + c // 2
    else:
        col_off = (0, 1, 2)
        right_col = W + 1
    left_col = 0
    if Wrow > Wp2:
        xp = jnp.pad(xp, ((0, 0), (0, 0), (0, Wrow - Wp2), (0, 0)))
    xin = xp.astype(compute_dtype)                 # (N, H+2, Wrow, Cin)

    # ---- band (output-row tile) selection: biggest divisor of Ho within the VMEM budget ----
    itemsize = jnp.dtype(compute_dtype).itemsize
    budget = vmem_budget_mb * (1 << 20)
    tho = 1
    for cand in range(1, Ho + 1):
        if Ho % cand:
            continue
        if max_band_rows is not None and cand > max_band_rows:
            continue
        if N == 1 and Ho >= 2 and Ho // cand < 2:
            continue                               # keep >=2 band steps for the 2nd TC (v7x)
        bi = stride * cand + (3 - stride)
        var_bytes = ((bi * Wrow * Chid * 4 if has_expand else 0)
                     + cand * Wo * Chid * itemsize
                     + 2 * cand * Wo * Cout * 4)
        if var_bytes <= budget:
            tho = cand
    n_bands = Ho // tho
    band_in = stride * tho + (3 - stride)
    zero_last_row = (stride == 1) or (H % 2 == 1)  # bottom pad row only ever read then

    # ---- operands / specs ----
    operands = [xin]
    in_specs = [pl.BlockSpec((1, H + 2, Wrow, Cin), lambda n, b: (n, 0, 0, 0))]
    if has_expand:
        sc1, sh1 = _fold_bn(*params["bn1"], eps=eps)
        # torch Conv2d(inp,hidden,1) weight stored here as (inp,hidden)
        w_exp = (params["w_expand"] * sc1[None, :]).astype(compute_dtype)
        sh1 = sh1.reshape(1, Chid).astype(jnp.float32)
        operands += [w_exp, sh1]
        in_specs += [pl.BlockSpec((Cin, Chid), lambda n, b: (0, 0)),
                     pl.BlockSpec((1, Chid), lambda n, b: (0, 0))]
    operands += [w_dw, sh2, w_proj, sh3]
    in_specs += [pl.BlockSpec((9, Chid), lambda n, b: (0, 0)),
                 pl.BlockSpec((1, Chid), lambda n, b: (0, 0)),
                 pl.BlockSpec((Chid, Cout), lambda n, b: (0, 0)),
                 pl.BlockSpec((1, Cout), lambda n, b: (0, 0))]

    scratch = []
    if has_expand:
        scratch.append(pltpu.VMEM((band_in, Wrow, Chid), jnp.float32))   # hidden band (f32 VPU)
    scratch.append(pltpu.VMEM((tho * Wo, Chid), compute_dtype))          # dw band (bf16 -> MXU)

    kernel = _make_fused_kernel(stride=stride, tho=tho, n_bands=n_bands, W=W, Wrow=Wrow,
                                Wo=Wo, Chid=Chid, has_expand=has_expand, use_res=use_res,
                                zero_last_row=zero_last_row, left_col=left_col,
                                right_col=right_col, col_off=col_off)

    est = (2 * (H + 2) * Wrow * Cin * itemsize            # double-buffered input block
           + 2 * tho * Wo * Cout * 4                      # double-buffered output block
           + (band_in * Wrow * Chid * 4 if has_expand else 0)
           + tho * Wo * Chid * itemsize
           + (Cin * Chid + Chid * Cout + 16 * Chid + 8 * Cout) * 4)
    vmem_limit = int(min(64 << 20, max(16 << 20, 2 * est)))   # <= 64 MiB: v7x physical VMEM

    # v7x megacore: shard batch across TCs when possible; only band-parallel when N == 1.
    dims = ("parallel", "arbitrary") if N >= 2 else ("arbitrary", "parallel")

    out4d = pl.pallas_call(
        kernel,
        out_shape=jax.ShapeDtypeStruct((N, Ho, Wo, Cout), jnp.float32),
        grid_spec=pltpu.PrefetchScalarGridSpec(
            num_scalar_prefetch=0,
            grid=(N, n_bands),
            in_specs=in_specs,
            out_specs=pl.BlockSpec((1, tho, Wo, Cout), lambda n, b: (n, b, 0, 0)),
            scratch_shapes=scratch),
        compiler_params=pltpu.CompilerParams(
            dimension_semantics=dims,
            vmem_limit_bytes=vmem_limit),
    )(*operands)

    return jnp.transpose(out4d, (0, 3, 1, 2))              # NHWC -> NCHW


# ----------------------------------------------------------------------------------------------
# plain-JAX reference (unfolded BN) for validation
# ----------------------------------------------------------------------------------------------

def reference_forward(x_nchw, params, *, stride, expand_ratio, inp, oup, eps=1e-5):
    def bn(t, p):
        g, b_, m, v = p
        return (t - m) / jnp.sqrt(v + eps) * g + b_

    x = jnp.transpose(x_nchw, (0, 2, 3, 1))
    h = x
    if expand_ratio != 1:
        h = jnp.einsum("nhwc,ck->nhwk", h, params["w_expand"])
        h = jnp.clip(bn(h, params["bn1"]), 0.0, 6.0)
    hp = jnp.pad(h, ((0, 0), (1, 1), (1, 1), (0, 0)))
    Hh, Wh = h.shape[1], h.shape[2]
    acc = jnp.zeros_like(h)
    for kh in range(3):
        for kw in range(3):
            acc = acc + hp[:, kh:kh + Hh, kw:kw + Wh, :] * params["w_dw"][kh, kw, :]
    if stride == 2:
        acc = acc[:, ::2, ::2, :]
    h = jnp.clip(bn(acc, params["bn2"]), 0.0, 6.0)
    out = bn(jnp.einsum("nhwc,ck->nhwk", h, params["w_proj"]), params["bn3"])
    if stride == 1 and inp == oup:
        out = out + x
    return jnp.transpose(out, (0, 3, 1, 2))


# ----------------------------------------------------------------------------------------------

if __name__ == "__main__":
    key = jax.random.PRNGKey(0)

    def bn_params(k, c):
        k1, k2, k3, k4 = jax.random.split(k, 4)
        gamma = 1.0 + 0.1 * jax.random.normal(k1, (c,), jnp.float32)
        beta = 0.1 * jax.random.normal(k2, (c,), jnp.float32)
        mean = 0.1 * jax.random.normal(k3, (c,), jnp.float32)
        var = jax.random.uniform(k4, (c,), jnp.float32, minval=0.5, maxval=1.5)
        return gamma, beta, mean, var

    def make_params(k, inp, oup, expand_ratio):
        hidden = int(inp * expand_ratio)
        ks = jax.random.split(k, 6)
        p = {
            "w_dw": 0.2 * jax.random.normal(ks[2], (3, 3, hidden), jnp.float32),
            "bn2": bn_params(ks[3], hidden),
            "w_proj": 0.2 * jax.random.normal(ks[4], (hidden, oup), jnp.float32),
            "bn3": bn_params(ks[5], oup),
        }
        if expand_ratio != 1:
            p["w_expand"] = 0.2 * jax.random.normal(ks[0], (inp, hidden), jnp.float32)
            p["bn1"] = bn_params(ks[1], hidden)
        return p

    configs = [
        dict(N=2, inp=4, oup=4, H=16, W=16, stride=1, expand_ratio=4, max_band_rows=None),  # residual
        dict(N=2, inp=4, oup=8, H=16, W=16, stride=2, expand_ratio=4, max_band_rows=None),  # stride-2
        dict(N=2, inp=8, oup=8, H=16, W=16, stride=1, expand_ratio=1, max_band_rows=None),  # no expand
        dict(N=1, inp=4, oup=4, H=16, W=16, stride=1, expand_ratio=4, max_band_rows=4),     # multi-band, N==1
        dict(N=2, inp=4, oup=8, H=16, W=16, stride=2, expand_ratio=4, max_band_rows=2),     # multi-band, s=2
    ]

    for i, cfg in enumerate(configs):
        kx, kp, key = jax.random.split(key, 3)
        x = jax.random.normal(kx, (cfg["N"], cfg["inp"], cfg["H"], cfg["W"]), jnp.float32)
        params = make_params(kp, cfg["inp"], cfg["oup"], cfg["expand_ratio"])
        ref = reference_forward(x, params, stride=cfg["stride"],
                                expand_ratio=cfg["expand_ratio"],
                                inp=cfg["inp"], oup=cfg["oup"])
        Ho = (cfg["H"] - 1) // cfg["stride"] + 1
        Wo = (cfg["W"] - 1) // cfg["stride"] + 1

        # exact (f32) path: strict check of the fused algorithm
        out32 = inverted_residual_forward(x, params, stride=cfg["stride"],
                                          expand_ratio=cfg["expand_ratio"],
                                          inp=cfg["inp"], oup=cfg["oup"],
                                          compute_dtype=jnp.float32,
                                          max_band_rows=cfg["max_band_rows"])
        out32 = jax.block_until_ready(out32)
        assert out32.shape == (cfg["N"], cfg["oup"], Ho, Wo), (i, out32.shape)
        err32 = float(jnp.max(jnp.abs(out32 - ref)))
        assert err32 < 1e-3, (i, "f32", err32)

        # default perf path: bf16 into the MXU (f32 accumulation) — loose tolerance
        outbf = inverted_residual_forward(x, params, stride=cfg["stride"],
                                          expand_ratio=cfg["expand_ratio"],
                                          inp=cfg["inp"], oup=cfg["oup"],
                                          max_band_rows=cfg["max_band_rows"])
        outbf = jax.block_until_ready(outbf)
        assert outbf.shape == (cfg["N"], cfg["oup"], Ho, Wo), (i, outbf.shape)
        assert bool(jnp.all(jnp.isfinite(outbf))), (i, "bf16 non-finite")
        errbf = float(jnp.max(jnp.abs(outbf - ref)))
        assert errbf < 0.35, (i, "bf16", errbf)

    print("KERNEL_OK")
</pallas_src>

<mosaic_0001>
module attributes {stable_mosaic.version = 11 : i64} {
  func.func @kernel(%arg0: i32, %arg1: i32, %arg2: memref<1x18x24x4xf32, #tpu.memory_space<vmem>>, %arg3: memref<4x16xf32, #tpu.memory_space<vmem>>, %arg4: memref<1x16xf32, #tpu.memory_space<vmem>>, %arg5: memref<9x16xf32, #tpu.memory_space<vmem>>, %arg6: memref<1x16xf32, #tpu.memory_space<vmem>>, %arg7: memref<16x4xf32, #tpu.memory_space<vmem>>, %arg8: memref<1x4xf32, #tpu.memory_space<vmem>>, %arg9: memref<1x16x16x4xf32, #tpu.memory_space<vmem>>, %arg10: memref<18x24x16xf32, #tpu.memory_space<vmem>>, %arg11: memref<256x16xf32, #tpu.memory_space<vmem>>) attributes {dimension_semantics = [#tpu.dimension_semantics<parallel>, #tpu.dimension_semantics<arbitrary>], iteration_bounds = array<i64: 2, 1>, scalar_prefetch = 0 : i64, scratch_operands = 2 : i64, tpu.core_type = #tpu.core_type<tc>, window_params = [{transform_indices = @transform_0, window_bounds = array<i64: 1, 18, 24, 4>}, {pipeline_mode = #tpu.pipeline_mode<synchronous>, transform_indices = @transform_1, window_bounds = array<i64: 4, 16>}, {pipeline_mode = #tpu.pipeline_mode<synchronous>, transform_indices = @transform_2, window_bounds = array<i64: 1, 16>}, {pipeline_mode = #tpu.pipeline_mode<synchronous>, transform_indices = @transform_3, window_bounds = array<i64: 9, 16>}, {pipeline_mode = #tpu.pipeline_mode<synchronous>, transform_indices = @transform_4, window_bounds = array<i64: 1, 16>}, {pipeline_mode = #tpu.pipeline_mode<synchronous>, transform_indices = @transform_5, window_bounds = array<i64: 16, 4>}, {pipeline_mode = #tpu.pipeline_mode<synchronous>, transform_indices = @transform_6, window_bounds = array<i64: 1, 4>}, {transform_indices = @transform_7, window_bounds = array<i64: 1, 16, 16, 4>}]} {
    %c16_i32 = arith.constant 16 : i32
    %0 = arith.muli %arg1, %c16_i32 : i32
    %c0 = arith.constant 0 : index
    %1 = arith.index_cast %0 : i32 to index
    %c0_0 = arith.constant 0 : index
    %c0_1 = arith.constant 0 : index
    %2 = vector.load %arg2[%c0, %1, %c0_0, %c0_1] : memref<1x18x24x4xf32, #tpu.memory_space<vmem>>, vector<1x18x24x4xf32>
    %3 = vector.shape_cast %2 : vector<1x18x24x4xf32> to vector<18x24x4xf32>
    %4 = vector.shape_cast %3 : vector<18x24x4xf32> to vector<432x4xf32>
    %c0_2 = arith.constant 0 : index
    %c0_3 = arith.constant 0 : index
    %5 = vector.load %arg3[%c0_2, %c0_3] : memref<4x16xf32, #tpu.memory_space<vmem>>, vector<4x16xf32>
    %cst = arith.constant dense<0.000000e+00> : vector<432x16xf32>
    %6 = tpu.matmul %4, %5, %cst {dimension_numbers = #tpu.dot_dimension_numbers<[1], [0], [0], [1], [0, 0, 1, 1], [], []>} : vector<432x4xf32>, vector<4x16xf32>, vector<432x16xf32> -> vector<432x16xf32>
    %c0_4 = arith.constant 0 : index
    %c0_5 = arith.constant 0 : index
    %7 = vector.load %arg4[%c0_4, %c0_5] : memref<1x16xf32, #tpu.memory_space<vmem>>, vector<1x16xf32>
    %8 = vector.broadcast %7 : vector<1x16xf32> to vector<432x16xf32>
    %9 = arith.addf %6, %8 : vector<432x16xf32>
    %cst_6 = arith.constant 0.000000e+00 : f32
    %cst_7 = arith.constant 6.000000e+00 : f32
    %10 = vector.broadcast %cst_6 : f32 to vector<432x16xf32>
    %11 = arith.maximumf %10, %9 : vector<432x16xf32>
    %12 = vector.broadcast %cst_7 : f32 to vector<432x16xf32>
    %13 = arith.minimumf %12, %11 : vector<432x16xf32>
    %14 = vector.shape_cast %13 : vector<432x16xf32> to vector<18x24x16xf32>
    %c0_8 = arith.constant 0 : index
    %c0_9 = arith.constant 0 : index
    %c0_10 = arith.constant 0 : index
    %15 = vector.load %arg10[%c0_8, %c0_9, %c0_10] : memref<18x24x16xf32, #tpu.memory_space<vmem>>, vector<18x24x16xf32>
    tpu.vector_store %arg10[%c0_8, %c0_9, %c0_10], %14 {strides = array<i32>} : memref<18x24x16xf32, #tpu.memory_space<vmem>>, vector<18x24x16xf32>,
    %cst_11 = arith.constant 0.000000e+00 : f32
    %16 = vector.broadcast %cst_11 : f32 to vector<18x1x16xf32>
    %c0_12 = arith.constant 0 : index
    %c0_13 = arith.constant 0 : index
    %c0_14 = arith.constant 0 : index
    %17 = vector.load %arg10[%c0_12, %c0_13, %c0_14] : memref<18x24x16xf32, #tpu.memory_space<vmem>>, vector<18x1x16xf32>
    tpu.vector_store %arg10[%c0_12, %c0_13, %c0_14], %16 {strides = array<i32>} : memref<18x24x16xf32, #tpu.memory_space<vmem>>, vector<18x1x16xf32>,
    %c0_15 = arith.constant 0 : index
    %c17 = arith.constant 17 : index
    %c0_16 = arith.constant 0 : index
    %18 = vector.load %arg10[%c0_15, %c17, %c0_16] : memref<18x24x16xf32, #tpu.memory_space<vmem>>, vector<18x1x16xf32>
    tpu.vector_store %arg10[%c0_15, %c17, %c0_16], %16 {strides = array<i32>} : memref<18x24x16xf32, #tpu.memory_space<vmem>>, vector<18x1x16xf32>,
    %cst_17 = arith.constant 0.000000e+00 : f32
    %19 = vector.broadcast %cst_17 : f32 to vector<1x24x16xf32>
    %c0_18 = arith.constant 0 : index
    %c0_19 = arith.constant 0 : index
    %c0_20 = arith.constant 0 : index
    %20 = vector.load %arg10[%c0_18, %c0_19, %c0_20] : memref<18x24x16xf32, #tpu.memory_space<vmem>>, vector<1x24x16xf32>
    tpu.vector_store %arg10[%c0_18, %c0_19, %c0_20], %19 {strides = array<i32>} : memref<18x24x16xf32, #tpu.memory_space<vmem>>, vector<1x24x16xf32>,
    %c17_21 = arith.constant 17 : index
    %c0_22 = arith.constant 0 : index
    %c0_23 = arith.constant 0 : index
    %21 = vector.load %arg10[%c17_21, %c0_22, %c0_23] : memref<18x24x16xf32, #tpu.memory_space<vmem>>, vector<1x24x16xf32>
    tpu.vector_store %arg10[%c17_21, %c0_22, %c0_23], %19 {strides = array<i32>} : memref<18x24x16xf32, #tpu.memory_space<vmem>>, vector<1x24x16xf32>,
    %c0_24 = arith.constant 0 : index
    %c0_25 = arith.constant 0 : index
    %22 = vector.load %arg5[%c0_24, %c0_25] : memref<9x16xf32, #tpu.memory_space<vmem>>, vector<1x16xf32>
    %c1 = arith.constant 1 : index
    %c0_26 = arith.constant 0 : index
    %23 = vector.load %arg5[%c1, %c0_26] : memref<9x16xf32, #tpu.memory_space<vmem>>, vector<1x16xf32>
    %c2 = arith.constant 2 : index
    %c0_27 = arith.constant 0 : index
    %24 = vector.load %arg5[%c2, %c0_27] : memref<9x16xf32, #tpu.memory_space<vmem>>, vector<1x16xf32>
    %c3 = arith.constant 3 : index
    %c0_28 = arith.constant 0 : index
    %25 = vector.load %arg5[%c3, %c0_28] : memref<9x16xf32, #tpu.memory_space<vmem>>, vector<1x16xf32>
    %c4 = arith.constant 4 : index
    %c0_29 = arith.constant 0 : index
    %26 = vector.load %arg5[%c4, %c0_29] : memref<9x16xf32, #tpu.memory_space<vmem>>, vector<1x16xf32>
    %c5 = arith.constant 5 : index
    %c0_30 = arith.constant 0 : index
    %27 = vector.load %arg5[%c5, %c0_30] : memref<9x16xf32, #tpu.memory_space<vmem>>, vector<1x16xf32>
    %c6 = arith.constant 6 : index
    %c0_31 = arith.constant 0 : index
    %28 = vector.load %arg5[%c6, %c0_31] : memref<9x16xf32, #tpu.memory_space<vmem>>, vector<1x16xf32>
    %c7 = arith.constant 7 : index
    %c0_32 = arith.constant 0 : index
    %29 = vector.load %arg5[%c7, %c0_32] : memref<9x16xf32, #tpu.memory_space<vmem>>, vector<1x16xf32>
    %c8 = arith.constant 8 : index
    %c0_33 = arith.constant 0 : index
    %30 = vector.load %arg5[%c8, %c0_33] : memref<9x16xf32, #tpu.memory_space<vmem>>, vector<1x16xf32>
    %c0_34 = arith.constant 0 : index
    %c0_35 = arith.constant 0 : index
    %31 = vector.load %arg6[%c0_34, %c0_35] : memref<1x16xf32, #tpu.memory_space<vmem>>, vector<1x16xf32>
    %c0_36 = arith.constant 0 : index
    %c0_37 = arith.constant 0 : index
    %c0_38 = arith.constant 0 : index
    %32 = vector.load %arg10[%c0_36, %c0_37, %c0_38] : memref<18x24x16xf32, #tpu.memory_space<vmem>>, vector<1x24x16xf32>
    %33 = vector.shape_cast %32 : vector<1x24x16xf32> to vector<24x16xf32>
    %34 = vector.extract_strided_slice %33 {offsets = [0, 0], sizes = [16, 16], strides = [1, 1]} : vector<24x16xf32> to vector<16x16xf32>
    %35 = vector.broadcast %22 : vector<1x16xf32> to vector<16x16xf32>
    %36 = arith.mulf %34, %35 : vector<16x16xf32>
    %37 = vector.extract_strided_slice %33 {offsets = [1, 0], sizes = [16, 16], strides = [1, 1]} : vector<24x16xf32> to vector<16x16xf32>
    %38 = vector.broadcast %23 : vector<1x16xf32> to vector<16x16xf32>
    %39 = arith.mulf %37, %38 : vector<16x16xf32>
    %40 = arith.addf %36, %39 : vector<16x16xf32>
    %41 = vector.extract_strided_slice %33 {offsets = [2, 0], sizes = [16, 16], strides = [1, 1]} : vector<24x16xf32> to vector<16x16xf32>
    %42 = vector.broadcast %24 : vector<1x16xf32> to vector<16x16xf32>
    %43 = arith.mulf %41, %42 : vector<16x16xf32>
    %44 = arith.addf %40, %43 : vector<16x16xf32>
    %c1_39 = arith.constant 1 : index
    %c0_40 = arith.constant 0 : index
    %c0_41 = arith.constant 0 : index
    %45 = vector.load %arg10[%c1_39, %c0_40, %c0_41] : memref<18x24x16xf32, #tpu.memory_space<vmem>>, vector<1x24x16xf32>
    %46 = vector.shape_cast %45 : vector<1x24x16xf32> to vector<24x16xf32>
    %47 = vector.extract_strided_slice %46 {offsets = [0, 0], sizes = [16, 16], strides = [1, 1]} : vector<24x16xf32> to vector<16x16xf32>
    %48 = vector.broadcast %25 : vector<1x16xf32> to vector<16x16xf32>
    %49 = arith.mulf %47, %48 : vector<16x16xf32>
    %50 = arith.addf %44, %49 : vector<16x16xf32>
    %51 = vector.extract_strided_slice %46 {offsets = [1, 0], sizes = [16, 16], strides = [1, 1]} : vector<24x16xf32> to vector<16x16xf32>
    %52 = vector.broadcast %26 : vector<1x16xf32> to vector<16x16xf32>
    %53 = arith.mulf %51, %52 : vector<16x16xf32>
    %54 = arith.addf %50, %53 : vector<16x16xf32>
    %55 = vector.extract_strided_slice %46 {offsets = [2, 0], sizes = [16, 16], strides = [1, 1]} : vector<24x16xf32> to vector<16x16xf32>
    %56 = vector.broadcast %27 : vector<1x16xf32> to vector<16x16xf32>
    %57 = arith.mulf %55, %56 : vector<16x16xf32>
    %58 = arith.addf %54, %57 : vector<16x16xf32>
    %c2_42 = arith.constant 2 : index
    %c0_43 = arith.constant 0 : index
    %c0_44 = arith.constant 0 : index
    %59 = vector.load %arg10[%c2_42, %c0_43, %c0_44] : memref<18x24x16xf32, #tpu.memory_space<vmem>>, vector<1x24x16xf32>
    %60 = vector.shape_cast %59 : vector<1x24x16xf32> to vector<24x16xf32>
    %61 = vector.extract_strided_slice %60 {offsets = [0, 0], sizes = [16, 16], strides = [1, 1]} : vector<24x16xf32> to vector<16x16xf32>
    %62 = vector.broadcast %28 : vector<1x16xf32> to vector<16x16xf32>
    %63 = arith.mulf %61, %62 : vector<16x16xf32>
    %64 = arith.addf %58, %63 : vector<16x16xf32>
    %65 = vector.extract_strided_slice %60 {offsets = [1, 0], sizes = [16, 16], strides = [1, 1]} : vector<24x16xf32> to vector<16x16xf32>
    %66 = vector.broadcast %29 : vector<1x16xf32> to vector<16x16xf32>
    %67 = arith.mulf %65, %66 : vector<16x16xf32>
    %68 = arith.addf %64, %67 : vector<16x16xf32>
    %69 = vector.extract_strided_slice %60 {offsets = [2, 0], sizes = [16, 16], strides = [1, 1]} : vector<24x16xf32> to vector<16x16xf32>
    %70 = vector.broadcast %30 : vector<1x16xf32> to vector<16x16xf32>
    %71 = arith.mulf %69, %70 : vector<16x16xf32>
    %72 = arith.addf %68, %71 : vector<16x16xf32>
    %73 = vector.broadcast %31 : vector<1x16xf32> to vector<16x16xf32>
    %74 = arith.addf %72, %73 : vector<16x16xf32>
    %cst_45 = arith.constant 0.000000e+00 : f32
    %cst_46 = arith.constant 6.000000e+00 : f32
    %75 = vector.broadcast %cst_45 : f32 to vector<16x16xf32>
    %76 = arith.maximumf %75, %74 : vector<16x16xf32>
    %77 = vector.broadcast %cst_46 : f32 to vector<16x16xf32>
    %78 = arith.minimumf %77, %76 : vector<16x16xf32>
    %c0_47 = arith.constant 0 : index
    %c0_48 = arith.constant 0 : index
    %79 = vector.load %arg11[%c0_47, %c0_48] : memref<256x16xf32, #tpu.memory_space<vmem>>, vector<16x16xf32>
    tpu.vector_store %arg11[%c0_47, %c0_48], %78 {strides = array<i32>} : memref<256x16xf32, #tpu.memory_space<vmem>>, vector<16x16xf32>,
    %c1_49 = arith.constant 1 : index
    %c0_50 = arith.constant 0 : index
    %c0_51 = arith.constant 0 : index
    %80 = vector.load %arg10[%c1_49, %c0_50, %c0_51] : memref<18x24x16xf32, #tpu.memory_space<vmem>>, vector<1x24x16xf32>
    %81 = vector.shape_cast %80 : vector<1x24x16xf32> to vector<24x16xf32>
    %82 = vector.extract_strided_slice %81 {offsets = [0, 0], sizes = [16, 16], strides = [1, 1]} : vector<24x16xf32> to vector<16x16xf32>
    %83 = vector.broadcast %22 : vector<1x16xf32> to vector<16x16xf32>
    %84 = arith.mulf %82, %83 : vector<16x16xf32>
    %85 = vector.extract_strided_slice %81 {offsets = [1, 0], sizes = [16, 16], strides = [1, 1]} : vector<24x16xf32> to vector<16x16xf32>
    %86 = vector.broadcast %23 : vector<1x16xf32> to vector<16x16xf32>
    %87 = arith.mulf %85, %86 : vector<16x16xf32>
    %88 = arith.addf %84, %87 : vector<16x16xf32>
    %89 = vector.extract_strided_slice %81 {offsets = [2, 0], sizes = [16, 16], strides = [1, 1]} : vector<24x16xf32> to vector<16x16xf32>
    %90 = vector.broadcast %24 : vector<1x16xf32> to vector<16x16xf32>
    %91 = arith.mulf %89, %90 : vector<16x16xf32>
    %92 = arith.addf %88, %91 : vector<16x16xf32>
    %c2_52 = arith.constant 2 : index
    %c0_53 = arith.constant 0 : index
    %c0_54 = arith.constant 0 : index
    %93 = vector.load %arg10[%c2_52, %c0_53, %c0_54] : memref<18x24x16xf32, #tpu.memory_space<vmem>>, vector<1x24x16xf32>
    %94 = vector.shape_cast %93 : vector<1x24x16xf32> to vector<24x16xf32>
    %95 = vector.extract_strided_slice %94 {offsets = [0, 0], sizes = [16, 16], strides = [1, 1]} : vector<24x16xf32> to vector<16x16xf32>
    %96 = vector.broadcast %25 : vector<1x16xf32> to vector<16x16xf32>
    %97 = arith.mulf %95, %96 : vector<16x16xf32>
    %98 = arith.addf %92, %97 : vector<16x16xf32>
    %99 = vector.extract_strided_slice %94 {offsets = [1, 0], sizes = [16, 16], strides = [1, 1]} : vector<24x16xf32> to vector<16x16xf32>
    %100 = vector.broadcast %26 : vector<1x16xf32> to vector<16x16xf32>
    %101 = arith.mulf %99, %100 : vector<16x16xf32>
    %102 = arith.addf %98, %101 : vector<16x16xf32>
    %103 = vector.extract_strided_slice %94 {offsets = [2, 0], sizes = [16, 16], strides = [1, 1]} : vector<24x16xf32> to vector<16x16xf32>
    %104 = vector.broadcast %27 : vector<1x16xf32> to vector<16x16xf32>
    %105 = arith.mulf %103, %104 : vector<16x16xf32>
    %106 = arith.addf %102, %105 : vector<16x16xf32>
    %c3_55 = arith.constant 3 : index
    %c0_56 = arith.constant 0 : index
    %c0_57 = arith.constant 0 : index
    %107 = vector.load %arg10[%c3_55, %c0_56, %c0_57] : memref<18x24x16xf32, #tpu.memory_space<vmem>>, vector<1x24x16xf32>
    %108 = vector.shape_cast %107 : vector<1x24x16xf32> to vector<24x16xf32>
    %109 = vector.extract_strided_slice %108 {offsets = [0, 0], sizes = [16, 16], strides = [1, 1]} : vector<24x16xf32> to vector<16x16xf32>
    %110 = vector.broadcast %28 : vector<1x16xf32> to vector<16x16xf32>
    %111 = arith.mulf %109, %110 : vector<16x16xf32>
    %112 = arith.addf %106, %111 : vector<16x16xf32>
    %113 = vector.extract_strided_slice %108 {offsets = [1, 0], sizes = [16, 16], strides = [1, 1]} : vector<24x16xf32> to vector<16x16xf32>
    %114 = vector.broadcast %29 : vector<1x16xf32> to vector<16x16xf32>
    %115 = arith.mulf %113, %114 : vector<16x16xf32>
    %116 = arith.addf %112, %115 : vector<16x16xf32>
    %117 = vector.extract_strided_slice %108 {offsets = [2, 0], sizes = [16, 16], strides = [1, 1]} : vector<24x16xf32> to vector<16x16xf32>
    %118 = vector.broadcast %30 : vector<1x16xf32> to vector<16x16xf32>
    %119 = arith.mulf %117, %118 : vector<16x16xf32>
    %120 = arith.addf %116, %119 : vector<16x16xf32>
    %121 = vector.broadcast %31 : vector<1x16xf32> to vector<16x16xf32>
    %122 = arith.addf %120, %121 : vector<16x16xf32>
    %cst_58 = arith.constant 0.000000e+00 : f32
    %cst_59 = arith.constant 6.000000e+00 : f32
    %123 = vector.broadcast %cst_58 : f32 to vector<16x16xf32>
    %124 = arith.maximumf %123, %122 : vector<16x16xf32>
    %125 = vector.broadcast %cst_59 : f32 to vector<16x16xf32>
    %126 = arith.minimumf %125, %124 : vector<16x16xf32>
    %c16 = arith.constant 16 : index
    %c0_60 = arith.constant 0 : index
    %127 = vector.load %arg11[%c16, %c0_60] : memref<256x16xf32, #tpu.memory_space<vmem>>, vector<16x16xf32>
    tpu.vector_store %arg11[%c16, %c0_60], %126 {strides = array<i32>} : memref<256x16xf32, #tpu.memory_space<vmem>>, vector<16x16xf32>,
    %c2_61 = arith.constant 2 : index
    %c0_62 = arith.constant 0 : index
    %c0_63 = arith.constant 0 : index
    %128 = vector.load %arg10[%c2_61, %c0_62, %c0_63] : memref<18x24x16xf32, #tpu.memory_space<vmem>>, vector<1x24x16xf32>
    %129 = vector.shape_cast %128 : vector<1x24x16xf32> to vector<24x16xf32>
    %130 = vector.extract_strided_slice %129 {offsets = [0, 0], sizes = [16, 16], strides = [1, 1]} : vector<24x16xf32> to vector<16x16xf32>
    %131 = vector.broadcast %22 : vector<1x16xf32> to vector<16x16xf32>
    %132 = arith.mulf %130, %131 : vector<16x16xf32>
    %133 = vector.extract_strided_slice %129 {offsets = [1, 0], sizes = [16, 16], strides = [1, 1]} : vector<24x16xf32> to vector<16x16xf32>
    %134 = vector.broadcast %23 : vector<1x16xf32> to vector<16x16xf32>
    %135 = arith.mulf %133, %134 : vector<16x16xf32>
    %136 = arith.addf %132, %135 : vector<16x16xf32>
    %137 = vector.extract_strided_slice %129 {offsets = [2, 0], sizes = [16, 16], strides = [1, 1]} : vector<24x16xf32> to vector<16x16xf32>
    %138 = vector.broadcast %24 : vector<1x16xf32> to vector<16x16xf32>
    %139 = arith.mulf %137, %138 : vector<16x16xf32>
    %140 = arith.addf %136, %139 : vector<16x16xf32>
    %c3_64 = arith.constant 3 : index
    %c0_65 = arith.constant 0 : index
    %c0_66 = arith.constant 0 : index
    %141 = vector.load %arg10[%c3_64, %c0_65, %c0_66] : memref<18x24x16xf32, #tpu.memory_space<vmem>>, vector<1x24x16xf32>
    %142 = vector.shape_cast %141 : vector<1x24x16xf32> to vector<24x16xf32>
    %143 = vector.extract_strided_slice %142 {offsets = [0, 0], sizes = [16, 16], strides = [1, 1]} : vector<24x16xf32> to vector<16x16xf32>
    %144 = vector.broadcast %25 : vector<1x16xf32> to vector<16x16xf32>
    %145 = arith.mulf %143, %144 : vector<16x16xf32>
    %146 = arith.addf %140, %145 : vector<16x16xf32>
    %147 = vector.extract_strided_slice %142 {offsets = [1, 0], sizes = [16, 16], strides = [1, 1]} : vector<24x16xf32> to vector<16x16xf32>
    %148 = vector.broadcast %26 : vector<1x16xf32> to vector<16x16xf32>
    %149 = arith.mulf %147, %148 : vector<16x16xf32>
    %150 = arith.addf %146, %149 : vector<16x16xf32>
    %151 = vector.extract_strided_slice %142 {offsets = [2, 0], sizes = [16, 16], strides = [1, 1]} : vector<24x16xf32> to vector<16x16xf32>
    %152 = vector.broadcast %27 : vector<1x16xf32> to vector<16x16xf32>
    %153 = arith.mulf %151, %152 : vector<16x16xf32>
    %154 = arith.addf %150, %153 : vector<16x16xf32>
    %c4_67 = arith.constant 4 : index
    %c0_68 = arith.constant 0 : index
    %c0_69 = arith.constant 0 : index
    %155 = vector.load %arg10[%c4_67, %c0_68, %c0_69] : memref<18x24x16xf32, #tpu.memory_space<vmem>>, vector<1x24x16xf32>
    %156 = vector.shape_cast %155 : vector<1x24x16xf32> to vector<24x16xf32>
    %157 = vector.extract_strided_slice %156 {offsets = [0, 0], sizes = [16, 16], strides = [1, 1]} : vector<24x16xf32> to vector<16x16xf32>
    %158 = vector.broadcast %28 : vector<1x16xf32> to vector<16x16xf32>
    %159 = arith.mulf %157, %158 : vector<16x16xf32>
    %160 = arith.addf %154, %159 : vector<16x16xf32>
    %161 = vector.extract_strided_slice %156 {offsets = [1, 0], sizes = [16, 16], strides = [1, 1]} : vector<24x16xf32> to vector<16x16xf32>
    %162 = vector.broadcast %29 : vector<1x16xf32> to vector<16x16xf32>
    %163 = arith.mulf %161, %162 : vector<16x16xf32>
    %164 = arith.addf %160, %163 : vector<16x16xf32>
    %165 = vector.extract_strided_slice %156 {offsets = [2, 0], sizes = [16, 16], strides = [1, 1]} : vector<24x16xf32> to vector<16x16xf32>
    %166 = vector.broadcast %30 : vector<1x16xf32> to vector<16x16xf32>
    %167 = arith.mulf %165, %166 : vector<16x16xf32>
    %168 = arith.addf %164, %167 : vector<16x16xf32>
    %169 = vector.broadcast %31 : vector<1x16xf32> to vector<16x16xf32>
    %170 = arith.addf %168, %169 : vector<16x16xf32>
    %cst_70 = arith.constant 0.000000e+00 : f32
    %cst_71 = arith.constant 6.000000e+00 : f32
    %171 = vector.broadcast %cst_70 : f32 to vector<16x16xf32>
    %172 = arith.maximumf %171, %170 : vector<16x16xf32>
    %173 = vector.broadcast %cst_71 : f32 to vector<16x16xf32>
    %174 = arith.minimumf %173, %172 : vector<16x16xf32>
    %c32 = arith.constant 32 : index
    %c0_72 = arith.constant 0 : index
    %175 = vector.load %arg11[%c32, %c0_72] : memref<256x16xf32, #tpu.memory_space<vmem>>, vector<16x16xf32>
    tpu.vector_store %arg11[%c32, %c0_72], %174 {strides = array<i32>} : memref<256x16xf32, #tpu.memory_space<vmem>>, vector<16x16xf32>,
    %c3_73 = arith.constant 3 : index
    %c0_74 = arith.constant 0 : index
    %c0_75 = arith.constant 0 : index
    %176 = vector.load %arg10[%c3_73, %c0_74, %c0_75] : memref<18x24x16xf32, #tpu.memory_space<vmem>>, vector<1x24x16xf32>
    %177 = vector.shape_cast %176 : vector<1x24x16xf32> to vector<24x16xf32>
    %178 = vector.extract_strided_slice %177 {offsets = [0, 0], sizes = [16, 16], strides = [1, 1]} : vector<24x16xf32> to vector<16x16xf32>
    %179 = vector.broadcast %22 : vector<1x16xf32> to vector<16x16xf32>
    %180 = arith.mulf %178, %179 : vector<16x16xf32>
    %181 = vector.extract_strided_slice %177 {offsets = [1, 0], sizes = [16, 16], strides = [1, 1]} : vector<24x16xf32> to vector<16x16xf32>
    %182 = vector.broadcast %23 : vector<1x16xf32> to vector<16x16xf32>
    %183 = arith.mulf %181, %182 : vector<16x16xf32>
    %184 = arith.addf %180, %183 : vector<16x16xf32>
    %185 = vector.extract_strided_slice %177 {offsets = [2, 0], sizes = [16, 16], strides = [1, 1]} : vector<24x16xf32> to vector<16x16xf32>
    %186 = vector.broadcast %24 : vector<1x16xf32> to vector<16x16xf32>
    %187 = arith.mulf %185, %186 : vector<16x16xf32>
    %188 = arith.addf %184, %187 : vector<16x16xf32>
    %c4_76 = arith.constant 4 : index
    %c0_77 = arith.constant 0 : index
    %c0_78 = arith.constant 0 : index
    %189 = vector.load %arg10[%c4_76, %c0_77, %c0_78] : memref<18x24x16xf32, #tpu.memory_space<vmem>>, vector<1x24x16xf32>
    %190 = vector.shape_cast %189 : vector<1x24x16xf32> to vector<24x16xf32>
    %191 = vector.extract_strided_slice %190 {offsets = [0, 0], sizes = [16, 16], strides = [1, 1]} : vector<24x16xf32> to vector<16x16xf32>
    %192 = vector.broadcast %25 : vector<1x16xf32> to vector<16x16xf32>
    %193 = arith.mulf %191, %192 : vector<16x16xf32>
    %194 = arith.addf %188, %193 : vector<16x16xf32>
    %195 = vector.extract_strided_slice %190 {offsets = [1, 0], sizes = [16, 16], strides = [1, 1]} : vector<24x16xf32> to vector<16x16xf32>
    %196 = vector.broadcast %26 : vector<1x16xf32> to vector<16x16xf32>
    %197 = arith.mulf %195, %196 : vector<16x16xf32>
    %198 = arith.addf %194, %197 : vector<16x16xf32>
    %199 = vector.extract_strided_slice %190 {offsets = [2, 0], sizes = [16, 16], strides = [1, 1]} : vector<24x16xf32> to vector<16x16xf32>
    %200 = vector.broadcast %27 : vector<1x16xf32> to vector<16x16xf32>
    %201 = arith.mulf %199, %200 : vector<16x16xf32>
    %202 = arith.addf %198, %201 : vector<16x16xf32>
    %c5_79 = arith.constant 5 : index
    %c0_80 = arith.constant 0 : index
    %c0_81 = arith.constant 0 : index
    %203 = vector.load %arg10[%c5_79, %c0_80, %c0_81] : memref<18x24x16xf32, #tpu.memory_space<vmem>>, vector<1x24x16xf32>
    %204 = vector.shape_cast %203 : vector<1x24x16xf32> to vector<24x16xf32>
    %205 = vector.extract_strided_slice %204 {offsets = [0, 0], sizes = [16, 16], strides = [1, 1]} : vector<24x16xf32> to vector<16x16xf32>
    %206 = vector.broadcast %28 : vector<1x16xf32> to vector<16x16xf32>
    %207 = arith.mulf %205, %206 : vector<16x16xf32>
    %208 = arith.addf %202, %207 : vector<16x16xf32>
    %209 = vector.extract_strided_slice %204 {offsets = [1, 0], sizes = [16, 16], strides = [1, 1]} : vector<24x16xf32> to vector<16x16xf32>
    %210 = vector.broadcast %29 : vector<1x16xf32> to vector<16x16xf32>
    %211 = arith.mulf %209, %210 : vector<16x16xf32>
    %212 = arith.addf %208, %211 : vector<16x16xf32>
    %213 = vector.extract_strided_slice %204 {offsets = [2, 0], sizes = [16, 16], strides = [1, 1]} : vector<24x16xf32> to vector<16x16xf32>
    %214 = vector.broadcast %30 : vector<1x16xf32> to vector<16x16xf32>
    %215 = arith.mulf %213, %214 : vector<16x16xf32>
    %216 = arith.addf %212, %215 : vector<16x16xf32>
    %217 = vector.broadcast %31 : vector<1x16xf32> to vector<16x16xf32>
    %218 = arith.addf %216, %217 : vector<16x16xf32>
    %cst_82 = arith.constant 0.000000e+00 : f32
    %cst_83 = arith.constant 6.000000e+00 : f32
    %219 = vector.broadcast %cst_82 : f32 to vector<16x16xf32>
    %220 = arith.maximumf %219, %218 : vector<16x16xf32>
    %221 = vector.broadcast %cst_83 : f32 to vector<16x16xf32>
    %222 = arith.minimumf %221, %220 : vector<16x16xf32>
    %c48 = arith.constant 48 : index
    %c0_84 = arith.constant 0 : index
    %223 = vector.load %arg11[%c48, %c0_84] : memref<256x16xf32, #tpu.memory_space<vmem>>, vector<16x16xf32>
    tpu.vector_store %arg11[%c48, %c0_84], %222 {strides = array<i32>} : memref<256x16xf32, #tpu.memory_space<vmem>>, vector<16x16xf32>,
    %c4_85 = arith.constant 4 : index
    %c0_86 = arith.constant 0 : index
    %c0_87 = arith.constant 0 : index
    %224 = vector.load %arg10[%c4_85, %c0_86, %c0_87] : memref<18x24x16xf32, #tpu.memory_space<vmem>>, vector<1x24x16xf32>
    %225 = vector.shape_cast %224 : vector<1x24x16xf32> to vector<24x16xf32>
    %226 = vector.extract_strided_slice %225 {offsets = [0, 0], sizes = [16, 16], strides = [1, 1]} : vector<24x16xf32> to vector<16x16xf32>
    %227 = vector.broadcast %22 : vector<1x16xf32> to vector<16x16xf32>
    %228 = arith.mulf %226, %227 : vector<16x16xf32>
    %229 = vector.extract_strided_slice %225 {offsets = [1, 0], sizes = [16, 16], strides = [1, 1]} : vector<24x16xf32> to vector<16x16xf32>
    %230 = vector.broadcast %23 : vector<1x16xf32> to vector<16x16xf32>
    %231 = arith.mulf %229, %230 : vector<16x16xf32>
    %232 = arith.addf %228, %231 : vector<16x16xf32>
    %233 = vector.extract_strided_slice %225 {offsets = [2, 0], sizes = [16, 16], strides = [1, 1]} : vector<24x16xf32> to vector<16x16xf32>
    %234 = vector.broadcast %24 : vector<1x16xf32> to vector<16x16xf32>
    %235 = arith.mulf %233, %234 : vector<16x16xf32>
    %236 = arith.addf %232, %235 : vector<16x16xf32>
    %c5_88 = arith.constant 5 : index
    %c0_89 = arith.constant 0 : index
    %c0_90 = arith.constant 0 : index
    %237 = vector.load %arg10[%c5_88, %c0_89, %c0_90] : memref<18x24x16xf32, #tpu.memory_space<vmem>>, vector<1x24x16xf32>
    %238 = vector.shape_cast %237 : vector<1x24x16xf32> to vector<24x16xf32>
    %239 = vector.extract_strided_slice %238 {offsets = [0, 0], sizes = [16, 16], strides = [1, 1]} : vector<24x16xf32> to vector<16x16xf32>
    %240 = vector.broadcast %25 : vector<1x16xf32> to vector<16x16xf32>
    %241 = arith.mulf %239, %240 : vector<16x16xf32>
    %242 = arith.addf %236, %241 : vector<16x16xf32>
    %243 = vector.extract_strided_slice %238 {offsets = [1, 0], sizes = [16, 16], strides = [1, 1]} : vector<24x16xf32> to vector<16x16xf32>
    %244 = vector.broadcast %26 : vector<1x16xf32> to vector<16x16xf32>
    %245 = arith.mulf %243, %244 : vector<16x16xf32>
    %246 = arith.addf %242, %245 : vector<16x16xf32>
    %247 = vector.extract_strided_slice %238 {offsets = [2, 0], sizes = [16, 16], strides = [1, 1]} : vector<24x16xf32> to vector<16x16xf32>
    %248 = vector.broadcast %27 : vector<1x16xf32> to vector<16x16xf32>
    %249 = arith.mulf %247, %248 : vector<16x16xf32>
    %250 = arith.addf %246, %249 : vector<16x16xf32>
    %c6_91 = arith.constant 6 : index
    %c0_92 = arith.constant 0 : index
    %c0_93 = arith.constant 0 : index
    %251 = vector.load %arg10[%c6_91, %c0_92, %c0_93] : memref<18x24x16xf32, #tpu.memory_space<vmem>>, vector<1x24x16xf32>
    %252 = vector.shape_cast %251 : vector<1x24x16xf32> to vector<24x16xf32>
    %253 = vector.extract_strided_slice %252 {offsets = [0, 0], sizes = [16, 16], strides = [1, 1]} : vector<24x16xf32> to vector<16x16xf32>
    %254 = vector.broadcast %28 : vector<1x16xf32> to vector<16x16xf32>
    %255 = arith.mulf %253, %254 : vector<16x16xf32>
    %256 = arith.addf %250, %255 : vector<16x16xf32>
    %257 = vector.extract_strided_slice %252 {offsets = [1, 0], sizes = [16, 16], strides = [1, 1]} : vector<24x16xf32> to vector<16x16xf32>
    %258 = vector.broadcast %29 : vector<1x16xf32> to vector<16x16xf32>
    %259 = arith.mulf %257, %258 : vector<16x16xf32>
    %260 = arith.addf %256, %259 : vector<16x16xf32>
    %261 = vector.extract_strided_slice %252 {offsets = [2, 0], sizes = [16, 16], strides = [1, 1]} : vector<24x16xf32> to vector<16x16xf32>
    %262 = vector.broadcast %30 : vector<1x16xf32> to vector<16x16xf32>
    %263 = arith.mulf %261, %262 : vector<16x16xf32>
    %264 = arith.addf %260, %263 : vector<16x16xf32>
    %265 = vector.broadcast %31 : vector<1x16xf32> to vector<16x16xf32>
    %266 = arith.addf %264, %265 : vector<16x16xf32>
    %cst_94 = arith.constant 0.000000e+00 : f32
    %cst_95 = arith.constant 6.000000e+00 : f32
    %267 = vector.broadcast %cst_94 : f32 to vector<16x16xf32>
    %268 = arith.maximumf %267, %266 : vector<16x16xf32>
    %269 = vector.broadcast %cst_95 : f32 to vector<16x16xf32>
    %270 = arith.minimumf %269, %268 : vector<16x16xf32>
    %c64 = arith.constant 64 : index
    %c0_96 = arith.constant 0 : index
    %271 = vector.load %arg11[%c64, %c0_96] : memref<256x16xf32, #tpu.memory_space<vmem>>, vector<16x16xf32>
    tpu.vector_store %arg11[%c64, %c0_96], %270 {strides = array<i32>} : memref<256x16xf32, #tpu.memory_space<vmem>>, vector<16x16xf32>,
    %c5_97 = arith.constant 5 : index
    %c0_98 = arith.constant 0 : index
    %c0_99 = arith.constant 0 : index
    %272 = vector.load %arg10[%c5_97, %c0_98, %c0_99] : memref<18x24x16xf32, #tpu.memory_space<vmem>>, vector<1x24x16xf32>
    %273 = vector.shape_cast %272 : vector<1x24x16xf32> to vector<24x16xf32>
    %274 = vector.extract_strided_slice %273 {offsets = [0, 0], sizes = [16, 16], strides = [1, 1]} : vector<24x16xf32> to vector<16x16xf32>
    %275 = vector.broadcast %22 : vector<1x16xf32> to vector<16x16xf32>
    %276 = arith.mulf %274, %275 : vector<16x16xf32>
    %277 = vector.extract_strided_slice %273 {offsets = [1, 0], sizes = [16, 16], strides = [1, 1]} : vector<24x16xf32> to vector<16x16xf32>
    %278 = vector.broadcast %23 : vector<1x16xf32> to vector<16x16xf32>
    %279 = arith.mulf %277, %278 : vector<16x16xf32>
    %280 = arith.addf %276, %279 : vector<16x16xf32>
    %281 = vector.extract_strided_slice %273 {offsets = [2, 0], sizes = [16, 16], strides = [1, 1]} : vector<24x16xf32> to vector<16x16xf32>
    %282 = vector.broadcast %24 : vector<1x16xf32> to vector<16x16xf32>
    %283 = arith.mulf %281, %282 : vector<16x16xf32>
    %284 = arith.addf %280, %283 : vector<16x16xf32>
    %c6_100 = arith.constant 6 : index
    %c0_101 = arith.constant 0 : index
    %c0_102 = arith.constant 0 : index
    %285 = vector.load %arg10[%c6_100, %c0_101, %c0_102] : memref<18x24x16xf32, #tpu.memory_space<vmem>>, vector<1x24x16xf32>
    %286 = vector.shape_cast %285 : vector<1x24x16xf32> to vector<24x16xf32>
    %287 = vector.extract_strided_slice %286 {offsets = [0, 0], sizes = [16, 16], strides = [1, 1]} : vector<24x16xf32> to vector<16x16xf32>
    %288 = vector.broadcast %25 : vector<1x16xf32> to vector<16x16xf32>
    %289 = arith.mulf %287, %288 : vector<16x16xf32>
    %290 = arith.addf %284, %289 : vector<16x16xf32>
    %291 = vector.extract_strided_slice %286 {offsets = [1, 0], sizes = [16, 16], strides = [1, 1]} : vector<24x16xf32> to vector<16x16xf32>
    %292 = vector.broadcast %26 : vector<1x16xf32> to vector<16x16xf32>
    %293 = arith.mulf %291, %292 : vector<16x16xf32>
    %294 = arith.addf %290, %293 : vector<16x16xf32>
    %295 = vector.extract_strided_slice %286 {offsets = [2, 0], sizes = [16, 16], strides = [1, 1]} : vector<24x16xf32> to vector<16x16xf32>
    %296 = vector.broadcast %27 : vector<1x16xf32> to vector<16x16xf32>
    %297 = arith.mulf %295, %296 : vector<16x16xf32>
    %298 = arith.addf %294, %297 : vector<16x16xf32>
    %c7_103 = arith.constant 7 : index
    %c0_104 = arith.constant 0 : index
    %c0_105 = arith.constant 0 : index
    %299 = vector.load %arg10[%c7_103, %c0_104, %c0_105] : memref<18x24x16xf32, #tpu.memory_space<vmem>>, vector<1x24x16xf32>
    %300 = vector.shape_cast %299 : vector<1x24x16xf32> to vector<24x16xf32>
    %301 = vector.extract_strided_slice %300 {offsets = [0, 0], sizes = [16, 16], strides = [1, 1]} : vector<24x16xf32> to vector<16x16xf32>
    %302 = vector.broadcast %28 : vector<1x16xf32> to vector<16x16xf32>
    %303 = arith.mulf %301, %302 : vector<16x16xf32>
    %304 = arith.addf %298, %303 : vector<16x16xf32>
    %305 = vector.extract_strided_slice %300 {offsets = [1, 0], sizes = [16, 16], strides = [1, 1]} : vector<24x16xf32> to vector<16x16xf32>
    %306 = vector.broadcast %29 : vector<1x16xf32> to vector<16x16xf32>
    %307 = arith.mulf %305, %306 : vector<16x16xf32>
    %308 = arith.addf %304, %307 : vector<16x16xf32>
    %309 = vector.extract_strided_slice %300 {offsets = [2, 0], sizes = [16, 16], strides = [1, 1]} : vector<24x16xf32> to vector<16x16xf32>
    %310 = vector.broadcast %30 : vector<1x16xf32> to vector<16x16xf32>
    %311 = arith.mulf %309, %310 : vector<16x16xf32>
    %312 = arith.addf %308, %311 : vector<16x16xf32>
    %313 = vector.broadcast %31 : vector<1x16xf32> to vector<16x16xf32>
    %314 = arith.addf %312, %313 : vector<16x16xf32>
    %cst_106 = arith.constant 0.000000e+00 : f32
    %cst_107 = arith.constant 6.000000e+00 : f32
    %315 = vector.broadcast %cst_106 : f32 to vector<16x16xf32>
    %316 = arith.maximumf %315, %314 : vector<16x16xf32>
    %317 = vector.broadcast %cst_107 : f32 to vector<16x16xf32>
    %318 = arith.minimumf %317, %316 : vector<16x16xf32>
    %c80 = arith.constant 80 : index
    %c0_108 = arith.constant 0 : index
    %319 = vector.load %arg11[%c80, %c0_108] : memref<256x16xf32, #tpu.memory_space<vmem>>, vector<16x16xf32>
    tpu.vector_store %arg11[%c80, %c0_108], %318 {strides = array<i32>} : memref<256x16xf32, #tpu.memory_space<vmem>>, vector<16x16xf32>,
    %c6_109 = arith.constant 6 : index
    %c0_110 = arith.constant 0 : index
    %c0_111 = arith.constant 0 : index
    %320 = vector.load %arg10[%c6_109, %c0_110, %c0_111] : memref<18x24x16xf32, #tpu.memory_space<vmem>>, vector<1x24x16xf32>
    %321 = vector.shape_cast %320 : vector<1x24x16xf32> to vector<24x16xf32>
    %322 = vector.extract_strided_slice %321 {offsets = [0, 0], sizes = [16, 16], strides = [1, 1]} : vector<24x16xf32> to vector<16x16xf32>
    %323 = vector.broadcast %22 : vector<1x16xf32> to vector<16x16xf32>
    %324 = arith.mulf %322, %323 : vector<16x16xf32>
    %325 = vector.extract_strided_slice %321 {offsets = [1, 0], sizes = [16, 16], strides = [1, 1]} : vector<24x16xf32> to vector<16x16xf32>
    %326 = vector.broadcast %23 : vector<1x16xf32> to vector<16x16xf32>
    %327 = arith.mulf %325, %326 : vector<16x16xf32>
    %328 = arith.addf %324, %327 : vector<16x16xf32>
    %329 = vector.extract_strided_slice %321 {offsets = [2, 0], sizes = [16, 16], strides = [1, 1]} : vector<24x16xf32> to vector<16x16xf32>
    %330 = vector.broadcast %24 : vector<1x16xf32> to vector<16x16xf32>
    %331 = arith.mulf %329, %330 : vector<16x16xf32>
    %332 = arith.addf %328, %331 : vector<16x16xf32>
    %c7_112 = arith.constant 7 : index
    %c0_113 = arith.constant 0 : index
    %c0_114 = arith.constant 0 : index
    %333 = vector.load %arg10[%c7_112, %c0_113, %c0_114] : memref<18x24x16xf32, #tpu.memory_space<vmem>>, vector<1x24x16xf32>
    %334 = vector.shape_cast %333 : vector<1x24x16xf32> to vector<24x16xf32>
    %335 = vector.extract_strided_slice %334 {offsets = [0, 0], sizes = [16, 16], strides = [1, 1]} : vector<24x16xf32> to vector<16x16xf32>
    %336 = vector.broadcast %25 : vector<1x16xf32> to vector<16x16xf32>
    %337 = arith.mulf %335, %336 : vector<16x16xf32>
    %338 = arith.addf %332, %337 : vector<16x16xf32>
    %339 = vector.extract_strided_slice %334 {offsets = [1, 0], sizes = [16, 16], strides = [1, 1]} : vector<24x16xf32> to vector<16x16xf32>
    %340 = vector.broadcast %26 : vector<1x16xf32> to vector<16x16xf32>
    %341 = arith.mulf %339, %340 : vector<16x16xf32>
    %342 = arith.addf %338, %341 : vector<16x16xf32>
    %343 = vector.extract_strided_slice %334 {offsets = [2, 0], sizes = [16, 16], strides = [1, 1]} : vector<24x16xf32> to vector<16x16xf32>
    %344 = vector.broadcast %27 : vector<1x16xf32> to vector<16x16xf32>
    %345 = arith.mulf %343, %344 : vector<16x16xf32>
    %346 = arith.addf %342, %345 : vector<16x16xf32>
    %c8_115 = arith.constant 8 : index
    %c0_116 = arith.constant 0 : index
    %c0_117 = arith.constant 0 : index
    %347 = vector.load %arg10[%c8_115, %c0_116, %c0_117] : memref<18x24x16xf32, #tpu.memory_space<vmem>>, vector<1x24x16xf32>
    %348 = vector.shape_cast %347 : vector<1x24x16xf32> to vector<24x16xf32>
    %349 = vector.extract_strided_slice %348 {offsets = [0, 0], sizes = [16, 16], strides = [1, 1]} : vector<24x16xf32> to vector<16x16xf32>
    %350 = vector.broadcast %28 : vector<1x16xf32> to vector<16x16xf32>
    %351 = arith.mulf %349, %350 : vector<16x16xf32>
    %352 = arith.addf %346, %351 : vector<16x16xf32>
    %353 = vector.extract_strided_slice %348 {offsets = [1, 0], sizes = [16, 16], strides = [1, 1]} : vector<24x16xf32> to vector<16x16xf32>
    %354 = vector.broadcast %29 : vector<1x16xf32> to vector<16x16xf32>
    %355 = arith.mulf %353, %354 : vector<16x16xf32>
    %356 = arith.addf %352, %355 : vector<16x16xf32>
    %357 = vector.extract_strided_slice %348 {offsets = [2, 0], sizes = [16, 16], strides = [1, 1]} : vector<24x16xf32> to vector<16x16xf32>
    %358 = vector.broadcast %30 : vector<1x16xf32> to vector<16x16xf32>
    %359 = arith.mulf %357, %358 : vector<16x16xf32>
    %360 = arith.addf %356, %359 : vector<16x16xf32>
    %361 = vector.broadcast %31 : vector<1x16xf32> to vector<16x16xf32>
    %362 = arith.addf %360, %361 : vector<16x16xf32>
    %cst_118 = arith.constant 0.000000e+00 : f32
    %cst_119 = arith.constant 6.000000e+00 : f32
    %363 = vector.broadcast %cst_118 : f32 to vector<16x16xf32>
    %364 = arith.maximumf %363, %362 : vector<16x16xf32>
    %365 = vector.broadcast %cst_119 : f32 to vector<16x16xf32>
    %366 = arith.minimumf %365, %364 : vector<16x16xf32>
    %c96 = arith.constant 96 : index
    %c0_120 = arith.constant 0 : index
    %367 = vector.load %arg11[%c96, %c0_120] : memref<256x16xf32, #tpu.memory_space<vmem>>, vector<16x16xf32>
    tpu.vector_store %arg11[%c96, %c0_120], %366 {strides = array<i32>} : memref<256x16xf32, #tpu.memory_space<vmem>>, vector<16x16xf32>,
    %c7_121 = arith.constant 7 : index
    %c0_122 = arith.constant 0 : index
    %c0_123 = arith.constant 0 : index
    %368 = vector.load %arg10[%c7_121, %c0_122, %c0_123] : memref<18x24x16xf32, #tpu.memory_space<vmem>>, vector<1x24x16xf32>
    %369 = vector.shape_cast %368 : vector<1x24x16xf32> to vector<24x16xf32>
    %370 = vector.extract_strided_slice %369 {offsets = [0, 0], sizes = [16, 16], strides = [1, 1]} : vector<24x16xf32> to vector<16x16xf32>
    %371 = vector.broadcast %22 : vector<1x16xf32> to vector<16x16xf32>
    %372 = arith.mulf %370, %371 : vector<16x16xf32>
    %373 = vector.extract_strided_slice %369 {offsets = [1, 0], sizes = [16, 16], strides = [1, 1]} : vector<24x16xf32> to vector<16x16xf32>
    %374 = vector.broadcast %23 : vector<1x16xf32> to vector<16x16xf32>
    %375 = arith.mulf %373, %374 : vector<16x16xf32>
    %376 = arith.addf %372, %375 : vector<16x16xf32>
    %377 = vector.extract_strided_slice %369 {offsets = [2, 0], sizes = [16, 16], strides = [1, 1]} : vector<24x16xf32> to vector<16x16xf32>
    %378 = vector.broadcast %24 : vector<1x16xf32> to vector<16x16xf32>
    %379 = arith.mulf %377, %378 : vector<16x16xf32>
    %380 = arith.addf %376, %379 : vector<16x16xf32>
    %c8_124 = arith.constant 8 : index
    %c0_125 = arith.constant 0 : index
    %c0_126 = arith.constant 0 : index
    %381 = vector.load %arg10[%c8_124, %c0_125, %c0_126] : memref<18x24x16xf32, #tpu.memory_space<vmem>>, vector<1x24x16xf32>
    %382 = vector.shape_cast %381 : vector<1x24x16xf32> to vector<24x16xf32>
    %383 = vector.extract_strided_slice %382 {offsets = [0, 0], sizes = [16, 16], strides = [1, 1]} : vector<24x16xf32> to vector<16x16xf32>
    %384 = vector.broadcast %25 : vector<1x16xf32> to vector<16x16xf32>
    %385 = arith.mulf %383, %384 : vector<16x16xf32>
    %386 = arith.addf %380, %385 : vector<16x16xf32>
    %387 = vector.extract_strided_slice %382 {offsets = [1, 0], sizes = [16, 16], strides = [1, 1]} : vector<24x16xf32> to vector<16x16xf32>
    %388 = vector.broadcast %26 : vector<1x16xf32> to vector<16x16xf32>
    %389 = arith.mulf %387, %388 : vector<16x16xf32>
    %390 = arith.addf %386, %389 : vector<16x16xf32>
    %391 = vector.extract_strided_slice %382 {offsets = [2, 0], sizes = [16, 16], strides = [1, 1]} : vector<24x16xf32> to vector<16x16xf32>
    %392 = vector.broadcast %27 : vector<1x16xf32> to vector<16x16xf32>
    %393 = arith.mulf %391, %392 : vector<16x16xf32>
    %394 = arith.addf %390, %393 : vector<16x16xf32>
    %c9 = arith.constant 9 : index
    %c0_127 = arith.constant 0 : index
    %c0_128 = arith.constant 0 : index
    %395 = vector.load %arg10[%c9, %c0_127, %c0_128] : memref<18x24x16xf32, #tpu.memory_space<vmem>>, vector<1x24x16xf32>
    %396 = vector.shape_cast %395 : vector<1x24x16xf32> to vector<24x16xf32>
    %397 = vector.extract_strided_slice %396 {offsets = [0, 0], sizes = [16, 16], strides = [1, 1]} : vector<24x16xf32> to vector<16x16xf32>
    %398 = vector.broadcast %28 : vector<1x16xf32> to vector<16x16xf32>
    %399 = arith.mulf %397, %398 : vector<16x16xf32>
    %400 = arith.addf %394, %399 : vector<16x16xf32>
    %401 = vector.extract_strided_slice %396 {offsets = [1, 0], sizes = [16, 16], strides = [1, 1]} : vector<24x16xf32> to vector<16x16xf32>
    %402 = vector.broadcast %29 : vector<1x16xf32> to vector<16x16xf32>
    %403 = arith.mulf %401, %402 : vector<16x16xf32>
    %404 = arith.addf %400, %403 : vector<16x16xf32>
    %405 = vector.extract_strided_slice %396 {offsets = [2, 0], sizes = [16, 16], strides = [1, 1]} : vector<24x16xf32> to vector<16x16xf32>
    %406 = vector.broadcast %30 : vector<1x16xf32> to vector<16x16xf32>
    %407 = arith.mulf %405, %406 : vector<16x16xf32>
    %408 = arith.addf %404, %407 : vector<16x16xf32>
    %409 = vector.broadcast %31 : vector<1x16xf32> to vector<16x16xf32>
    %410 = arith.addf %408, %409 : vector<16x16xf32>
    %cst_129 = arith.constant 0.000000e+00 : f32
    %cst_130 = arith.constant 6.000000e+00 : f32
    %411 = vector.broadcast %cst_129 : f32 to vector<16x16xf32>
    %412 = arith.maximumf %411, %410 : vector<16x16xf32>
    %413 = vector.broadcast %cst_130 : f32 to vector<16x16xf32>
    %414 = arith.minimumf %413, %412 : vector<16x16xf32>
    %c112 = arith.constant 112 : index
    %c0_131 = arith.constant 0 : index
    %415 = vector.load %arg11[%c112, %c0_131] : memref<256x16xf32, #tpu.memory_space<vmem>>, vector<16x16xf32>
    tpu.vector_store %arg11[%c112, %c0_131], %414 {strides = array<i32>} : memref<256x16xf32, #tpu.memory_space<vmem>>, vector<16x16xf32>,
    %c8_132 = arith.constant 8 : index
    %c0_133 = arith.constant 0 : index
    %c0_134 = arith.constant 0 : index
    %416 = vector.load %arg10[%c8_132, %c0_133, %c0_134] : memref<18x24x16xf32, #tpu.memory_space<vmem>>, vector<1x24x16xf32>
    %417 = vector.shape_cast %416 : vector<1x24x16xf32> to vector<24x16xf32>
    %418 = vector.extract_strided_slice %417 {offsets = [0, 0], sizes = [16, 16], strides = [1, 1]} : vector<24x16xf32> to vector<16x16xf32>
    %419 = vector.broadcast %22 : vector<1x16xf32> to vector<16x16xf32>
    %420 = arith.mulf %418, %419 : vector<16x16xf32>
    %421 = vector.extract_strided_slice %417 {offsets = [1, 0], sizes = [16, 16], strides = [1, 1]} : vector<24x16xf32> to vector<16x16xf32>
    %422 = vector.broadcast %23 : vector<1x16xf32> to vector<16x16xf32>
    %423 = arith.mulf %421, %422 : vector<16x16xf32>
    %424 = arith.addf %420, %423 : vector<16x16xf32>
    %425 = vector.extract_strided_slice %417 {offsets = [2, 0], sizes = [16, 16], strides = [1, 1]} : vector<24x16xf32> to vector<16x16xf32>
    %426 = vector.broadcast %24 : vector<1x16xf32> to vector<16x16xf32>
    %427 = arith.mulf %425, %426 : vector<16x16xf32>
    %428 = arith.addf %424, %427 : vector<16x16xf32>
    %c9_135 = arith.constant 9 : index
    %c0_136 = arith.constant 0 : index
    %c0_137 = arith.constant 0 : index
    %429 = vector.load %arg10[%c9_135, %c0_136, %c0_137] : memref<18x24x16xf32, #tpu.memory_space<vmem>>, vector<1x24x16xf32>
    %430 = vector.shape_cast %429 : vector<1x24x16xf32> to vector<24x16xf32>
    %431 = vector.extract_strided_slice %430 {offsets = [0, 0], sizes = [16, 16], strides = [1, 1]} : vector<24x16xf32> to vector<16x16xf32>
    %432 = vector.broadcast %25 : vector<1x16xf32> to vector<16x16xf32>
    %433 = arith.mulf %431, %432 : vector<16x16xf32>
    %434 = arith.addf %428, %433 : vector<16x16xf32>
    %435 = vector.extract_strided_slice %430 {offsets = [1, 0], sizes = [16, 16], strides = [1, 1]} : vector<24x16xf32> to vector<16x16xf32>
    %436 = vector.broadcast %26 : vector<1x16xf32> to vector<16x16xf32>
    %437 = arith.mulf %435, %436 : vector<16x16xf32>
    %438 = arith.addf %434, %437 : vector<16x16xf32>
    %439 = vector.extract_strided_slice %430 {offsets = [2, 0], sizes = [16, 16], strides = [1, 1]} : vector<24x16xf32> to vector<16x16xf32>
    %440 = vector.broadcast %27 : vector<1x16xf32> to vector<16x16xf32>
    %441 = arith.mulf %439, %440 : vector<16x16xf32>
    %442 = arith.addf %438, %441 : vector<16x16xf32>
    %c10 = arith.constant 10 : index
    %c0_138 = arith.constant 0 : index
    %c0_139 = arith.constant 0 : index
    %443 = vector.load %arg10[%c10, %c0_138, %c0_139] : memref<18x24x16xf32, #tpu.memory_space<vmem>>, vector<1x24x16xf32>
    %444 = vector.shape_cast %443 : vector<1x24x16xf32> to vector<24x16xf32>
    %445 = vector.extract_strided_slice %444 {offsets = [0, 0], sizes = [16, 16], strides = [1, 1]} : vector<24x16xf32> to vector<16x16xf32>
    %446 = vector.broadcast %28 : vector<1x16xf32> to vector<16x16xf32>
    %447 = arith.mulf %445, %446 : vector<16x16xf32>
    %448 = arith.addf %442, %447 : vector<16x16xf32>
    %449 = vector.extract_strided_slice %444 {offsets = [1, 0], sizes = [16, 16], strides = [1, 1]} : vector<24x16xf32> to vector<16x16xf32>
    %450 = vector.broadcast %29 : vector<1x16xf32> to vector<16x16xf32>
    %451 = arith.mulf %449, %450 : vector<16x16xf32>
    %452 = arith.addf %448, %451 : vector<16x16xf32>
    %453 = vector.extract_strided_slice %444 {offsets = [2, 0], sizes = [16, 16], strides = [1, 1]} : vector<24x16xf32> to vector<16x16xf32>
    %454 = vector.broadcast %30 : vector<1x16xf32> to vector<16x16xf32>
    %455 = arith.mulf %453, %454 : vector<16x16xf32>
    %456 = arith.addf %452, %455 : vector<16x16xf32>
    %457 = vector.broadcast %31 : vector<1x16xf32> to vector<16x16xf32>
    %458 = arith.addf %456, %457 : vector<16x16xf32>
    %cst_140 = arith.constant 0.000000e+00 : f32
    %cst_141 = arith.constant 6.000000e+00 : f32
    %459 = vector.broadcast %cst_140 : f32 to vector<16x16xf32>
    %460 = arith.maximumf %459, %458 : vector<16x16xf32>
    %461 = vector.broadcast %cst_141 : f32 to vector<16x16xf32>
    %462 = arith.minimumf %461, %460 : vector<16x16xf32>
    %c128 = arith.constant 128 : index
    %c0_142 = arith.constant 0 : index
    %463 = vector.load %arg11[%c128, %c0_142] : memref<256x16xf32, #tpu.memory_space<vmem>>, vector<16x16xf32>
    tpu.vector_store %arg11[%c128, %c0_142], %462 {strides = array<i32>} : memref<256x16xf32, #tpu.memory_space<vmem>>, vector<16x16xf32>,
    %c9_143 = arith.constant 9 : index
    %c0_144 = arith.constant 0 : index
    %c0_145 = arith.constant 0 : index
    %464 = vector.load %arg10[%c9_143, %c0_144, %c0_145] : memref<18x24x16xf32, #tpu.memory_space<vmem>>, vector<1x24x16xf32>
    %465 = vector.shape_cast %464 : vector<1x24x16xf32> to vector<24x16xf32>
    %466 = vector.extract_strided_slice %465 {offsets = [0, 0], sizes = [16, 16], strides = [1, 1]} : vector<24x16xf32> to vector<16x16xf32>
    %467 = vector.broadcast %22 : vector<1x16xf32> to vector<16x16xf32>
    %468 = arith.mulf %466, %467 : vector<16x16xf32>
    %469 = vector.extract_strided_slice %465 {offsets = [1, 0], sizes = [16, 16], strides = [1, 1]} : vector<24x16xf32> to vector<16x16xf32>
    %470 = vector.broadcast %23 : vector<1x16xf32> to vector<16x16xf32>
    %471 = arith.mulf %469, %470 : vector<16x16xf32>
    %472 = arith.addf %468, %471 : vector<16x16xf32>
    %473 = vector.extract_strided_slice %465 {offsets = [2, 0], sizes = [16, 16], strides = [1, 1]} : vector<24x16xf32> to vector<16x16xf32>
    %474 = vector.broadcast %24 : vector<1x16xf32> to vector<16x16xf32>
    %475 = arith.mulf %473, %474 : vector<16x16xf32>
    %476 = arith.addf %472, %475 : vector<16x16xf32>
    %c10_146 = arith.constant 10 : index
    %c0_147 = arith.constant 0 : index
    %c0_148 = arith.constant 0 : index
    %477 = vector.load %arg10[%c10_146, %c0_147, %c0_148] : memref<18x24x16xf32, #tpu.memory_space<vmem>>, vector<1x24x16xf32>
    %478 = vector.shape_cast %477 : vector<1x24x16xf32> to vector<24x16xf32>
    %479 = vector.extract_strided_slice %478 {offsets = [0, 0], sizes = [16, 16], strides = [1, 1]} : vector<24x16xf32> to vector<16x16xf32>
    %480 = vector.broadcast %25 : vector<1x16xf32> to vector<16x16xf32>
    %481 = arith.mulf %479, %480 : vector<16x16xf32>
    %482 = arith.addf %476, %481 : vector<16x16xf32>
    %483 = vector.extract_strided_slice %478 {offsets = [1, 0], sizes = [16, 16], strides = [1, 1]} : vector<24x16xf32> to vector<16x16xf32>
    %484 = vector.broadcast %26 : vector<1x16xf32> to vector<16x16xf32>
    %485 = arith.mulf %483, %484 : vector<16x16xf32>
    %486 = arith.addf %482, %485 : vector<16x16xf32>
    %487 = vector.extract_strided_slice %478 {offsets = [2, 0], sizes = [16, 16], strides = [1, 1]} : vector<24x16xf32> to vector<16x16xf32>
    %488 = vector.broadcast %27 : vector<1x16xf32> to vector<16x16xf32>
    %489 = arith.mulf %487, %488 : vector<16x16xf32>
    %490 = arith.addf %486, %489 : vector<16x16xf32>
    %c11 = arith.constant 11 : index
    %c0_149 = arith.constant 0 : index
    %c0_150 = arith.constant 0 : index
    %491 = vector.load %arg10[%c11, %c0_149, %c0_150] : memref<18x24x16xf32, #tpu.memory_space<vmem>>, vector<1x24x16xf32>
    %492 = vector.shape_cast %491 : vector<1x24x16xf32> to vector<24x16xf32>
    %493 = vector.extract_strided_slice %492 {offsets = [0, 0], sizes = [16, 16], strides = [1, 1]} : vector<24x16xf32> to vector<16x16xf32>
    %494 = vector.broadcast %28 : vector<1x16xf32> to vector<16x16xf32>
    %495 = arith.mulf %493, %494 : vector<16x16xf32>
    %496 = arith.addf %490, %495 : vector<16x16xf32>
    %497 = vector.extract_strided_slice %492 {offsets = [1, 0], sizes = [16, 16], strides = [1, 1]} : vector<24x16xf32> to vector<16x16xf32>
    %498 = vector.broadcast %29 : vector<1x16xf32> to vector<16x16xf32>
    %499 = arith.mulf %497, %498 : vector<16x16xf32>
    %500 = arith.addf %496, %499 : vector<16x16xf32>
    %501 = vector.extract_strided_slice %492 {offsets = [2, 0], sizes = [16, 16], strides = [1, 1]} : vector<24x16xf32> to vector<16x16xf32>
    %502 = vector.broadcast %30 : vector<1x16xf32> to vector<16x16xf32>
    %503 = arith.mulf %501, %502 : vector<16x16xf32>
    %504 = arith.addf %500, %503 : vector<16x16xf32>
    %505 = vector.broadcast %31 : vector<1x16xf32> to vector<16x16xf32>
    %506 = arith.addf %504, %505 : vector<16x16xf32>
    %cst_151 = arith.constant 0.000000e+00 : f32
    %cst_152 = arith.constant 6.000000e+00 : f32
    %507 = vector.broadcast %cst_151 : f32 to vector<16x16xf32>
    %508 = arith.maximumf %507, %506 : vector<16x16xf32>
    %509 = vector.broadcast %cst_152 : f32 to vector<16x16xf32>
    %510 = arith.minimumf %509, %508 : vector<16x16xf32>
    %c144 = arith.constant 144 : index
    %c0_153 = arith.constant 0 : index
    %511 = vector.load %arg11[%c144, %c0_153] : memref<256x16xf32, #tpu.memory_space<vmem>>, vector<16x16xf32>
    tpu.vector_store %arg11[%c144, %c0_153], %510 {strides = array<i32>} : memref<256x16xf32, #tpu.memory_space<vmem>>, vector<16x16xf32>,
    %c10_154 = arith.constant 10 : index
    %c0_155 = arith.constant 0 : index
    %c0_156 = arith.constant 0 : index
    %512 = vector.load %arg10[%c10_154, %c0_155, %c0_156] : memref<18x24x16xf32, #tpu.memory_space<vmem>>, vector<1x24x16xf32>
    %513 = vector.shape_cast %512 : vector<1x24x16xf32> to vector<24x16xf32>
    %514 = vector.extract_strided_slice %513 {offsets = [0, 0], sizes = [16, 16], strides = [1, 1]} : vector<24x16xf32> to vector<16x16xf32>
    %515 = vector.broadcast %22 : vector<1x16xf32> to vector<16x16xf32>
    %516 = arith.mulf %514, %515 : vector<16x16xf32>
    %517 = vector.extract_strided_slice %513 {offsets = [1, 0], sizes = [16, 16], strides = [1, 1]} : vector<24x16xf32> to vector<16x16xf32>
    %518 = vector.broadcast %23 : vector<1x16xf32> to vector<16x16xf32>
    %519 = arith.mulf %517, %518 : vector<16x16xf32>
    %520 = arith.addf %516, %519 : vector<16x16xf32>
    %521 = vector.extract_strided_slice %513 {offsets = [2, 0], sizes = [16, 16], strides = [1, 1]} : vector<24x16xf32> to vector<16x16xf32>
    %522 = vector.broadcast %24 : vector<1x16xf32> to vector<16x16xf32>
    %523 = arith.mulf %521, %522 : vector<16x16xf32>
    %524 = arith.addf %520, %523 : vector<16x16xf32>
    %c11_157 = arith.constant 11 : index
    %c0_158 = arith.constant 0 : index
    %c0_159 = arith.constant 0 : index
    %525 = vector.load %arg10[%c11_157, %c0_158, %c0_159] : memref<18x24x16xf32, #tpu.memory_space<vmem>>, vector<1x24x16xf32>
    %526 = vector.shape_cast %525 : vector<1x24x16xf32> to vector<24x16xf32>
    %527 = vector.extract_strided_slice %526 {offsets = [0, 0], sizes = [16, 16], strides = [1, 1]} : vector<24x16xf32> to vector<16x16xf32>
    %528 = vector.broadcast %25 : vector<1x16xf32> to vector<16x16xf32>
    %529 = arith.mulf %527, %528 : vector<16x16xf32>
    %530 = arith.addf %524, %529 : vector<16x16xf32>
    %531 = vector.extract_strided_slice %526 {offsets = [1, 0], sizes = [16, 16], strides = [1, 1]} : vector<24x16xf32> to vector<16x16xf32>
    %532 = vector.broadcast %26 : vector<1x16xf32> to vector<16x16xf32>
    %533 = arith.mulf %531, %532 : vector<16x16xf32>
    %534 = arith.addf %530, %533 : vector<16x16xf32>
    %535 = vector.extract_strided_slice %526 {offsets = [2, 0], sizes = [16, 16], strides = [1, 1]} : vector<24x16xf32> to vector<16x16xf32>
    %536 = vector.broadcast %27 : vector<1x16xf32> to vector<16x16xf32>
    %537 = arith.mulf %535, %536 : vector<16x16xf32>
    %538 = arith.addf %534, %537 : vector<16x16xf32>
    %c12 = arith.constant 12 : index
    %c0_160 = arith.constant 0 : index
    %c0_161 = arith.constant 0 : index
    %539 = vector.load %arg10[%c12, %c0_160, %c0_161] : memref<18x24x16xf32, #tpu.memory_space<vmem>>, vector<1x24x16xf32>
    %540 = vector.shape_cast %539 : vector<1x24x16xf32> to vector<24x16xf32>
    %541 = vector.extract_strided_slice %540 {offsets = [0, 0], sizes = [16, 16], strides = [1, 1]} : vector<24x16xf32> to vector<16x16xf32>
    %542 = vector.broadcast %28 : vector<1x16xf32> to vector<16x16xf32>
    %543 = arith.mulf %541, %542 : vector<16x16xf32>
    %544 = arith.addf %538, %543 : vector<16x16xf32>
    %545 = vector.extract_strided_slice %540 {offsets = [1, 0], sizes = [16, 16], strides = [1, 1]} : vector<24x16xf32> to vector<16x16xf32>
    %546 = vector.broadcast %29 : vector<1x16xf32> to vector<16x16xf32>
    %547 = arith.mulf %545, %546 : vector<16x16xf32>
    %548 = arith.addf %544, %547 : vector<16x16xf32>
    %549 = vector.extract_strided_slice %540 {offsets = [2, 0], sizes = [16, 16], strides = [1, 1]} : vector<24x16xf32> to vector<16x16xf32>
    %550 = vector.broadcast %30 : vector<1x16xf32> to vector<16x16xf32>
    %551 = arith.mulf %549, %550 : vector<16x16xf32>
    %552 = arith.addf %548, %551 : vector<16x16xf32>
    %553 = vector.broadcast %31 : vector<1x16xf32> to vector<16x16xf32>
    %554 = arith.addf %552, %553 : vector<16x16xf32>
    %cst_162 = arith.constant 0.000000e+00 : f32
    %cst_163 = arith.constant 6.000000e+00 : f32
    %555 = vector.broadcast %cst_162 : f32 to vector<16x16xf32>
    %556 = arith.maximumf %555, %554 : vector<16x16xf32>
    %557 = vector.broadcast %cst_163 : f32 to vector<16x16xf32>
    %558 = arith.minimumf %557, %556 : vector<16x16xf32>
    %c160 = arith.constant 160 : index
    %c0_164 = arith.constant 0 : index
    %559 = vector.load %arg11[%c160, %c0_164] : memref<256x16xf32, #tpu.memory_space<vmem>>, vector<16x16xf32>
    tpu.vector_store %arg11[%c160, %c0_164], %558 {strides = array<i32>} : memref<256x16xf32, #tpu.memory_space<vmem>>, vector<16x16xf32>,
    %c11_165 = arith.constant 11 : index
    %c0_166 = arith.constant 0 : index
    %c0_167 = arith.constant 0 : index
    %560 = vector.load %arg10[%c11_165, %c0_166, %c0_167] : memref<18x24x16xf32, #tpu.memory_space<vmem>>, vector<1x24x16xf32>
    %561 = vector.shape_cast %560 : vector<1x24x16xf32> to vector<24x16xf32>
    %562 = vector.extract_strided_slice %561 {offsets = [0, 0], sizes = [16, 16], strides = [1, 1]} : vector<24x16xf32> to vector<16x16xf32>
    %563 = vector.broadcast %22 : vector<1x16xf32> to vector<16x16xf32>
    %564 = arith.mulf %562, %563 : vector<16x16xf32>
    %565 = vector.extract_strided_slice %561 {offsets = [1, 0], sizes = [16, 16], strides = [1, 1]} : vector<24x16xf32> to vector<16x16xf32>
    %566 = vector.broadcast %23 : vector<1x16xf32> to vector<16x16xf32>
    %567 = arith.mulf %565, %566 : vector<16x16xf32>
    %568 = arith.addf %564, %567 : vector<16x16xf32>
    %569 = vector.extract_strided_slice %561 {offsets = [2, 0], sizes = [16, 16], strides = [1, 1]} : vector<24x16xf32> to vector<16x16xf32>
    %570 = vector.broadcast %24 : vector<1x16xf32> to vector<16x16xf32>
    %571 = arith.mulf %569, %570 : vector<16x16xf32>
    %572 = arith.addf %568, %571 : vector<16x16xf32>
    %c12_168 = arith.constant 12 : index
    %c0_169 = arith.constant 0 : index
    %c0_170 = arith.constant 0 : index
    %573 = vector.load %arg10[%c12_168, %c0_169, %c0_170] : memref<18x24x16xf32, #tpu.memory_space<vmem>>, vector<1x24x16xf32>
    %574 = vector.shape_cast %573 : vector<1x24x16xf32> to vector<24x16xf32>
    %575 = vector.extract_strided_slice %574 {offsets = [0, 0], sizes = [16, 16], strides = [1, 1]} : vector<24x16xf32> to vector<16x16xf32>
    %576 = vector.broadcast %25 : vector<1x16xf32> to vector<16x16xf32>
    %577 = arith.mulf %575, %576 : vector<16x16xf32>
    %578 = arith.addf %572, %577 : vector<16x16xf32>
    %579 = vector.extract_strided_slice %574 {offsets = [1, 0], sizes = [16, 16], strides = [1, 1]} : vector<24x16xf32> to vector<16x16xf32>
    %580 = vector.broadcast %26 : vector<1x16xf32> to vector<16x16xf32>
    %581 = arith.mulf %579, %580 : vector<16x16xf32>
    %582 = arith.addf %578, %581 : vector<16x16xf32>
    %583 = vector.extract_strided_slice %574 {offsets = [2, 0], sizes = [16, 16], strides = [1, 1]} : vector<24x16xf32> to vector<16x16xf32>
    %584 = vector.broadcast %27 : vector<1x16xf32> to vector<16x16xf32>
    %585 = arith.mulf %583, %584 : vector<16x16xf32>
    %586 = arith.addf %582, %585 : vector<16x16xf32>
    %c13 = arith.constant 13 : index
    %c0_171 = arith.constant 0 : index
    %c0_172 = arith.constant 0 : index
    %587 = vector.load %arg10[%c13, %c0_171, %c0_172] : memref<18x24x16xf32, #tpu.memory_space<vmem>>, vector<1x24x16xf32>
    %588 = vector.shape_cast %587 : vector<1x24x16xf32> to vector<24x16xf32>
    %589 = vector.extract_strided_slice %588 {offsets = [0, 0], sizes = [16, 16], strides = [1, 1]} : vector<24x16xf32> to vector<16x16xf32>
    %590 = vector.broadcast %28 : vector<1x16xf32> to vector<16x16xf32>
    %591 = arith.mulf %589, %590 : vector<16x16xf32>
    %592 = arith.addf %586, %591 : vector<16x16xf32>
    %593 = vector.extract_strided_slice %588 {offsets = [1, 0], sizes = [16, 16], strides = [1, 1]} : vector<24x16xf32> to vector<16x16xf32>
    %594 = vector.broadcast %29 : vector<1x16xf32> to vector<16x16xf32>
    %595 = arith.mulf %593, %594 : vector<16x16xf32>
    %596 = arith.addf %592, %595 : vector<16x16xf32>
    %597 = vector.extract_strided_slice %588 {offsets = [2, 0], sizes = [16, 16], strides = [1, 1]} : vector<24x16xf32> to vector<16x16xf32>
    %598 = vector.broadcast %30 : vector<1x16xf32> to vector<16x16xf32>
    %599 = arith.mulf %597, %598 : vector<16x16xf32>
    %600 = arith.addf %596, %599 : vector<16x16xf32>
    %601 = vector.broadcast %31 : vector<1x16xf32> to vector<16x16xf32>
    %602 = arith.addf %600, %601 : vector<16x16xf32>
    %cst_173 = arith.constant 0.000000e+00 : f32
    %cst_174 = arith.constant 6.000000e+00 : f32
    %603 = vector.broadcast %cst_173 : f32 to vector<16x16xf32>
    %604 = arith.maximumf %603, %602 : vector<16x16xf32>
    %605 = vector.broadcast %cst_174 : f32 to vector<16x16xf32>
    %606 = arith.minimumf %605, %604 : vector<16x16xf32>
    %c176 = arith.constant 176 : index
    %c0_175 = arith.constant 0 : index
    %607 = vector.load %arg11[%c176, %c0_175] : memref<256x16xf32, #tpu.memory_space<vmem>>, vector<16x16xf32>
    tpu.vector_store %arg11[%c176, %c0_175], %606 {strides = array<i32>} : memref<256x16xf32, #tpu.memory_space<vmem>>, vector<16x16xf32>,
    %c12_176 = arith.constant 12 : index
    %c0_177 = arith.constant 0 : index
    %c0_178 = arith.constant 0 : index
    %608 = vector.load %arg10[%c12_176, %c0_177, %c0_178] : memref<18x24x16xf32, #tpu.memory_space<vmem>>, vector<1x24x16xf32>
    %609 = vector.shape_cast %608 : vector<1x24x16xf32> to vector<24x16xf32>
    %610 = vector.extract_strided_slice %609 {offsets = [0, 0], sizes = [16, 16], strides = [1, 1]} : vector<24x16xf32> to vector<16x16xf32>
    %611 = vector.broadcast %22 : vector<1x16xf32> to vector<16x16xf32>
    %612 = arith.mulf %610, %611 : vector<16x16xf32>
    %613 = vector.extract_strided_slice %609 {offsets = [1, 0], sizes = [16, 16], strides = [1, 1]} : vector<24x16xf32> to vector<16x16xf32>
    %614 = vector.broadcast %23 : vector<1x16xf32> to vector<16x16xf32>
    %615 = arith.mulf %613, %614 : vector<16x16xf32>
    %616 = arith.addf %612, %615 : vector<16x16xf32>
    %617 = vector.extract_strided_slice %609 {offsets = [2, 0], sizes = [16, 16], strides = [1, 1]} : vector<24x16xf32> to vector<16x16xf32>
    %618 = vector.broadcast %24 : vector<1x16xf32> to vector<16x16xf32>
    %619 = arith.mulf %617, %618 : vector<16x16xf32>
    %620 = arith.addf %616, %619 : vector<16x16xf32>
    %c13_179 = arith.constant 13 : index
    %c0_180 = arith.constant 0 : index
    %c0_181 = arith.constant 0 : index
    %621 = vector.load %arg10[%c13_179, %c0_180, %c0_181] : memref<18x24x16xf32, #tpu.memory_space<vmem>>, vector<1x24x16xf32>
    %622 = vector.shape_cast %621 : vector<1x24x16xf32> to vector<24x16xf32>
    %623 = vector.extract_strided_slice %622 {offsets = [0, 0], sizes = [16, 16], strides = [1, 1]} : vector<24x16xf32> to vector<16x16xf32>
    %624 = vector.broadcast %25 : vector<1x16xf32> to vector<16x16xf32>
    %625 = arith.mulf %623, %624 : vector<16x16xf32>
    %626 = arith.addf %620, %625 : vector<16x16xf32>
    %627 = vector.extract_strided_slice %622 {offsets = [1, 0], sizes = [16, 16], strides = [1, 1]} : vector<24x16xf32> to vector<16x16xf32>
    %628 = vector.broadcast %26 : vector<1x16xf32> to vector<16x16xf32>
    %629 = arith.mulf %627, %628 : vector<16x16xf32>
    %630 = arith.addf %626, %629 : vector<16x16xf32>
    %631 = vector.extract_strided_slice %622 {offsets = [2, 0], sizes = [16, 16], strides = [1, 1]} : vector<24x16xf32> to vector<16x16xf32>
    %632 = vector.broadcast %27 : vector<1x16xf32> to vector<16x16xf32>
    %633 = arith.mulf %631, %632 : vector<16x16xf32>
    %634 = arith.addf %630, %633 : vector<16x16xf32>
    %c14 = arith.constant 14 : index
    %c0_182 = arith.constant 0 : index
    %c0_183 = arith.constant 0 : index
    %635 = vector.load %arg10[%c14, %c0_182, %c0_183] : memref<18x24x16xf32, #tpu.memory_space<vmem>>, vector<1x24x16xf32>
    %636 = vector.shape_cast %635 : vector<1x24x16xf32> to vector<24x16xf32>
    %637 = vector.extract_strided_slice %636 {offsets = [0, 0], sizes = [16, 16], strides = [1, 1]} : vector<24x16xf32> to vector<16x16xf32>
    %638 = vector.broadcast %28 : vector<1x16xf32> to vector<16x16xf32>
    %639 = arith.mulf %637, %638 : vector<16x16xf32>
    %640 = arith.addf %634, %639 : vector<16x16xf32>
    %641 = vector.extract_strided_slice %636 {offsets = [1, 0], sizes = [16, 16], strides = [1, 1]} : vector<24x16xf32> to vector<16x16xf32>
    %642 = vector.broadcast %29 : vector<1x16xf32> to vector<16x16xf32>
    %643 = arith.mulf %641, %642 : vector<16x16xf32>
    %644 = arith.addf %640, %643 : vector<16x16xf32>
    %645 = vector.extract_strided_slice %636 {offsets = [2, 0], sizes = [16, 16], strides = [1, 1]} : vector<24x16xf32> to vector<16x16xf32>
    %646 = vector.broadcast %30 : vector<1x16xf32> to vector<16x16xf32>
    %647 = arith.mulf %645, %646 : vector<16x16xf32>
    %648 = arith.addf %644, %647 : vector<16x16xf32>
    %649 = vector.broadcast %31 : vector<1x16xf32> to vector<16x16xf32>
    %650 = arith.addf %648, %649 : vector<16x16xf32>
    %cst_184 = arith.constant 0.000000e+00 : f32
    %cst_185 = arith.constant 6.000000e+00 : f32
    %651 = vector.broadcast %cst_184 : f32 to vector<16x16xf32>
    %652 = arith.maximumf %651, %650 : vector<16x16xf32>
    %653 = vector.broadcast %cst_185 : f32 to vector<16x16xf32>
    %654 = arith.minimumf %653, %652 : vector<16x16xf32>
    %c192 = arith.constant 192 : index
    %c0_186 = arith.constant 0 : index
    %655 = vector.load %arg11[%c192, %c0_186] : memref<256x16xf32, #tpu.memory_space<vmem>>, vector<16x16xf32>
    tpu.vector_store %arg11[%c192, %c0_186], %654 {strides = array<i32>} : memref<256x16xf32, #tpu.memory_space<vmem>>, vector<16x16xf32>,
    %c13_187 = arith.constant 13 : index
    %c0_188 = arith.constant 0 : index
    %c0_189 = arith.constant 0 : index
    %656 = vector.load %arg10[%c13_187, %c0_188, %c0_189] : memref<18x24x16xf32, #tpu.memory_space<vmem>>, vector<1x24x16xf32>
    %657 = vector.shape_cast %656 : vector<1x24x16xf32> to vector<24x16xf32>
    %658 = vector.extract_strided_slice %657 {offsets = [0, 0], sizes = [16, 16], strides = [1, 1]} : vector<24x16xf32> to vector<16x16xf32>
    %659 = vector.broadcast %22 : vector<1x16xf32> to vector<16x16xf32>
    %660 = arith.mulf %658, %659 : vector<16x16xf32>
    %661 = vector.extract_strided_slice %657 {offsets = [1, 0], sizes = [16, 16], strides = [1, 1]} : vector<24x16xf32> to vector<16x16xf32>
    %662 = vector.broadcast %23 : vector<1x16xf32> to vector<16x16xf32>
    %663 = arith.mulf %661, %662 : vector<16x16xf32>
    %664 = arith.addf %660, %663 : vector<16x16xf32>
    %665 = vector.extract_strided_slice %657 {offsets = [2, 0], sizes = [16, 16], strides = [1, 1]} : vector<24x16xf32> to vector<16x16xf32>
    %666 = vector.broadcast %24 : vector<1x16xf32> to vector<16x16xf32>
    %667 = arith.mulf %665, %666 : vector<16x16xf32>
    %668 = arith.addf %664, %667 : vector<16x16xf32>
    %c14_190 = arith.constant 14 : index
    %c0_191 = arith.constant 0 : index
    %c0_192 = arith.constant 0 : index
    %669 = vector.load %arg10[%c14_190, %c0_191, %c0_192] : memref<18x24x16xf32, #tpu.memory_space<vmem>>, vector<1x24x16xf32>
    %670 = vector.shape_cast %669 : vector<1x24x16xf32> to vector<24x16xf32>
    %671 = vector.extract_strided_slice %670 {offsets = [0, 0], sizes = [16, 16], strides = [1, 1]} : vector<24x16xf32> to vector<16x16xf32>
    %672 = vector.broadcast %25 : vector<1x16xf32> to vector<16x16xf32>
    %673 = arith.mulf %671, %672 : vector<16x16xf32>
    %674 = arith.addf %668, %673 : vector<16x16xf32>
    %675 = vector.extract_strided_slice %670 {offsets = [1, 0], sizes = [16, 16], strides = [1, 1]} : vector<24x16xf32> to vector<16x16xf32>
    %676 = vector.broadcast %26 : vector<1x16xf32> to vector<16x16xf32>
    %677 = arith.mulf %675, %676 : vector<16x16xf32>
    %678 = arith.addf %674, %677 : vector<16x16xf32>
    %679 = vector.extract_strided_slice %670 {offsets = [2, 0], sizes = [16, 16], strides = [1, 1]} : vector<24x16xf32> to vector<16x16xf32>
    %680 = vector.broadcast %27 : vector<1x16xf32> to vector<16x16xf32>
    %681 = arith.mulf %679, %680 : vector<16x16xf32>
    %682 = arith.addf %678, %681 : vector<16x16xf32>
    %c15 = arith.constant 15 : index
    %c0_193 = arith.constant 0 : index
    %c0_194 = arith.constant 0 : index
    %683 = vector.load %arg10[%c15, %c0_193, %c0_194] : memref<18x24x16xf32, #tpu.memory_space<vmem>>, vector<1x24x16xf32>
    %684 = vector.shape_cast %683 : vector<1x24x16xf32> to vector<24x16xf32>
    %685 = vector.extract_strided_slice %684 {offsets = [0, 0], sizes = [16, 16], strides = [1, 1]} : vector<24x16xf32> to vector<16x16xf32>
    %686 = vector.broadcast %28 : vector<1x16xf32> to vector<16x16xf32>
    %687 = arith.mulf %685, %686 : vector<16x16xf32>
    %688 = arith.addf %682, %687 : vector<16x16xf32>
    %689 = vector.extract_strided_slice %684 {offsets = [1, 0], sizes = [16, 16], strides = [1, 1]} : vector<24x16xf32> to vector<16x16xf32>
    %690 = vector.broadcast %29 : vector<1x16xf32> to vector<16x16xf32>
    %691 = arith.mulf %689, %690 : vector<16x16xf32>
    %692 = arith.addf %688, %691 : vector<16x16xf32>
    %693 = vector.extract_strided_slice %684 {offsets = [2, 0], sizes = [16, 16], strides = [1, 1]} : vector<24x16xf32> to vector<16x16xf32>
    %694 = vector.broadcast %30 : vector<1x16xf32> to vector<16x16xf32>
    %695 = arith.mulf %693, %694 : vector<16x16xf32>
    %696 = arith.addf %692, %695 : vector<16x16xf32>
    %697 = vector.broadcast %31 : vector<1x16xf32> to vector<16x16xf32>
    %698 = arith.addf %696, %697 : vector<16x16xf32>
    %cst_195 = arith.constant 0.000000e+00 : f32
    %cst_196 = arith.constant 6.000000e+00 : f32
    %699 = vector.broadcast %cst_195 : f32 to vector<16x16xf32>
    %700 = arith.maximumf %699, %698 : vector<16x16xf32>
    %701 = vector.broadcast %cst_196 : f32 to vector<16x16xf32>
    %702 = arith.minimumf %701, %700 : vector<16x16xf32>
    %c208 = arith.constant 208 : index
    %c0_197 = arith.constant 0 : index
    %703 = vector.load %arg11[%c208, %c0_197] : memref<256x16xf32, #tpu.memory_space<vmem>>, vector<16x16xf32>
    tpu.vector_store %arg11[%c208, %c0_197], %702 {strides = array<i32>} : memref<256x16xf32, #tpu.memory_space<vmem>>, vector<16x16xf32>,
    %c14_198 = arith.constant 14 : index
    %c0_199 = arith.constant 0 : index
    %c0_200 = arith.constant 0 : index
    %704 = vector.load %arg10[%c14_198, %c0_199, %c0_200] : memref<18x24x16xf32, #tpu.memory_space<vmem>>, vector<1x24x16xf32>
    %705 = vector.shape_cast %704 : vector<1x24x16xf32> to vector<24x16xf32>
    %706 = vector.extract_strided_slice %705 {offsets = [0, 0], sizes = [16, 16], strides = [1, 1]} : vector<24x16xf32> to vector<16x16xf32>
    %707 = vector.broadcast %22 : vector<1x16xf32> to vector<16x16xf32>
    %708 = arith.mulf %706, %707 : vector<16x16xf32>
    %709 = vector.extract_strided_slice %705 {offsets = [1, 0], sizes = [16, 16], strides = [1, 1]} : vector<24x16xf32> to vector<16x16xf32>
    %710 = vector.broadcast %23 : vector<1x16xf32> to vector<16x16xf32>
    %711 = arith.mulf %709, %710 : vector<16x16xf32>
    %712 = arith.addf %708, %711 : vector<16x16xf32>
    %713 = vector.extract_strided_slice %705 {offsets = [2, 0], sizes = [16, 16], strides = [1, 1]} : vector<24x16xf32> to vector<16x16xf32>
    %714 = vector.broadcast %24 : vector<1x16xf32> to vector<16x16xf32>
    %715 = arith.mulf %713, %714 : vector<16x16xf32>
    %716 = arith.addf %712, %715 : vector<16x16xf32>
    %c15_201 = arith.constant 15 : index
    %c0_202 = arith.constant 0 : index
    %c0_203 = arith.constant 0 : index
    %717 = vector.load %arg10[%c15_201, %c0_202, %c0_203] : memref<18x24x16xf32, #tpu.memory_space<vmem>>, vector<1x24x16xf32>
    %718 = vector.shape_cast %717 : vector<1x24x16xf32> to vector<24x16xf32>
    %719 = vector.extract_strided_slice %718 {offsets = [0, 0], sizes = [16, 16], strides = [1, 1]} : vector<24x16xf32> to vector<16x16xf32>
    %720 = vector.broadcast %25 : vector<1x16xf32> to vector<16x16xf32>
    %721 = arith.mulf %719, %720 : vector<16x16xf32>
    %722 = arith.addf %716, %721 : vector<16x16xf32>
    %723 = vector.extract_strided_slice %718 {offsets = [1, 0], sizes = [16, 16], strides = [1, 1]} : vector<24x16xf32> to vector<16x16xf32>
    %724 = vector.broadcast %26 : vector<1x16xf32> to vector<16x16xf32>
    %725 = arith.mulf %723, %724 : vector<16x16xf32>
    %726 = arith.addf %722, %725 : vector<16x16xf32>
    %727 = vector.extract_strided_slice %718 {offsets = [2, 0], sizes = [16, 16], strides = [1, 1]} : vector<24x16xf32> to vector<16x16xf32>
    %728 = vector.broadcast %27 : vector<1x16xf32> to vector<16x16xf32>
    %729 = arith.mulf %727, %728 : vector<16x16xf32>
    %730 = arith.addf %726, %729 : vector<16x16xf32>
    %c16_204 = arith.constant 16 : index
    %c0_205 = arith.constant 0 : index
    %c0_206 = arith.constant 0 : index
    %731 = vector.load %arg10[%c16_204, %c0_205, %c0_206] : memref<18x24x16xf32, #tpu.memory_space<vmem>>, vector<1x24x16xf32>
    %732 = vector.shape_cast %731 : vector<1x24x16xf32> to vector<24x16xf32>
    %733 = vector.extract_strided_slice %732 {offsets = [0, 0], sizes = [16, 16], strides = [1, 1]} : vector<24x16xf32> to vector<16x16xf32>
    %734 = vector.broadcast %28 : vector<1x16xf32> to vector<16x16xf32>
    %735 = arith.mulf %733, %734 : vector<16x16xf32>
    %736 = arith.addf %730, %735 : vector<16x16xf32>
    %737 = vector.extract_strided_slice %732 {offsets = [1, 0], sizes = [16, 16], strides = [1, 1]} : vector<24x16xf32> to vector<16x16xf32>
    %738 = vector.broadcast %29 : vector<1x16xf32> to vector<16x16xf32>
    %739 = arith.mulf %737, %738 : vector<16x16xf32>
    %740 = arith.addf %736, %739 : vector<16x16xf32>
    %741 = vector.extract_strided_slice %732 {offsets = [2, 0], sizes = [16, 16], strides = [1, 1]} : vector<24x16xf32> to vector<16x16xf32>
    %742 = vector.broadcast %30 : vector<1x16xf32> to vector<16x16xf32>
    %743 = arith.mulf %741, %742 : vector<16x16xf32>
    %744 = arith.addf %740, %743 : vector<16x16xf32>
    %745 = vector.broadcast %31 : vector<1x16xf32> to vector<16x16xf32>
    %746 = arith.addf %744, %745 : vector<16x16xf32>
    %cst_207 = arith.constant 0.000000e+00 : f32
    %cst_208 = arith.constant 6.000000e+00 : f32
    %747 = vector.broadcast %cst_207 : f32 to vector<16x16xf32>
    %748 = arith.maximumf %747, %746 : vector<16x16xf32>
    %749 = vector.broadcast %cst_208 : f32 to vector<16x16xf32>
    %750 = arith.minimumf %749, %748 : vector<16x16xf32>
    %c224 = arith.constant 224 : index
    %c0_209 = arith.constant 0 : index
    %751 = vector.load %arg11[%c224, %c0_209] : memref<256x16xf32, #tpu.memory_space<vmem>>, vector<16x16xf32>
    tpu.vector_store %arg11[%c224, %c0_209], %750 {strides = array<i32>} : memref<256x16xf32, #tpu.memory_space<vmem>>, vector<16x16xf32>,
    %c15_210 = arith.constant 15 : index
    %c0_211 = arith.constant 0 : index
    %c0_212 = arith.constant 0 : index
    %752 = vector.load %arg10[%c15_210, %c0_211, %c0_212] : memref<18x24x16xf32, #tpu.memory_space<vmem>>, vector<1x24x16xf32>
    %753 = vector.shape_cast %752 : vector<1x24x16xf32> to vector<24x16xf32>
    %754 = vector.extract_strided_slice %753 {offsets = [0, 0], sizes = [16, 16], strides = [1, 1]} : vector<24x16xf32> to vector<16x16xf32>
    %755 = vector.broadcast %22 : vector<1x16xf32> to vector<16x16xf32>
    %756 = arith.mulf %754, %755 : vector<16x16xf32>
    %757 = vector.extract_strided_slice %753 {offsets = [1, 0], sizes = [16, 16], strides = [1, 1]} : vector<24x16xf32> to vector<16x16xf32>
    %758 = vector.broadcast %23 : vector<1x16xf32> to vector<16x16xf32>
    %759 = arith.mulf %757, %758 : vector<16x16xf32>
    %760 = arith.addf %756, %759 : vector<16x16xf32>
    %761 = vector.extract_strided_slice %753 {offsets = [2, 0], sizes = [16, 16], strides = [1, 1]} : vector<24x16xf32> to vector<16x16xf32>
    %762 = vector.broadcast %24 : vector<1x16xf32> to vector<16x16xf32>
    %763 = arith.mulf %761, %762 : vector<16x16xf32>
    %764 = arith.addf %760, %763 : vector<16x16xf32>
    %c16_213 = arith.constant 16 : index
    %c0_214 = arith.constant 0 : index
    %c0_215 = arith.constant 0 : index
    %765 = vector.load %arg10[%c16_213, %c0_214, %c0_215] : memref<18x24x16xf32, #tpu.memory_space<vmem>>, vector<1x24x16xf32>
    %766 = vector.shape_cast %765 : vector<1x24x16xf32> to vector<24x16xf32>
    %767 = vector.extract_strided_slice %766 {offsets = [0, 0], sizes = [16, 16], strides = [1, 1]} : vector<24x16xf32> to vector<16x16xf32>
    %768 = vector.broadcast %25 : vector<1x16xf32> to vector<16x16xf32>
    %769 = arith.mulf %767, %768 : vector<16x16xf32>
    %770 = arith.addf %764, %769 : vector<16x16xf32>
    %771 = vector.extract_strided_slice %766 {offsets = [1, 0], sizes = [16, 16], strides = [1, 1]} : vector<24x16xf32> to vector<16x16xf32>
    %772 = vector.broadcast %26 : vector<1x16xf32> to vector<16x16xf32>
    %773 = arith.mulf %771, %772 : vector<16x16xf32>
    %774 = arith.addf %770, %773 : vector<16x16xf32>
    %775 = vector.extract_strided_slice %766 {offsets = [2, 0], sizes = [16, 16], strides = [1, 1]} : vector<24x16xf32> to vector<16x16xf32>
    %776 = vector.broadcast %27 : vector<1x16xf32> to vector<16x16xf32>
    %777 = arith.mulf %775, %776 : vector<16x16xf32>
    %778 = arith.addf %774, %777 : vector<16x16xf32>
    %c17_216 = arith.constant 17 : index
    %c0_217 = arith.constant 0 : index
    %c0_218 = arith.constant 0 : index
    %779 = vector.load %arg10[%c17_216, %c0_217, %c0_218] : memref<18x24x16xf32, #tpu.memory_space<vmem>>, vector<1x24x16xf32>
    %780 = vector.shape_cast %779 : vector<1x24x16xf32> to vector<24x16xf32>
    %781 = vector.extract_strided_slice %780 {offsets = [0, 0], sizes = [16, 16], strides = [1, 1]} : vector<24x16xf32> to vector<16x16xf32>
    %782 = vector.broadcast %28 : vector<1x16xf32> to vector<16x16xf32>
    %783 = arith.mulf %781, %782 : vector<16x16xf32>
    %784 = arith.addf %778, %783 : vector<16x16xf32>
    %785 = vector.extract_strided_slice %780 {offsets = [1, 0], sizes = [16, 16], strides = [1, 1]} : vector<24x16xf32> to vector<16x16xf32>
    %786 = vector.broadcast %29 : vector<1x16xf32> to vector<16x16xf32>
    %787 = arith.mulf %785, %786 : vector<16x16xf32>
    %788 = arith.addf %784, %787 : vector<16x16xf32>
    %789 = vector.extract_strided_slice %780 {offsets = [2, 0], sizes = [16, 16], strides = [1, 1]} : vector<24x16xf32> to vector<16x16xf32>
    %790 = vector.broadcast %30 : vector<1x16xf32> to vector<16x16xf32>
    %791 = arith.mulf %789, %790 : vector<16x16xf32>
    %792 = arith.addf %788, %791 : vector<16x16xf32>
    %793 = vector.broadcast %31 : vector<1x16xf32> to vector<16x16xf32>
    %794 = arith.addf %792, %793 : vector<16x16xf32>
    %cst_219 = arith.constant 0.000000e+00 : f32
    %cst_220 = arith.constant 6.000000e+00 : f32
    %795 = vector.broadcast %cst_219 : f32 to vector<16x16xf32>
    %796 = arith.maximumf %795, %794 : vector<16x16xf32>
    %797 = vector.broadcast %cst_220 : f32 to vector<16x16xf32>
    %798 = arith.minimumf %797, %796 : vector<16x16xf32>
    %c240 = arith.constant 240 : index
    %c0_221 = arith.constant 0 : index
    %799 = vector.load %arg11[%c240, %c0_221] : memref<256x16xf32, #tpu.memory_space<vmem>>, vector<16x16xf32>
    tpu.vector_store %arg11[%c240, %c0_221], %798 {strides = array<i32>} : memref<256x16xf32, #tpu.memory_space<vmem>>, vector<16x16xf32>,
    %c0_222 = arith.constant 0 : index
    %c0_223 = arith.constant 0 : index
    %800 = vector.load %arg11[%c0_222, %c0_223] : memref<256x16xf32, #tpu.memory_space<vmem>>, vector<256x16xf32>
    %c0_224 = arith.constant 0 : index
    %c0_225 = arith.constant 0 : index
    %801 = vector.load %arg7[%c0_224, %c0_225] : memref<16x4xf32, #tpu.memory_space<vmem>>, vector<16x4xf32>
    %cst_226 = arith.constant dense<0.000000e+00> : vector<256x4xf32>
    %802 = tpu.matmul %800, %801, %cst_226 {dimension_numbers = #tpu.dot_dimension_numbers<[1], [0], [0], [1], [0, 0, 1, 1], [], []>} : vector<256x16xf32>, vector<16x4xf32>, vector<256x4xf32> -> vector<256x4xf32>
    %c0_227 = arith.constant 0 : index
    %c0_228 = arith.constant 0 : index
    %803 = vector.load %arg8[%c0_227, %c0_228] : memref<1x4xf32, #tpu.memory_space<vmem>>, vector<1x4xf32>
    %804 = vector.broadcast %803 : vector<1x4xf32> to vector<256x4xf32>
    %805 = arith.addf %802, %804 : vector<256x4xf32>
    %806 = vector.shape_cast %805 : vector<256x4xf32> to vector<16x16x4xf32>
    %c1_i32 = arith.constant 1 : i32
    %807 = arith.addi %0, %c1_i32 : i32
    %c0_229 = arith.constant 0 : index
    %808 = arith.index_cast %807 : i32 to index
    %c1_230 = arith.constant 1 : index
    %c0_231 = arith.constant 0 : index
    %809 = vector.load %arg2[%c0_229, %808, %c1_230, %c0_231] : memref<1x18x24x4xf32, #tpu.memory_space<vmem>>, vector<1x16x16x4xf32>
    %810 = vector.shape_cast %809 : vector<1x16x16x4xf32> to vector<16x16x4xf32>
    %811 = arith.addf %806, %810 : vector<16x16x4xf32>
    %c0_232 = arith.constant 0 : index
    %c0_233 = arith.constant 0 : index
    %c0_234 = arith.constant 0 : index
    %c0_235 = arith.constant 0 : index
    %812 = vector.load %arg9[%c0_232, %c0_233, %c0_234, %c0_235] : memref<1x16x16x4xf32, #tpu.memory_space<vmem>>, vector<1x16x16x4xf32>
    %813 = vector.shape_cast %812 : vector<1x16x16x4xf32> to vector<16x16x4xf32>
    %814 = vector.shape_cast %811 : vector<16x16x4xf32> to vector<1x16x16x4xf32>
    tpu.vector_store %arg9[%c0_232, %c0_233, %c0_234, %c0_235], %814 {strides = array<i32>} : memref<1x16x16x4xf32, #tpu.memory_space<vmem>>, vector<1x16x16x4xf32>,
    return
  }
  func.func @transform_0(%arg0: i32, %arg1: i32) -> (i32, i32, i32, i32) {
    %c0_i32 = arith.constant 0 : i32
    %c0_i32_0 = arith.constant 0 : i32
    %c0_i32_1 = arith.constant 0 : i32
    %c0_i32_2 = arith.constant 0 : i32
    return %arg0, %c0_i32, %c0_i32_0, %c0_i32_1 : i32, i32, i32, i32
  }
  func.func @transform_1(%arg0: i32, %arg1: i32) -> (i32, i32) {
    %c0_i32 = arith.constant 0 : i32
    %c0_i32_0 = arith.constant 0 : i32
    %c0_i32_1 = arith.constant 0 : i32
    return %c0_i32, %c0_i32_0 : i32, i32
  }
  func.func @transform_2(%arg0: i32, %arg1: i32) -> (i32, i32) {
    %c0_i32 = arith.constant 0 : i32
    %c0_i32_0 = arith.constant 0 : i32
    %c0_i32_1 = arith.constant 0 : i32
    return %c0_i32, %c0_i32_0 : i32, i32
  }
  func.func @transform_3(%arg0: i32, %arg1: i32) -> (i32, i32) {
    %c0_i32 = arith.constant 0 : i32
    %c0_i32_0 = arith.constant 0 : i32
    %c0_i32_1 = arith.constant 0 : i32
    return %c0_i32, %c0_i32_0 : i32, i32
  }
  func.func @transform_4(%arg0: i32, %arg1: i32) -> (i32, i32) {
    %c0_i32 = arith.constant 0 : i32
    %c0_i32_0 = arith.constant 0 : i32
    %c0_i32_1 = arith.constant 0 : i32
    return %c0_i32, %c0_i32_0 : i32, i32
  }
  func.func @transform_5(%arg0: i32, %arg1: i32) -> (i32, i32) {
    %c0_i32 = arith.constant 0 : i32
    %c0_i32_0 = arith.constant 0 : i32
    %c0_i32_1 = arith.constant 0 : i32
    return %c0_i32, %c0_i32_0 : i32, i32
  }
  func.func @transform_6(%arg0: i32, %arg1: i32) -> (i32, i32) {
    %c0_i32 = arith.constant 0 : i32
    %c0_i32_0 = arith.constant 0 : i32
    %c0_i32_1 = arith.constant 0 : i32
    return %c0_i32, %c0_i32_0 : i32, i32
  }
  func.func @transform_7(%arg0: i32, %arg1: i32) -> (i32, i32, i32, i32) {
    %c0_i32 = arith.constant 0 : i32
    %c0_i32_0 = arith.constant 0 : i32
    %c0_i32_1 = arith.constant 0 : i32
    return %arg0, %arg1, %c0_i32, %c0_i32_0 : i32, i32, i32, i32
  }
}

</mosaic_0001>

<llo_original>
// kernel: tpu_custom_call.1
$region0: #{tpu_custom_call.1}
  #allocation0 [shape = 'u32[]', space=smem, size = 0x4, offset = 0x4, fixed_abs, tag = 'smem constant byte address 0x4 - core index']
  #allocation1 [shape = 'u32[144,128]{1,0:T(1,128)}', space=vmem, size = 0x12000, scoped, tag = 'internal scratch']
  #allocation2 [shape = 'f32[18,24,16]{2,1,0:T(8,128)}', space=vmem, size = 0x36000, scoped, tag = 'scratch operand']
  #allocation3 [shape = 'f32[256,16]{1,0:T(8,128)}', space=vmem, size = 0x20000, scoped, tag = 'scratch operand']
  %s0 = inlined_call_operand.vmem [shape: f32[2,18,24,4], index: 0, kind: input, shape index: {}]
  %s1 = inlined_call_operand.vmem [shape: f32[4,16], index: 1, kind: input, shape index: {}]
  %s2 = inlined_call_operand.vmem [shape: f32[1,16], index: 2, kind: input, shape index: {}]
  %s3 = inlined_call_operand.vmem [shape: f32[9,16], index: 3, kind: input, shape index: {}]
  %s4 = inlined_call_operand.vmem [shape: f32[1,16], index: 4, kind: input, shape index: {}]
  %s5 = inlined_call_operand.vmem [shape: f32[16,4], index: 5, kind: input, shape index: {}]
  %s6 = inlined_call_operand.vmem [shape: f32[1,4], index: 6, kind: input, shape index: {}]
  %s7 = inlined_call_operand.vmem [shape: f32[2,16,16,4], index: 7, kind: output, shape index: {}]
  %s8 = sld [smem:[#allocation0]]
  $region61: #{tpu_custom_call.1} parent=0
    _
  %s10 = ssub.s32 1, %s8
  %s11 = scalar_select 0, %s10, %s8
  loop: start=0, step=1, limit=4
  $region2: #{tpu_custom_call.1} parent=0 // loop_pre_header
    _
  $region3: #{tpu_custom_call.1} parent=0 // loop_header
    %s13 = sphi 0, %s17
    %p14 = scmp.ge.s32.totalorder %s13, 4
    %s20 = sphi 0, %s32
    %s21 = sphi 0, %s28
    %s22 = sphi 0, %s20
    %s23 = sphi 0, %s21
    %s24 = sphi 0, %s22
    %s25 = sphi 0, %s23
    %s35 = sphi 0, %s37
    %s38 = sphi 0, %s35
    %s39 = sphi 0, %s38
    %s55 = sphi 0, %s39
    %s59 = sphi 0, %s59
    %s61 = sphi 0, %s59
    %s62 = sphi 0, %s61
    %s76 = sphi 0, %s62
    %s80 = sphi 0, %s80
    %s82 = sphi 0, %s80
    %s83 = sphi 0, %s82
    %s97 = sphi 0, %s83
    %s101 = sphi 0, %s101
    %s103 = sphi 0, %s101
    %s104 = sphi 0, %s103
    %s118 = sphi 0, %s104
    %s122 = sphi 0, %s122
    %s124 = sphi 0, %s122
    %s125 = sphi 0, %s124
    %s139 = sphi 0, %s125
    %s143 = sphi 0, %s143
    %s145 = sphi 0, %s143
    %s146 = sphi 0, %s145
    %s160 = sphi 0, %s146
    %s164 = sphi 0, %s164
    %s166 = sphi 0, %s164
    %s167 = sphi 0, %s166
    %s181 = sphi 0, %s167
    %s189 = sphi 0, %s191
    %s192 = sphi 0, %s189
    %s193 = sphi 0, %s192
    %s209 = sphi 0, %s193
  $region4: #{tpu_custom_call.1} parent=0 // loop_header_branch
    %16 = sbr.rel (%p14) target = $region8
  $region5: #{tpu_custom_call.1} parent=0 // loop_body
    %s18 = ssub.s32 %s13, 1
    %s19 = ssub.s32 %s13, 2
    %s26 = sadd.s32 1, %s21
    %p27 = scmp.ge.s32.totalorder %s26, 1
    %s28 = scalar_select %p27, 0, %s26
    %s29 = sadd.s32 1, %s20
    %s30 = scalar_select %p27, %s29, %s20
    %p31 = scmp.ge.s32.totalorder %s30, 2
    %s32 = scalar_select %p31, 0, %s30
    %s33 = ssub.s32 %s20, %s32
    %p34 = scmp.eq.s32.totalorder %s33, 0
    %s36 = sadd.s32 %s35, 1
    %s37 = scalar_select %p34, %s35, %s36
    %p40 = pneg %p34
    %p41 = scmp.eq.s32.totalorder %s13, 1
    %p42 = por %p40, %p41
    %p43 = scmp.ne.s32.totalorder %s35, %s38
    %p44 = scmp.eq.s32.totalorder %s13, 0
    %p45 = por %p43, %p44
    %p46 = scmp.ne.s32.totalorder %s35, %s38
    %p47 = scmp.eq.s32.totalorder %s18, 1
    %p48 = por %p46, %p47
    %p49 = scmp.ne.s32.totalorder %s38, %s39
    %p50 = scmp.eq.s32.totalorder %s18, 0
    %p51 = por %p49, %p50
    %p52 = scmp.ne.s32.totalorder %s38, %s39
    %p53 = scmp.eq.s32.totalorder %s19, 1
    %p54 = por %p52, %p53
    %p56 = scmp.ne.s32.totalorder %s39, %s55
    %p57 = scmp.eq.s32.totalorder %s19, 0
    %p58 = por %p56, %p57
    %s60 = sadd.s32 %s59, 1
    %p63 = scmp.eq.s32.totalorder %s13, 1
    %p64 = scmp.ne.s32.totalorder %s59, %s61
    %p65 = scmp.eq.s32.totalorder %s13, 0
    %p66 = por %p64, %p65
    %p67 = scmp.ne.s32.totalorder %s59, %s61
    %p68 = scmp.eq.s32.totalorder %s18, 1
    %p69 = por %p67, %p68
    %p70 = scmp.ne.s32.totalorder %s61, %s62
    %p71 = scmp.eq.s32.totalorder %s18, 0
    %p72 = por %p70, %p71
    %p73 = scmp.ne.s32.totalorder %s61, %s62
    %p74 = scmp.eq.s32.totalorder %s19, 1
    %p75 = por %p73, %p74
    %p77 = scmp.ne.s32.totalorder %s62, %s76
    %p78 = scmp.eq.s32.totalorder %s19, 0
    %p79 = por %p77, %p78
    %s81 = sadd.s32 %s80, 1
    %p84 = scmp.eq.s32.totalorder %s13, 1
    %p85 = scmp.ne.s32.totalorder %s80, %s82
    %p86 = scmp.eq.s32.totalorder %s13, 0
    %p87 = por %p85, %p86
    %p88 = scmp.ne.s32.totalorder %s80, %s82
    %p89 = scmp.eq.s32.totalorder %s18, 1
    %p90 = por %p88, %p89
    %p91 = scmp.ne.s32.totalorder %s82, %s83
    %p92 = scmp.eq.s32.totalorder %s18, 0
    %p93 = por %p91, %p92
    %p94 = scmp.ne.s32.totalorder %s82, %s83
    %p95 = scmp.eq.s32.totalorder %s19, 1
    %p96 = por %p94, %p95
    %p98 = scmp.ne.s32.totalorder %s83, %s97
    %p99 = scmp.eq.s32.totalorder %s19, 0
    %p100 = por %p98, %p99
    %s102 = sadd.s32 %s101, 1
    %p105 = scmp.eq.s32.totalorder %s13, 1
    %p106 = scmp.ne.s32.totalorder %s101, %s103
    %p107 = scmp.eq.s32.totalorder %s13, 0
    %p108 = por %p106, %p107
    %p109 = scmp.ne.s32.totalorder %s101, %s103
    %p110 = scmp.eq.s32.totalorder %s18, 1
    %p111 = por %p109, %p110
    %p112 = scmp.ne.s32.totalorder %s103, %s104
    %p113 = scmp.eq.s32.totalorder %s18, 0
    %p114 = por %p112, %p113
    %p115 = scmp.ne.s32.totalorder %s103, %s104
    %p116 = scmp.eq.s32.totalorder %s19, 1
    %p117 = por %p115, %p116
    %p119 = scmp.ne.s32.totalorder %s104, %s118
    %p120 = scmp.eq.s32.totalorder %s19, 0
    %p121 = por %p119, %p120
    %s123 = sadd.s32 %s122, 1
    %p126 = scmp.eq.s32.totalorder %s13, 1
    %p127 = scmp.ne.s32.totalorder %s122, %s124
    %p128 = scmp.eq.s32.totalorder %s13, 0
    %p129 = por %p127, %p128
    %p130 = scmp.ne.s32.totalorder %s122, %s124
    %p131 = scmp.eq.s32.totalorder %s18, 1
    %p132 = por %p130, %p131
    %p133 = scmp.ne.s32.totalorder %s124, %s125
    %p134 = scmp.eq.s32.totalorder %s18, 0
    %p135 = por %p133, %p134
    %p136 = scmp.ne.s32.totalorder %s124, %s125
    %p137 = scmp.eq.s32.totalorder %s19, 1
    %p138 = por %p136, %p137
    %p140 = scmp.ne.s32.totalorder %s125, %s139
    %p141 = scmp.eq.s32.totalorder %s19, 0
    %p142 = por %p140, %p141
    %s144 = sadd.s32 %s143, 1
    %p147 = scmp.eq.s32.totalorder %s13, 1
    %p148 = scmp.ne.s32.totalorder %s143, %s145
    %p149 = scmp.eq.s32.totalorder %s13, 0
    %p150 = por %p148, %p149
    %p151 = scmp.ne.s32.totalorder %s143, %s145
    %p152 = scmp.eq.s32.totalorder %s18, 1
    %p153 = por %p151, %p152
    %p154 = scmp.ne.s32.totalorder %s145, %s146
    %p155 = scmp.eq.s32.totalorder %s18, 0
    %p156 = por %p154, %p155
    %p157 = scmp.ne.s32.totalorder %s145, %s146
    %p158 = scmp.eq.s32.totalorder %s19, 1
    %p159 = por %p157, %p158
    %p161 = scmp.ne.s32.totalorder %s146, %s160
    %p162 = scmp.eq.s32.totalorder %s19, 0
    %p163 = por %p161, %p162
    %s165 = sadd.s32 %s164, 1
    %p168 = scmp.eq.s32.totalorder %s13, 1
    %p169 = scmp.ne.s32.totalorder %s164, %s166
    %p170 = scmp.eq.s32.totalorder %s13, 0
    %p171 = por %p169, %p170
    %p172 = scmp.ne.s32.totalorder %s164, %s166
    %p173 = scmp.eq.s32.totalorder %s18, 1
    %p174 = por %p172, %p173
    %p175 = scmp.ne.s32.totalorder %s166, %s167
    %p176 = scmp.eq.s32.totalorder %s18, 0
    %p177 = por %p175, %p176
    %p178 = scmp.ne.s32.totalorder %s166, %s167
    %p179 = scmp.eq.s32.totalorder %s19, 1
    %p180 = por %p178, %p179
    %p182 = scmp.ne.s32.totalorder %s167, %s181
    %p183 = scmp.eq.s32.totalorder %s19, 0
    %p184 = por %p182, %p183
    %s185 = ssub.s32 %s20, %s32
    %s186 = ssub.s32 %s21, %s28
    %s187 = sor.u32 %s185, %s186
    %p188 = scmp.eq.s32.totalorder %s187, 0
    %s190 = sadd.s32 %s189, 1
    %s191 = scalar_select %p188, %s189, %s190
    %p194 = pneg %p188
    %p195 = scmp.eq.s32.totalorder %s13, 1
    %p196 = por %p194, %p195
    %p197 = scmp.ne.s32.totalorder %s189, %s192
    %p198 = scmp.eq.s32.totalorder %s13, 0
    %p199 = por %p197, %p198
    %p200 = scmp.ne.s32.totalorder %s189, %s192
    %p201 = scmp.eq.s32.totalorder %s18, 1
    %p202 = por %p200, %p201
    %p203 = scmp.ne.s32.totalorder %s192, %s193
    %p204 = scmp.eq.s32.totalorder %s18, 0
    %p205 = por %p203, %p204
    %p206 = scmp.ne.s32.totalorder %s192, %s193
    %p207 = scmp.eq.s32.totalorder %s19, 1
    %p208 = por %p206, %p207
    %p210 = scmp.ne.s32.totalorder %s193, %s209
    %p211 = scmp.eq.s32.totalorder %s19, 0
    %p212 = por %p210, %p211
    %p213 = scmp.le.s32.totalorder 1, %s13
    %p214 = scmp.lt.s32.totalorder %s13, 3
    %p215 = pnand %p213, %p214
    %p216 = pneg %p215
    // Predicated region
    $region9: #{tpu_custom_call.1} parent=5 // pred_check
      _
    $region10: #{tpu_custom_call.1} parent=5 // pred_check_branch
      %218 = sbr.rel (%p215) target = $region12
    $region11: #{tpu_custom_call.1} parent=5 // pred_region
      %s219 = ssub.s32 %s13, 1
      // Predicated region
      $region13: #{tpu_custom_call.1} parent=11 // pred_check
        %p220 = pneg %p72
      $region14: #{tpu_custom_call.1} parent=11 // pred_check_branch
        %222 = sbr.rel (%p220) target = $region16
      $region15: #{tpu_custom_call.1} parent=11 // pred_region
        _
      $region16: #{tpu_custom_call.1} parent=11 // pred_fallthru
        _
      // Predicated region
      $region17: #{tpu_custom_call.1} parent=11 // pred_check
        %p223 = pneg %p93
      $region18: #{tpu_custom_call.1} parent=11 // pred_check_branch
        %225 = sbr.rel (%p223) target = $region20
      $region19: #{tpu_custom_call.1} parent=11 // pred_region
        _
      $region20: #{tpu_custom_call.1} parent=11 // pred_fallthru
        _
      // Predicated region
      $region21: #{tpu_custom_call.1} parent=11 // pred_check
        %p226 = pneg %p114
      $region22: #{tpu_custom_call.1} parent=11 // pred_check_branch
        %228 = sbr.rel (%p226) target = $region24
      $region23: #{tpu_custom_call.1} parent=11 // pred_region
        _
      $region24: #{tpu_custom_call.1} parent=11 // pred_fallthru
        _
      // Predicated region
      $region25: #{tpu_custom_call.1} parent=11 // pred_check
        %p229 = pneg %p135
      $region26: #{tpu_custom_call.1} parent=11 // pred_check_branch
        %231 = sbr.rel (%p229) target = $region28
      $region27: #{tpu_custom_call.1} parent=11 // pred_region
        _
      $region28: #{tpu_custom_call.1} parent=11 // pred_fallthru
        _
      // Predicated region
      $region29: #{tpu_custom_call.1} parent=11 // pred_check
        %p232 = pneg %p156
      $region30: #{tpu_custom_call.1} parent=11 // pred_check_branch
        %234 = sbr.rel (%p232) target = $region32
      $region31: #{tpu_custom_call.1} parent=11 // pred_region
        _
      $region32: #{tpu_custom_call.1} parent=11 // pred_fallthru
        _
      // Predicated region
      $region33: #{tpu_custom_call.1} parent=11 // pred_check
        %p235 = pneg %p177
      $region34: #{tpu_custom_call.1} parent=11 // pred_check_branch
        %237 = sbr.rel (%p235) target = $region36
      $region35: #{tpu_custom_call.1} parent=11 // pred_region
        _
      $region36: #{tpu_custom_call.1} parent=11 // pred_fallthru
        _
    $region12: #{tpu_custom_call.1} parent=5 // pred_fallthru
      _
    %p238 = scmp.lt.s32.totalorder %s13, 2
    // Predicated region
    $region37: #{tpu_custom_call.1} parent=5 // pred_check
      %p239 = pneg %p238
    $region38: #{tpu_custom_call.1} parent=5 // pred_check_branch
      %241 = sbr.rel (%p239) target = $region40
    $region39: #{tpu_custom_call.1} parent=5 // pred_region
      // Predicated region
      $region41: #{tpu_custom_call.1} parent=39 // pred_check
        %p242 = pneg %p45
      $region42: #{tpu_custom_call.1} parent=39 // pred_check_branch
        %244 = sbr.rel (%p242) target = $region44
      $region43: #{tpu_custom_call.1} parent=39 // pred_region
        %p245 = scmp.lt.s32.totalorder %s20, 1
        %s246 = scalar_select %p245, %s20, 1
        %s247 = smul.addr %s246, 54
        %s248 = smul.addr %s247, 8
        %s249 = scalar_lea.vmem %s0, %s248
      $region44: #{tpu_custom_call.1} parent=39 // pred_fallthru
        _
    $region40: #{tpu_custom_call.1} parent=5 // pred_fallthru
      _
    %p250 = scmp.le.s32.totalorder 1, %s13
    %p251 = scmp.lt.s32.totalorder %s13, 3
    %p252 = pnand %p250, %p251
    %p253 = pneg %p252
    // Predicated region
    $region45: #{tpu_custom_call.1} parent=5 // pred_check
      _
    $region46: #{tpu_custom_call.1} parent=5 // pred_check_branch
      %255 = sbr.rel (%p252) target = $region48
    $region47: #{tpu_custom_call.1} parent=5 // pred_region
      %s256 = ssub.s32 %s13, 1
      %p257 = scmp.lt.s32.totalorder %s22, 1
      %s258 = scalar_select %p257, %s22, 1
      %s259 = smul.addr %s258, 54
      %s260 = smul.addr %s259, 8
      %s261 = scalar_lea.vmem %s0, %s260
      %p262 = pneg %p51
      %p263 = pneg %p48
      %p264 = pneg %p72
      %p265 = pneg %p69
      %p266 = pneg %p93
      %p267 = pneg %p90
      %p268 = pneg %p114
      %p269 = pneg %p111
      %p270 = pneg %p135
      %p271 = pneg %p132
      %p272 = pneg %p156
      %p273 = pneg %p153
      %p274 = pneg %p177
      %p275 = pneg %p174
      %p276 = pneg %p205
      %p277 = pneg %p202
      %s278 = smul.u32 16, %s23
      %p279 = scmp.lt.s32.totalorder %s22, 1
      %s280 = scalar_select %p279, %s22, 1
      %p281 = scmp.lt.s32.totalorder %s278, 15
      %s282 = scalar_select %p281, %s278, 15
      %s283 = smul.addr %s282, 2
      %s284 = smul.addr %s280, 32
      %s285 = sadd.s32 %s283, %s284
      %s286 = smul.addr %s285, 8
      %s287 = scalar_lea.vmem %s7, %s286
      %p288 = scmp.lt.s32.totalorder %s22, 1
      %s289 = scalar_select %p288, %s22, 1
      %s290 = smul.addr %s289, 54
      %s291 = smul.addr %s290, 8
      %s292 = scalar_lea.vmem %s0, %s291
      %s293 = smul.u32 16, %s23
      %p294 = scmp.lt.s32.totalorder %s22, 1
      %s295 = scalar_select %p294, %s22, 1
      %p296 = scmp.lt.s32.totalorder %s293, 15
      %s297 = scalar_select %p296, %s293, 15
      %s298 = smul.addr %s297, 2
      %s299 = smul.addr %s295, 32
      %s300 = sadd.s32 %s298, %s299
      %s301 = smul.addr %s300, 8
      %s302 = scalar_lea.vmem %s7, %s301
      %s303 = smul.u32 16, %s23
      %s304 = smul.u32 %s23, 16
      %s305 = smul.u32 %s304, 24
      %s306 = scalar_lea.vmem %s292, %s305
      %v307 = vld [vmem:[%s306] sm:$0xff]
      %v308 = vld [vmem:[%s306 + $0x8] sm:$0xff]
      %v309 = vld [vmem:[%s306 + $0x10] sm:$0xff]
      %v310 = vld [vmem:[%s306 + $0x18] sm:$0xff]
      %v311 = vld [vmem:[%s306 + $0x20] sm:$0xff]
      %v312 = vld [vmem:[%s306 + $0x28] sm:$0xff]
      %v313 = vld [vmem:[%s306 + $0x30] sm:$0xff]
      %v314 = vld [vmem:[%s306 + $0x38] sm:$0xff]
      %v315 = vld [vmem:[%s306 + $0x40] sm:$0xff]
      %v316 = vld [vmem:[%s306 + $0x48] sm:$0xff]
      %v317 = vld [vmem:[%s306 + $0x50] sm:$0xff]
      %v318 = vld [vmem:[%s306 + $0x58] sm:$0xff]
      %v319 = vld [vmem:[%s306 + $0x60] sm:$0xff]
      %v320 = vld [vmem:[%s306 + $0x68] sm:$0xff]
      %v321 = vld [vmem:[%s306 + $0x70] sm:$0xff]
      %v322 = vld [vmem:[%s306 + $0x78] sm:$0xff]
      %v323 = vld [vmem:[%s306 + $0x80] sm:$0xff]
      %v324 = vld [vmem:[%s306 + $0x88] sm:$0xff]
      %v325 = vld [vmem:[%s306 + $0x90] sm:$0xff]
      %v326 = vld [vmem:[%s306 + $0x98] sm:$0xff]
      %v327 = vld [vmem:[%s306 + $0xa0] sm:$0xff]
      %v328 = vld [vmem:[%s306 + $0xa8] sm:$0xff]
      %v329 = vld [vmem:[%s306 + $0xb0] sm:$0xff]
      %v330 = vld [vmem:[%s306 + $0xb8] sm:$0xff]
      %v331 = vld [vmem:[%s306 + $0xc0] sm:$0xff]
      %v332 = vld [vmem:[%s306 + $0xc8] sm:$0xff]
      %v333 = vld [vmem:[%s306 + $0xd0] sm:$0xff]
      %v334 = vld [vmem:[%s306 + $0xd8] sm:$0xff]
      %v335 = vld [vmem:[%s306 + $0xe0] sm:$0xff]
      %v336 = vld [vmem:[%s306 + $0xe8] sm:$0xff]
      %v337 = vld [vmem:[%s306 + $0xf0] sm:$0xff]
      %v338 = vld [vmem:[%s306 + $0xf8] sm:$0xff]
      %v339 = vld [vmem:[%s306 + $0x100] sm:$0xff]
      %v340 = vld [vmem:[%s306 + $0x108] sm:$0xff]
      %v341 = vld [vmem:[%s306 + $0x110] sm:$0xff]
      %v342 = vld [vmem:[%s306 + $0x118] sm:$0xff]
      %v343 = vld [vmem:[%s306 + $0x120] sm:$0xff]
      %v344 = vld [vmem:[%s306 + $0x128] sm:$0xff]
      %v345 = vld [vmem:[%s306 + $0x130] sm:$0xff]
      %v346 = vld [vmem:[%s306 + $0x138] sm:$0xff]
      %v347 = vld [vmem:[%s306 + $0x140] sm:$0xff]
      %v348 = vld [vmem:[%s306 + $0x148] sm:$0xff]
      %v349 = vld [vmem:[%s306 + $0x150] sm:$0xff]
      %v350 = vld [vmem:[%s306 + $0x158] sm:$0xff]
      %v351 = vld [vmem:[%s306 + $0x160] sm:$0xff]
      %v352 = vld [vmem:[%s306 + $0x168] sm:$0xff]
      %v353 = vld [vmem:[%s306 + $0x170] sm:$0xff]
      %v354 = vld [vmem:[%s306 + $0x178] sm:$0xff]
      %v355 = vld [vmem:[%s306 + $0x180] sm:$0xff]
      %v356 = vld [vmem:[%s306 + $0x188] sm:$0xff]
      %v357 = vld [vmem:[%s306 + $0x190] sm:$0xff]
      %v358 = vld [vmem:[%s306 + $0x198] sm:$0xff]
      %v359 = vld [vmem:[%s306 + $0x1a0] sm:$0xff]
      %v360 = vld [vmem:[%s306 + $0x1a8] sm:$0xff]
      %v361 = vld [vmem:[%s1] sm:$0xf]
      %v362 = vld [vmem:[%s2] sm:$0x1]
      %v364 = vlaneseq
      %v365 = vshrl.u32 %v364, 7
      %v366 = vsub.s32 0, %v365
      %v367 = vrot.slane %v362, %v366
      %vm369 = vcmask 31744
      %v371 = vsel %vm369, %v307, 0
      %v374 = vsel %vm369, %v308, 0
      %v377 = vsel %vm369, %v309, 0
      %v380 = vsel %vm369, %v310, 0
      %v383 = vsel %vm369, %v311, 0
      %v386 = vsel %vm369, %v312, 0
      %v389 = vsel %vm369, %v313, 0
      %v392 = vsel %vm369, %v314, 0
      %v395 = vsel %vm369, %v315, 0
      %v398 = vsel %vm369, %v316, 0
      %v401 = vsel %vm369, %v317, 0
      %v404 = vsel %vm369, %v318, 0
      %v407 = vsel %vm369, %v319, 0
      %v410 = vsel %vm369, %v320, 0
      %v413 = vsel %vm369, %v321, 0
      %v416 = vsel %vm369, %v322, 0
      %v419 = vsel %vm369, %v323, 0
      %v422 = vsel %vm369, %v324, 0
      %v425 = vsel %vm369, %v325, 0
      %v428 = vsel %vm369, %v326, 0
      %v431 = vsel %vm369, %v327, 0
      %v434 = vsel %vm369, %v328, 0
      %v437 = vsel %vm369, %v329, 0
      %v440 = vsel %vm369, %v330, 0
      %v443 = vsel %vm369, %v331, 0
      %v446 = vsel %vm369, %v332, 0
      %v449 = vsel %vm369, %v333, 0
      %v452 = vsel %vm369, %v334, 0
      %v455 = vsel %vm369, %v335, 0
      %v458 = vsel %vm369, %v336, 0
      %v461 = vsel %vm369, %v337, 0
      %v464 = vsel %vm369, %v338, 0
      %v467 = vsel %vm369, %v339, 0
      %v470 = vsel %vm369, %v340, 0
      %v473 = vsel %vm369, %v341, 0
      %v476 = vsel %vm369, %v342, 0
      %v479 = vsel %vm369, %v343, 0
      %v482 = vsel %vm369, %v344, 0
      %v485 = vsel %vm369, %v345, 0
      %v488 = vsel %vm369, %v346, 0
      %v491 = vsel %vm369, %v347, 0
      %v494 = vsel %vm369, %v348, 0
      %v497 = vsel %vm369, %v349, 0
      %v500 = vsel %vm369, %v350, 0
      %v503 = vsel %vm369, %v351, 0
      %v506 = vsel %vm369, %v352, 0
      %v509 = vsel %vm369, %v353, 0
      %v512 = vsel %vm369, %v354, 0
      %v515 = vsel %vm369, %v355, 0
      %v518 = vsel %vm369, %v356, 0
      %v521 = vsel %vm369, %v357, 0
      %v524 = vsel %vm369, %v358, 0
      %v527 = vsel %vm369, %v359, 0
      %v530 = vsel %vm369, %v360, 0
      %vm532 = vcmask 1043456
      %v534 = vsel %vm532, %v361, 0
      %536 = vmatprep.subr.mxu0 0.0
      %537 = vmatpush1.msra.mxu0 %v534
      %538 = vmatprep.subr.mxu0 0.0
      %539 = vmatpush1.msra.mxu0 0.0
      %540 = vmatprep.subr.mxu0 0.0
      %541 = vmatpush1.msra.mxu0 0.0
      %542 = vmatprep.subr.mxu0 0.0
      %543 = vmatpush1.msra.mxu0 0.0
      %544 = vmatprep.subr.mxu0 0.0
      %545 = vmatpush1.msra.mxu0 0.0
      %546 = vmatprep.subr.mxu0 0.0
      %547 = vmatpush1.msra.mxu0 0.0
      %548 = vmatprep.subr.mxu0 0.0
      %549 = vmatpush1.msra.mxu0 0.0
      %550 = vmatprep.subr.mxu0 0.0
      %551 = vmatpush1.msra.mxu0 0.0
      %552 = vmatprep.subr.mxu0 0.0
      %553 = vmatpush1.msra.mxu0 0.0
      %554 = vmatprep.subr.mxu0 0.0
      %555 = vmatpush1.msra.mxu0 0.0
      %556 = vmatprep.subr.mxu0 0.0
      %557 = vmatpush1.msra.mxu0 0.0
      %558 = vmatprep.subr.mxu0 0.0
      %559 = vmatpush1.msra.mxu0 0.0
      %560 = vmatprep.subr.mxu0 0.0
      %561 = vmatpush1.msra.mxu0 0.0
      %562 = vmatprep.subr.mxu0 0.0
      %563 = vmatpush1.msra.mxu0 0.0
      %564 = vmatprep.subr.mxu0 0.0
      %565 = vmatpush1.msra.mxu0 0.0
      %566 = vmatprep.subr.mxu0 0.0
      %567 = vmatpush1.msra.mxu0 0.0
      %568 = vmatprep.subr.mxu0 0.0
      %569 = vmatpush1.msra.mxu0 0.0
      %570 = vmatprep.subr.mxu0 0.0
      %571 = vmatpush1.msra.mxu0 0.0
      %572 = vmatprep.subr.mxu0 0.0
      %573 = vmatpush1.msra.mxu0 0.0
      %574 = vmatprep.subr.mxu0 0.0
      %575 = vmatpush1.msra.mxu0 0.0
      %576 = vmatprep.subr.mxu0 0.0
      %577 = vmatpush1.msra.mxu0 0.0
      %578 = vmatprep.subr.mxu0 0.0
      %579 = vmatpush1.msra.mxu0 0.0
      %580 = vmatprep.subr.mxu0 0.0
      %581 = vmatpush1.msra.mxu0 0.0
      %582 = vmatprep.subr.mxu0 0.0
      %583 = vmatpush1.msra.mxu0 0.0
      %584 = vmatprep.subr.mxu0 0.0
      %585 = vmatpush1.msra.mxu0 0.0
      %586 = vmatprep.subr.mxu0 0.0
      %587 = vmatpush1.msra.mxu0 0.0
      %588 = vmatprep.subr.mxu0 0.0
      %589 = vmatpush1.msra.mxu0 0.0
      %590 = vmatprep.subr.mxu0 0.0
      %591 = vmatpush1.msra.mxu0 0.0
      %592 = vmatprep.subr.mxu0 0.0
      %593 = vmatpush1.msra.mxu0 0.0
      %594 = vmatprep.subr.mxu0 0.0
      %595 = vmatpush1.msra.mxu0 0.0
      %596 = vmatprep.subr.mxu0 0.0
      %597 = vmatpush1.msra.mxu0 0.0
      %598 = vmatprep.subr.mxu0 0.0
      %599 = vmatpush1.msra.mxu0 0.0
      %600 = vmatprep.mubr.f32.mxu0 0.0
      %601 = vmatmul.mubr.f32.gmra.mrb[0].mxu0 %v371
      %v602 = vpop.f32.mrb[0].mxu0
      %v603 = vadd.f32 %v367, %v602
      %v604 = vpop.f32.mrb[0].mxu0
      %605 = vmatprep.mubr.f32.mxu0 0.0
      %606 = vmatmul.mubr.f32.gmra.mrb[0].mxu0 %v374
      %v607 = vpop.f32.mrb[0].mxu0
      %v608 = vadd.f32 %v367, %v607
      %v609 = vpop.f32.mrb[0].mxu0
      %610 = vmatprep.mubr.f32.mxu0 0.0
      %611 = vmatmul.mubr.f32.gmra.mrb[0].mxu0 %v377
      %v612 = vpop.f32.mrb[0].mxu0
      %v613 = vadd.f32 %v367, %v612
      %v614 = vpop.f32.mrb[0].mxu0
      %615 = vmatprep.mubr.f32.mxu0 0.0
      %616 = vmatmul.mubr.f32.gmra.mrb[0].mxu0 %v380
      %v617 = vpop.f32.mrb[0].mxu0
      %v618 = vadd.f32 %v367, %v617
      %v619 = vpop.f32.mrb[0].mxu0
      %620 = vmatprep.mubr.f32.mxu0 0.0
      %621 = vmatmul.mubr.f32.gmra.mrb[0].mxu0 %v383
      %v622 = vpop.f32.mrb[0].mxu0
      %v623 = vadd.f32 %v367, %v622
      %v624 = vpop.f32.mrb[0].mxu0
      %625 = vmatprep.mubr.f32.mxu0 0.0
      %626 = vmatmul.mubr.f32.gmra.mrb[0].mxu0 %v386
      %v627 = vpop.f32.mrb[0].mxu0
      %v628 = vadd.f32 %v367, %v627
      %v629 = vpop.f32.mrb[0].mxu0
      %630 = vmatprep.mubr.f32.mxu0 0.0
      %631 = vmatmul.mubr.f32.gmra.mrb[0].mxu0 %v389
      %v632 = vpop.f32.mrb[0].mxu0
      %v633 = vadd.f32 %v367, %v632
      %v634 = vpop.f32.mrb[0].mxu0
      %635 = vmatprep.mubr.f32.mxu0 0.0
      %636 = vmatmul.mubr.f32.gmra.mrb[0].mxu0 %v392
      %v637 = vpop.f32.mrb[0].mxu0
      %v638 = vadd.f32 %v367, %v637
      %v639 = vpop.f32.mrb[0].mxu0
      %640 = vmatprep.mubr.f32.mxu0 0.0
      %641 = vmatmul.mubr.f32.gmra.mrb[0].mxu0 %v395
      %v642 = vpop.f32.mrb[0].mxu0
      %v643 = vadd.f32 %v367, %v642
      %v644 = vpop.f32.mrb[0].mxu0
      %645 = vmatprep.mubr.f32.mxu0 0.0
      %646 = vmatmul.mubr.f32.gmra.mrb[0].mxu0 %v398
      %v647 = vpop.f32.mrb[0].mxu0
      %v648 = vadd.f32 %v367, %v647
      %v649 = vpop.f32.mrb[0].mxu0
      %650 = vmatprep.mubr.f32.mxu0 0.0
      %651 = vmatmul.mubr.f32.gmra.mrb[0].mxu0 %v401
      %v652 = vpop.f32.mrb[0].mxu0
      %v653 = vadd.f32 %v367, %v652
      %v654 = vpop.f32.mrb[0].mxu0
      %655 = vmatprep.mubr.f32.mxu0 0.0
      %656 = vmatmul.mubr.f32.gmra.mrb[0].mxu0 %v404
      %v657 = vpop.f32.mrb[0].mxu0
      %v658 = vadd.f32 %v367, %v657
      %v659 = vpop.f32.mrb[0].mxu0
      %660 = vmatprep.mubr.f32.mxu0 0.0
      %661 = vmatmul.mubr.f32.gmra.mrb[0].mxu0 %v407
      %v662 = vpop.f32.mrb[0].mxu0
      %v663 = vadd.f32 %v367, %v662
      %v664 = vpop.f32.mrb[0].mxu0
      %665 = vmatprep.mubr.f32.mxu0 0.0
      %666 = vmatmul.mubr.f32.gmra.mrb[0].mxu0 %v410
      %v667 = vpop.f32.mrb[0].mxu0
      %v668 = vadd.f32 %v367, %v667
      %v669 = vpop.f32.mrb[0].mxu0
      %670 = vmatprep.mubr.f32.mxu0 0.0
      %671 = vmatmul.mubr.f32.gmra.mrb[0].mxu0 %v413
      %v672 = vpop.f32.mrb[0].mxu0
      %v673 = vadd.f32 %v367, %v672
      %v674 = vpop.f32.mrb[0].mxu0
      %675 = vmatprep.mubr.f32.mxu0 0.0
      %676 = vmatmul.mubr.f32.gmra.mrb[0].mxu0 %v416
      %v677 = vpop.f32.mrb[0].mxu0
      %v678 = vadd.f32 %v367, %v677
      %v679 = vpop.f32.mrb[0].mxu0
      %680 = vmatprep.mubr.f32.mxu0 0.0
      %681 = vmatmul.mubr.f32.gmra.mrb[0].mxu0 %v419
      %v682 = vpop.f32.mrb[0].mxu0
      %v683 = vadd.f32 %v367, %v682
      %v684 = vpop.f32.mrb[0].mxu0
      %685 = vmatprep.mubr.f32.mxu0 0.0
      %686 = vmatmul.mubr.f32.gmra.mrb[0].mxu0 %v422
      %v687 = vpop.f32.mrb[0].mxu0
      %v688 = vadd.f32 %v367, %v687
      %v689 = vpop.f32.mrb[0].mxu0
      %690 = vmatprep.mubr.f32.mxu0 0.0
      %691 = vmatmul.mubr.f32.gmra.mrb[0].mxu0 %v425
      %v692 = vpop.f32.mrb[0].mxu0
      %v693 = vadd.f32 %v367, %v692
      %v694 = vpop.f32.mrb[0].mxu0
      %695 = vmatprep.mubr.f32.mxu0 0.0
      %696 = vmatmul.mubr.f32.gmra.mrb[0].mxu0 %v428
      %v697 = vpop.f32.mrb[0].mxu0
      %v698 = vadd.f32 %v367, %v697
      %v699 = vpop.f32.mrb[0].mxu0
      %700 = vmatprep.mubr.f32.mxu0 0.0
      %701 = vmatmul.mubr.f32.gmra.mrb[0].mxu0 %v431
      %v702 = vpop.f32.mrb[0].mxu0
      %v703 = vadd.f32 %v367, %v702
      %v704 = vpop.f32.mrb[0].mxu0
      %705 = vmatprep.mubr.f32.mxu0 0.0
      %706 = vmatmul.mubr.f32.gmra.mrb[0].mxu0 %v434
      %v707 = vpop.f32.mrb[0].mxu0
      %v708 = vadd.f32 %v367, %v707
      %v709 = vpop.f32.mrb[0].mxu0
      %710 = vmatprep.mubr.f32.mxu0 0.0
      %711 = vmatmul.mubr.f32.gmra.mrb[0].mxu0 %v437
      %v712 = vpop.f32.mrb[0].mxu0
      %v713 = vadd.f32 %v367, %v712
      %v714 = vpop.f32.mrb[0].mxu0
      %715 = vmatprep.mubr.f32.mxu0 0.0
      %716 = vmatmul.mubr.f32.gmra.mrb[0].mxu0 %v440
      %v717 = vpop.f32.mrb[0].mxu0
      %v718 = vadd.f32 %v367, %v717
      %v719 = vpop.f32.mrb[0].mxu0
      %720 = vmatprep.mubr.f32.mxu0 0.0
      %721 = vmatmul.mubr.f32.gmra.mrb[0].mxu0 %v443
      %v722 = vpop.f32.mrb[0].mxu0
      %v723 = vadd.f32 %v367, %v722
      %v724 = vpop.f32.mrb[0].mxu0
      %725 = vmatprep.mubr.f32.mxu0 0.0
      %726 = vmatmul.mubr.f32.gmra.mrb[0].mxu0 %v446
      %v727 = vpop.f32.mrb[0].mxu0
      %v728 = vadd.f32 %v367, %v727
      %v729 = vpop.f32.mrb[0].mxu0
      %730 = vmatprep.mubr.f32.mxu0 0.0
      %731 = vmatmul.mubr.f32.gmra.mrb[0].mxu0 %v449
      %v732 = vpop.f32.mrb[0].mxu0
      %v733 = vadd.f32 %v367, %v732
      %v734 = vpop.f32.mrb[0].mxu0
      %735 = vmatprep.mubr.f32.mxu0 0.0
      %736 = vmatmul.mubr.f32.gmra.mrb[0].mxu0 %v452
      %v737 = vpop.f32.mrb[0].mxu0
      %v738 = vadd.f32 %v367, %v737
      %v739 = vpop.f32.mrb[0].mxu0
      %740 = vmatprep.mubr.f32.mxu0 0.0
      %741 = vmatmul.mubr.f32.gmra.mrb[0].mxu0 %v455
      %v742 = vpop.f32.mrb[0].mxu0
      %v743 = vadd.f32 %v367, %v742
      %v744 = vpop.f32.mrb[0].mxu0
      %745 = vmatprep.mubr.f32.mxu0 0.0
      %746 = vmatmul.mubr.f32.gmra.mrb[0].mxu0 %v458
      %v747 = vpop.f32.mrb[0].mxu0
      %v748 = vadd.f32 %v367, %v747
      %v749 = vpop.f32.mrb[0].mxu0
      %750 = vmatprep.mubr.f32.mxu0 0.0
      %751 = vmatmul.mubr.f32.gmra.mrb[0].mxu0 %v461
      %v752 = vpop.f32.mrb[0].mxu0
      %v753 = vadd.f32 %v367, %v752
      %v754 = vpop.f32.mrb[0].mxu0
      %755 = vmatprep.mubr.f32.mxu0 0.0
      %756 = vmatmul.mubr.f32.gmra.mrb[0].mxu0 %v464
      %v757 = vpop.f32.mrb[0].mxu0
      %v758 = vadd.f32 %v367, %v757
      %v759 = vpop.f32.mrb[0].mxu0
      %760 = vmatprep.mubr.f32.mxu0 0.0
      %761 = vmatmul.mubr.f32.gmra.mrb[0].mxu0 %v467
      %v762 = vpop.f32.mrb[0].mxu0
      %v763 = vadd.f32 %v367, %v762
      %v764 = vpop.f32.mrb[0].mxu0
      %765 = vmatprep.mubr.f32.mxu0 0.0
      %766 = vmatmul.mubr.f32.gmra.mrb[0].mxu0 %v470
      %v767 = vpop.f32.mrb[0].mxu0
      %v768 = vadd.f32 %v367, %v767
      %v769 = vpop.f32.mrb[0].mxu0
      %770 = vmatprep.mubr.f32.mxu0 0.0
      %771 = vmatmul.mubr.f32.gmra.mrb[0].mxu0 %v473
      %v772 = vpop.f32.mrb[0].mxu0
      %v773 = vadd.f32 %v367, %v772
      %v774 = vpop.f32.mrb[0].mxu0
      %775 = vmatprep.mubr.f32.mxu0 0.0
      %776 = vmatmul.mubr.f32.gmra.mrb[0].mxu0 %v476
      %v777 = vpop.f32.mrb[0].mxu0
      %v778 = vadd.f32 %v367, %v777
      %v779 = vpop.f32.mrb[0].mxu0
      %780 = vmatprep.mubr.f32.mxu0 0.0
      %781 = vmatmul.mubr.f32.gmra.mrb[0].mxu0 %v479
      %v782 = vpop.f32.mrb[0].mxu0
      %v783 = vadd.f32 %v367, %v782
      %v784 = vpop.f32.mrb[0].mxu0
      %785 = vmatprep.mubr.f32.mxu0 0.0
      %786 = vmatmul.mubr.f32.gmra.mrb[0].mxu0 %v482
      %v787 = vpop.f32.mrb[0].mxu0
      %v788 = vadd.f32 %v367, %v787
      %v789 = vpop.f32.mrb[0].mxu0
      %790 = vmatprep.mubr.f32.mxu0 0.0
      %791 = vmatmul.mubr.f32.gmra.mrb[0].mxu0 %v485
      %v792 = vpop.f32.mrb[0].mxu0
      %v793 = vadd.f32 %v367, %v792
      %v794 = vpop.f32.mrb[0].mxu0
      %795 = vmatprep.mubr.f32.mxu0 0.0
      %796 = vmatmul.mubr.f32.gmra.mrb[0].mxu0 %v488
      %v797 = vpop.f32.mrb[0].mxu0
      %v798 = vadd.f32 %v367, %v797
      %v799 = vpop.f32.mrb[0].mxu0
      %800 = vmatprep.mubr.f32.mxu0 0.0
      %801 = vmatmul.mubr.f32.gmra.mrb[0].mxu0 %v491
      %v802 = vpop.f32.mrb[0].mxu0
      %v803 = vadd.f32 %v367, %v802
      %v804 = vpop.f32.mrb[0].mxu0
      %805 = vmatprep.mubr.f32.mxu0 0.0
      %806 = vmatmul.mubr.f32.gmra.mrb[0].mxu0 %v494
      %v807 = vpop.f32.mrb[0].mxu0
      %v808 = vadd.f32 %v367, %v807
      %v809 = vpop.f32.mrb[0].mxu0
      %810 = vmatprep.mubr.f32.mxu0 0.0
      %811 = vmatmul.mubr.f32.gmra.mrb[0].mxu0 %v497
      %v812 = vpop.f32.mrb[0].mxu0
      %v813 = vadd.f32 %v367, %v812
      %v814 = vpop.f32.mrb[0].mxu0
      %815 = vmatprep.mubr.f32.mxu0 0.0
      %816 = vmatmul.mubr.f32.gmra.mrb[0].mxu0 %v500
      %v817 = vpop.f32.mrb[0].mxu0
      %v818 = vadd.f32 %v367, %v817
      %v819 = vpop.f32.mrb[0].mxu0
      %820 = vmatprep.mubr.f32.mxu0 0.0
      %821 = vmatmul.mubr.f32.gmra.mrb[0].mxu0 %v503
      %v822 = vpop.f32.mrb[0].mxu0
      %v823 = vadd.f32 %v367, %v822
      %v824 = vpop.f32.mrb[0].mxu0
      %825 = vmatprep.mubr.f32.mxu0 0.0
      %826 = vmatmul.mubr.f32.gmra.mrb[0].mxu0 %v506
      %v827 = vpop.f32.mrb[0].mxu0
      %v828 = vadd.f32 %v367, %v827
      %v829 = vpop.f32.mrb[0].mxu0
      %830 = vmatprep.mubr.f32.mxu0 0.0
      %831 = vmatmul.mubr.f32.gmra.mrb[0].mxu0 %v509
      %v832 = vpop.f32.mrb[0].mxu0
      %v833 = vadd.f32 %v367, %v832
      %v834 = vpop.f32.mrb[0].mxu0
      %835 = vmatprep.mubr.f32.mxu0 0.0
      %836 = vmatmul.mubr.f32.gmra.mrb[0].mxu0 %v512
      %v837 = vpop.f32.mrb[0].mxu0
      %v838 = vadd.f32 %v367, %v837
      %v839 = vpop.f32.mrb[0].mxu0
      %840 = vmatprep.mubr.f32.mxu0 0.0
      %841 = vmatmul.mubr.f32.gmra.mrb[0].mxu0 %v515
      %v842 = vpop.f32.mrb[0].mxu0
      %v843 = vadd.f32 %v367, %v842
      %v844 = vpop.f32.mrb[0].mxu0
      %845 = vmatprep.mubr.f32.mxu0 0.0
      %846 = vmatmul.mubr.f32.gmra.mrb[0].mxu0 %v518
      %v847 = vpop.f32.mrb[0].mxu0
      %v848 = vadd.f32 %v367, %v847
      %v849 = vpop.f32.mrb[0].mxu0
      %850 = vmatprep.mubr.f32.mxu0 0.0
      %851 = vmatmul.mubr.f32.gmra.mrb[0].mxu0 %v521
      %v852 = vpop.f32.mrb[0].mxu0
      %v853 = vadd.f32 %v367, %v852
      %v854 = vpop.f32.mrb[0].mxu0
      %855 = vmatprep.mubr.f32.mxu0 0.0
      %856 = vmatmul.mubr.f32.gmra.mrb[0].mxu0 %v524
      %v857 = vpop.f32.mrb[0].mxu0
      %v858 = vadd.f32 %v367, %v857
      %v859 = vpop.f32.mrb[0].mxu0
      %860 = vmatprep.mubr.f32.mxu0 0.0
      %861 = vmatmul.mubr.f32.gmra.mrb[0].mxu0 %v527
      %v862 = vpop.f32.mrb[0].mxu0
      %v863 = vadd.f32 %v367, %v862
      %v864 = vpop.f32.mrb[0].mxu0
      %865 = vmatprep.mubr.f32.mxu0 0.0
      %866 = vmatmul.mubr.f32.gmra.mrb[0].mxu0 %v530
      %v867 = vpop.f32.mrb[0].mxu0
      %v868 = vadd.f32 %v367, %v867
      %v869 = vpop.f32.mrb[0].mxu0
      %870 = vdwg.mxu0
      %v871 = vmax.f32 %v603, 0.0
      %v872 = vmax.f32 %v608, 0.0
      %v873 = vmax.f32 %v613, 0.0
      %v874 = vmax.f32 %v618, 0.0
      %v875 = vmax.f32 %v623, 0.0
      %v876 = vmax.f32 %v628, 0.0
      %v877 = vmax.f32 %v633, 0.0
      %v878 = vmax.f32 %v638, 0.0
      %v879 = vmax.f32 %v643, 0.0
      %v880 = vmax.f32 %v648, 0.0
      %v881 = vmax.f32 %v653, 0.0
      %v882 = vmax.f32 %v658, 0.0
      %v883 = vmax.f32 %v663, 0.0
      %v884 = vmax.f32 %v668, 0.0
      %v885 = vmax.f32 %v673, 0.0
      %v886 = vmax.f32 %v678, 0.0
      %v887 = vmax.f32 %v683, 0.0
      %v888 = vmax.f32 %v688, 0.0
      %v889 = vmax.f32 %v693, 0.0
      %v890 = vmax.f32 %v698, 0.0
      %v891 = vmax.f32 %v703, 0.0
      %v892 = vmax.f32 %v708, 0.0
      %v893 = vmax.f32 %v713, 0.0
      %v894 = vmax.f32 %v718, 0.0
      %v895 = vmax.f32 %v723, 0.0
      %v896 = vmax.f32 %v728, 0.0
      %v897 = vmax.f32 %v733, 0.0
      %v898 = vmax.f32 %v738, 0.0
      %v899 = vmax.f32 %v743, 0.0
      %v900 = vmax.f32 %v748, 0.0
      %v901 = vmax.f32 %v753, 0.0
      %v902 = vmax.f32 %v758, 0.0
      %v903 = vmax.f32 %v763, 0.0
      %v904 = vmax.f32 %v768, 0.0
      %v905 = vmax.f32 %v773, 0.0
      %v906 = vmax.f32 %v778, 0.0
      %v907 = vmax.f32 %v783, 0.0
      %v908 = vmax.f32 %v788, 0.0
      %v909 = vmax.f32 %v793, 0.0
      %v910 = vmax.f32 %v798, 0.0
      %v911 = vmax.f32 %v803, 0.0
      %v912 = vmax.f32 %v808, 0.0
      %v913 = vmax.f32 %v813, 0.0
      %v914 = vmax.f32 %v818, 0.0
      %v915 = vmax.f32 %v823, 0.0
      %v916 = vmax.f32 %v828, 0.0
      %v917 = vmax.f32 %v833, 0.0
      %v918 = vmax.f32 %v838, 0.0
      %v919 = vmax.f32 %v843, 0.0
      %v920 = vmax.f32 %v848, 0.0
      %v921 = vmax.f32 %v853, 0.0
      %v922 = vmax.f32 %v858, 0.0
      %v923 = vmax.f32 %v863, 0.0
      %v924 = vmax.f32 %v868, 0.0
      %v925 = vmin.f32 %v871, 6.0
      %v926 = vmin.f32 %v872, 6.0
      %v927 = vmin.f32 %v873, 6.0
      %v928 = vmin.f32 %v874, 6.0
      %v929 = vmin.f32 %v875, 6.0
      %v930 = vmin.f32 %v876, 6.0
      %v931 = vmin.f32 %v877, 6.0
      %v932 = vmin.f32 %v878, 6.0
      %v933 = vmin.f32 %v879, 6.0
      %v934 = vmin.f32 %v880, 6.0
      %v935 = vmin.f32 %v881, 6.0
      %v936 = vmin.f32 %v882, 6.0
      %v937 = vmin.f32 %v883, 6.0
      %v938 = vmin.f32 %v884, 6.0
      %v939 = vmin.f32 %v885, 6.0
      %v940 = vmin.f32 %v886, 6.0
      %v941 = vmin.f32 %v887, 6.0
      %v942 = vmin.f32 %v888, 6.0
      %v943 = vmin.f32 %v889, 6.0
      %v944 = vmin.f32 %v890, 6.0
      %v945 = vmin.f32 %v891, 6.0
      %v946 = vmin.f32 %v892, 6.0
      %v947 = vmin.f32 %v893, 6.0
      %v948 = vmin.f32 %v894, 6.0
      %v949 = vmin.f32 %v895, 6.0
      %v950 = vmin.f32 %v896, 6.0
      %v951 = vmin.f32 %v897, 6.0
      %v952 = vmin.f32 %v898, 6.0
      %v953 = vmin.f32 %v899, 6.0
      %v954 = vmin.f32 %v900, 6.0
      %v955 = vmin.f32 %v901, 6.0
      %v956 = vmin.f32 %v902, 6.0
      %v957 = vmin.f32 %v903, 6.0
      %v958 = vmin.f32 %v904, 6.0
      %v959 = vmin.f32 %v905, 6.0
      %v960 = vmin.f32 %v906, 6.0
      %v961 = vmin.f32 %v907, 6.0
      %v962 = vmin.f32 %v908, 6.0
      %v963 = vmin.f32 %v909, 6.0
      %v964 = vmin.f32 %v910, 6.0
      %v965 = vmin.f32 %v911, 6.0
      %v966 = vmin.f32 %v912, 6.0
      %v967 = vmin.f32 %v913, 6.0
      %v968 = vmin.f32 %v914, 6.0
      %v969 = vmin.f32 %v915, 6.0
      %v970 = vmin.f32 %v916, 6.0
      %v971 = vmin.f32 %v917, 6.0
      %v972 = vmin.f32 %v918, 6.0
      %v973 = vmin.f32 %v919, 6.0
      %v974 = vmin.f32 %v920, 6.0
      %v975 = vmin.f32 %v921, 6.0
      %v976 = vmin.f32 %v922, 6.0
      %v977 = vmin.f32 %v923, 6.0
      %v978 = vmin.f32 %v924, 6.0
      %vm979 = vcmask 130048
      %980 = vst.msk [vmem:[#allocation2] sm:$0xff] %vm979, %v925
      %981 = vst.msk [vmem:[#allocation2 + $0x8] sm:$0xff] %vm979, %v926
      %982 = vst.msk [vmem:[#allocation2 + $0x10] sm:$0xff] %vm979, %v927
      %983 = vst.msk [vmem:[#allocation2 + $0x18] sm:$0xff] %vm979, %v928
      %984 = vst.msk [vmem:[#allocation2 + $0x20] sm:$0xff] %vm979, %v929
      %985 = vst.msk [vmem:[#allocation2 + $0x28] sm:$0xff] %vm979, %v930
      %986 = vst.msk [vmem:[#allocation2 + $0x30] sm:$0xff] %vm979, %v931
      %987 = vst.msk [vmem:[#allocation2 + $0x38] sm:$0xff] %vm979, %v932
      %988 = vst.msk [vmem:[#allocation2 + $0x40] sm:$0xff] %vm979, %v933
      %989 = vst.msk [vmem:[#allocation2 + $0x48] sm:$0xff] %vm979, %v934
      %990 = vst.msk [vmem:[#allocation2 + $0x50] sm:$0xff] %vm979, %v935
      %991 = vst.msk [vmem:[#allocation2 + $0x58] sm:$0xff] %vm979, %v936
      %992 = vst.msk [vmem:[#allocation2 + $0x60] sm:$0xff] %vm979, %v937
      %993 = vst.msk [vmem:[#allocation2 + $0x68] sm:$0xff] %vm979, %v938
      %994 = vst.msk [vmem:[#allocation2 + $0x70] sm:$0xff] %vm979, %v939
      %995 = vst.msk [vmem:[#allocation2 + $0x78] sm:$0xff] %vm979, %v940
      %996 = vst.msk [vmem:[#allocation2 + $0x80] sm:$0xff] %vm979, %v941
      %997 = vst.msk [vmem:[#allocation2 + $0x88] sm:$0xff] %vm979, %v942
      %998 = vst.msk [vmem:[#allocation2 + $0x90] sm:$0xff] %vm979, %v943
      %999 = vst.msk [vmem:[#allocation2 + $0x98] sm:$0xff] %vm979, %v944
      %1000 = vst.msk [vmem:[#allocation2 + $0xa0] sm:$0xff] %vm979, %v945
      %1001 = vst.msk [vmem:[#allocation2 + $0xa8] sm:$0xff] %vm979, %v946
      %1002 = vst.msk [vmem:[#allocation2 + $0xb0] sm:$0xff] %vm979, %v947
      %1003 = vst.msk [vmem:[#allocation2 + $0xb8] sm:$0xff] %vm979, %v948
      %1004 = vst.msk [vmem:[#allocation2 + $0xc0] sm:$0xff] %vm979, %v949
      %1005 = vst.msk [vmem:[#allocation2 + $0xc8] sm:$0xff] %vm979, %v950
      %1006 = vst.msk [vmem:[#allocation2 + $0xd0] sm:$0xff] %vm979, %v951
      %1007 = vst.msk [vmem:[#allocation2 + $0xd8] sm:$0xff] %vm979, %v952
      %1008 = vst.msk [vmem:[#allocation2 + $0xe0] sm:$0xff] %vm979, %v953
      %1009 = vst.msk [vmem:[#allocation2 + $0xe8] sm:$0xff] %vm979, %v954
      %1010 = vst.msk [vmem:[#allocation2 + $0xf0] sm:$0xff] %vm979, %v955
      %1011 = vst.msk [vmem:[#allocation2 + $0xf8] sm:$0xff] %vm979, %v956
      %1012 = vst.msk [vmem:[#allocation2 + $0x100] sm:$0xff] %vm979, %v957
      %1013 = vst.msk [vmem:[#allocation2 + $0x108] sm:$0xff] %vm979, %v958
      %1014 = vst.msk [vmem:[#allocation2 + $0x110] sm:$0xff] %vm979, %v959
      %1015 = vst.msk [vmem:[#allocation2 + $0x118] sm:$0xff] %vm979, %v960
      %1016 = vst.msk [vmem:[#allocation2 + $0x120] sm:$0xff] %vm979, %v961
      %1017 = vst.msk [vmem:[#allocation2 + $0x128] sm:$0xff] %vm979, %v962
      %1018 = vst.msk [vmem:[#allocation2 + $0x130] sm:$0xff] %vm979, %v963
      %1019 = vst.msk [vmem:[#allocation2 + $0x138] sm:$0xff] %vm979, %v964
      %1020 = vst.msk [vmem:[#allocation2 + $0x140] sm:$0xff] %vm979, %v965
      %1021 = vst.msk [vmem:[#allocation2 + $0x148] sm:$0xff] %vm979, %v966
      %1022 = vst.msk [vmem:[#allocation2 + $0x150] sm:$0xff] %vm979, %v967
      %1023 = vst.msk [vmem:[#allocation2 + $0x158] sm:$0xff] %vm979, %v968
      %1024 = vst.msk [vmem:[#allocation2 + $0x160] sm:$0xff] %vm979, %v969
      %1025 = vst.msk [vmem:[#allocation2 + $0x168] sm:$0xff] %vm979, %v970
      %1026 = vst.msk [vmem:[#allocation2 + $0x170] sm:$0xff] %vm979, %v971
      %1027 = vst.msk [vmem:[#allocation2 + $0x178] sm:$0xff] %vm979, %v972
      %1028 = vst.msk [vmem:[#allocation2 + $0x180] sm:$0xff] %vm979, %v973
      %1029 = vst.msk [vmem:[#allocation2 + $0x188] sm:$0xff] %vm979, %v974
      %1030 = vst.msk [vmem:[#allocation2 + $0x190] sm:$0xff] %vm979, %v975
      %1031 = vst.msk [vmem:[#allocation2 + $0x198] sm:$0xff] %vm979, %v976
      %1032 = vst.msk [vmem:[#allocation2 + $0x1a0] sm:$0xff] %vm979, %v977
      %1033 = vst.msk [vmem:[#allocation2 + $0x1a8] sm:$0xff] %vm979, %v978
      %vm1034 = vcmask 122880
      %1035 = vst.msk [vmem:[#allocation2] sm:$0x1] %vm1034, 0.0
      %1036 = vst.msk [vmem:[#allocation2 + $0x18] sm:$0x1] %vm1034, 0.0
      %1037 = vst.msk [vmem:[#allocation2 + $0x30] sm:$0x1] %vm1034, 0.0
      %1038 = vst.msk [vmem:[#allocation2 + $0x48] sm:$0x1] %vm1034, 0.0
      %1039 = vst.msk [vmem:[#allocation2 + $0x60] sm:$0x1] %vm1034, 0.0
      %1040 = vst.msk [vmem:[#allocation2 + $0x78] sm:$0x1] %vm1034, 0.0
      %1041 = vst.msk [vmem:[#allocation2 + $0x90] sm:$0x1] %vm1034, 0.0
      %1042 = vst.msk [vmem:[#allocation2 + $0xa8] sm:$0x1] %vm1034, 0.0
      %1043 = vst.msk [vmem:[#allocation2 + $0xc0] sm:$0x1] %vm1034, 0.0
      %1044 = vst.msk [vmem:[#allocation2 + $0xd8] sm:$0x1] %vm1034, 0.0
      %1045 = vst.msk [vmem:[#allocation2 + $0xf0] sm:$0x1] %vm1034, 0.0
      %1046 = vst.msk [vmem:[#allocation2 + $0x108] sm:$0x1] %vm1034, 0.0
      %1047 = vst.msk [vmem:[#allocation2 + $0x120] sm:$0x1] %vm1034, 0.0
      %1048 = vst.msk [vmem:[#allocation2 + $0x138] sm:$0x1] %vm1034, 0.0
      %1049 = vst.msk [vmem:[#allocation2 + $0x150] sm:$0x1] %vm1034, 0.0
      %1050 = vst.msk [vmem:[#allocation2 + $0x168] sm:$0x1] %vm1034, 0.0
      %1051 = vst.msk [vmem:[#allocation2 + $0x180] sm:$0x1] %vm1034, 0.0
      %1052 = vst.msk [vmem:[#allocation2 + $0x198] sm:$0x1] %vm1034, 0.0
      %1053 = vst.msk [vmem:[#allocation2 + $0x11] sm:$0x1] %vm1034, 0.0
      %1054 = vst.msk [vmem:[#allocation2 + $0x29] sm:$0x1] %vm1034, 0.0
      %1055 = vst.msk [vmem:[#allocation2 + $0x41] sm:$0x1] %vm1034, 0.0
      %1056 = vst.msk [vmem:[#allocation2 + $0x59] sm:$0x1] %vm1034, 0.0
      %1057 = vst.msk [vmem:[#allocation2 + $0x71] sm:$0x1] %vm1034, 0.0
      %1058 = vst.msk [vmem:[#allocation2 + $0x89] sm:$0x1] %vm1034, 0.0
      %1059 = vst.msk [vmem:[#allocation2 + $0xa1] sm:$0x1] %vm1034, 0.0
      %1060 = vst.msk [vmem:[#allocation2 + $0xb9] sm:$0x1] %vm1034, 0.0
      %1061 = vst.msk [vmem:[#allocation2 + $0xd1] sm:$0x1] %vm1034, 0.0
      %1062 = vst.msk [vmem:[#allocation2 + $0xe9] sm:$0x1] %vm1034, 0.0
      %1063 = vst.msk [vmem:[#allocation2 + $0x101] sm:$0x1] %vm1034, 0.0
      %1064 = vst.msk [vmem:[#allocation2 + $0x119] sm:$0x1] %vm1034, 0.0
      %1065 = vst.msk [vmem:[#allocation2 + $0x131] sm:$0x1] %vm1034, 0.0
      %1066 = vst.msk [vmem:[#allocation2 + $0x149] sm:$0x1] %vm1034, 0.0
      %1067 = vst.msk [vmem:[#allocation2 + $0x161] sm:$0x1] %vm1034, 0.0
      %1068 = vst.msk [vmem:[#allocation2 + $0x179] sm:$0x1] %vm1034, 0.0
      %1069 = vst.msk [vmem:[#allocation2 + $0x191] sm:$0x1] %vm1034, 0.0
      %1070 = vst.msk [vmem:[#allocation2 + $0x1a9] sm:$0x1] %vm1034, 0.0
      %1071 = vst.msk [vmem:[#allocation2] sm:$0xff] %vm979, 0.0
      %1072 = vst.msk [vmem:[#allocation2 + $0x8] sm:$0xff] %vm979, 0.0
      %1073 = vst.msk [vmem:[#allocation2 + $0x10] sm:$0xff] %vm979, 0.0
      %s1074 = scalar_lea.vmem [#allocation2], 408
      %1075 = vst.msk [vmem:[%s1074] sm:$0xff] %vm979, 0.0
      %1076 = vst.msk [vmem:[%s1074 + $0x8] sm:$0xff] %vm979, 0.0
      %1077 = vst.msk [vmem:[%s1074 + $0x10] sm:$0xff] %vm979, 0.0
      %v1078 = vld [vmem:[%s3] sm:$0x1]
      %v1079 = vld [vmem:[%s3 + $0x1] sm:$0x1]
      %v1080 = vld [vmem:[%s3 + $0x2] sm:$0x1]
      %v1081 = vld [vmem:[%s3 + $0x3] sm:$0x1]
      %v1082 = vld [vmem:[%s3 + $0x4] sm:$0x1]
      %v1083 = vld [vmem:[%s3 + $0x5] sm:$0x1]
      %v1084 = vld [vmem:[%s3 + $0x6] sm:$0x1]
      %v1085 = vld [vmem:[%s3 + $0x7] sm:$0x1]
      %v1086 = vld [vmem:[%s3 + $0x8] sm:$0x1]
      %v1087 = vld [vmem:[%s4] sm:$0x1]
      %v1088 = vld [vmem:[#allocation2] sm:$0xff]
      %v1089 = vld [vmem:[#allocation2 + $0x8] sm:$0xff]
      %v1090 = vld [vmem:[#allocation2 + $0x10] sm:$0xff]
      %v1091 = vlaneseq
      %v1092 = vshrl.u32 %v1091, 7
      %v1093 = vsub.s32 0, %v1092
      %v1094 = vrot.slane %v1078, %v1093
      %v1095 = vmul.f32 %v1088, %v1094
      %v1096 = vmul.f32 %v1089, %v1094
      %v1097 = vlaneseq
      %v1098 = vshrl.u32 %v1097, 7
      %v1099 = vsub.s32 0, %v1098
      %v1100 = vrot.slane %v1079, %v1099
      %v1101 = vmul.f32 %v1088, %v1100
      %v1102 = vmul.f32 %v1089, %v1100
      %v1103 = vmul.f32 %v1090, %v1100
      %vm1107 = vcmask 1046528
      %v1108 = vrot.slane %v1101, 1
      %v1109 = vrot.slane %v1102, 1
      %v1110 = vsel %vm1107, %v1108, %v1109
      %v1111 = vrot.slane %v1103, 1
      %v1112 = vsel %vm1107, %v1109, %v1111
      %v1115 = vadd.f32 %v1095, %v1110
      %v1116 = vadd.f32 %v1096, %v1112
      %v1117 = vlaneseq
      %v1118 = vshrl.u32 %v1117, 7
      %v1119 = vsub.s32 0, %v1118
      %v1120 = vrot.slane %v1080, %v1119
      %v1121 = vmul.f32 %v1088, %v1120
      %v1122 = vmul.f32 %v1089, %v1120
      %v1123 = vmul.f32 %v1090, %v1120
      %vm1127 = vcmask 1045504
      %v1128 = vrot.slane %v1121, 2
      %v1129 = vrot.slane %v1122, 2
      %v1130 = vsel %vm1127, %v1128, %v1129
      %v1131 = vrot.slane %v1123, 2
      %v1132 = vsel %vm1127, %v1129, %v1131
      %v1135 = vadd.f32 %v1115, %v1130
      %v1136 = vadd.f32 %v1116, %v1132
      %s1137 = scalar_lea.vmem [#allocation2], 24
      %v1138 = vld [vmem:[%s1137] sm:$0xff]
      %v1139 = vld [vmem:[%s1137 + $0x8] sm:$0xff]
      %v1140 = vld [vmem:[%s1137 + $0x10] sm:$0xff]
      %v1141 = vlaneseq
      %v1142 = vshrl.u32 %v1141, 7
      %v1143 = vsub.s32 0, %v1142
      %v1144 = vrot.slane %v1081, %v1143
      %v1145 = vmul.f32 %v1138, %v1144
      %v1146 = vmul.f32 %v1139, %v1144
      %v1147 = vadd.f32 %v1135, %v1145
      %v1148 = vadd.f32 %v1136, %v1146
      %v1149 = vlaneseq
      %v1150 = vshrl.u32 %v1149, 7
      %v1151 = vsub.s32 0, %v1150
      %v1152 = vrot.slane %v1082, %v1151
      %v1153 = vmul.f32 %v1138, %v1152
      %v1154 = vmul.f32 %v1139, %v1152
      %v1155 = vmul.f32 %v1140, %v1152
      %v1159 = vrot.slane %v1153, 1
      %v1160 = vrot.slane %v1154, 1
      %v1161 = vsel %vm1107, %v1159, %v1160
      %v1162 = vrot.slane %v1155, 1
      %v1163 = vsel %vm1107, %v1160, %v1162
      %v1166 = vadd.f32 %v1147, %v1161
      %v1167 = vadd.f32 %v1148, %v1163
      %v1168 = vlaneseq
      %v1169 = vshrl.u32 %v1168, 7
      %v1170 = vsub.s32 0, %v1169
      %v1171 = vrot.slane %v1083, %v1170
      %v1172 = vmul.f32 %v1138, %v1171
      %v1173 = vmul.f32 %v1139, %v1171
      %v1174 = vmul.f32 %v1140, %v1171
      %v1178 = vrot.slane %v1172, 2
      %v1179 = vrot.slane %v1173, 2
      %v1180 = vsel %vm1127, %v1178, %v1179
      %v1181 = vrot.slane %v1174, 2
      %v1182 = vsel %vm1127, %v1179, %v1181
      %v1185 = vadd.f32 %v1166, %v1180
      %v1186 = vadd.f32 %v1167, %v1182
      %s1187 = scalar_lea.vmem [#allocation2], 48
      %v1188 = vld [vmem:[%s1187] sm:$0xff]
      %v1189 = vld [vmem:[%s1187 + $0x8] sm:$0xff]
      %v1190 = vld [vmem:[%s1187 + $0x10] sm:$0xff]
      %v1191 = vlaneseq
      %v1192 = vshrl.u32 %v1191, 7
      %v1193 = vsub.s32 0, %v1192
      %v1194 = vrot.slane %v1084, %v1193
      %v1195 = vmul.f32 %v1188, %v1194
      %v1196 = vmul.f32 %v1189, %v1194
      %v1197 = vadd.f32 %v1185, %v1195
      %v1198 = vadd.f32 %v1186, %v1196
      %v1199 = vlaneseq
      %v1200 = vshrl.u32 %v1199, 7
      %v1201 = vsub.s32 0, %v1200
      %v1202 = vrot.slane %v1085, %v1201
      %v1203 = vmul.f32 %v1188, %v1202
      %v1204 = vmul.f32 %v1189, %v1202
      %v1205 = vmul.f32 %v1190, %v1202
      %v1209 = vrot.slane %v1203, 1
      %v1210 = vrot.slane %v1204, 1
      %v1211 = vsel %vm1107, %v1209, %v1210
      %v1212 = vrot.slane %v1205, 1
      %v1213 = vsel %vm1107, %v1210, %v1212
      %v1216 = vadd.f32 %v1197, %v1211
      %v1217 = vadd.f32 %v1198, %v1213
      %v1218 = vlaneseq
      %v1219 = vshrl.u32 %v1218, 7
      %v1220 = vsub.s32 0, %v1219
      %v1221 = vrot.slane %v1086, %v1220
      %v1222 = vmul.f32 %v1188, %v1221
      %v1223 = vmul.f32 %v1189, %v1221
      %v1224 = vmul.f32 %v1190, %v1221
      %v1228 = vrot.slane %v1222, 2
      %v1229 = vrot.slane %v1223, 2
      %v1230 = vsel %vm1127, %v1228, %v1229
      %v1231 = vrot.slane %v1224, 2
      %v1232 = vsel %vm1127, %v1229, %v1231
      %v1235 = vadd.f32 %v1216, %v1230
      %v1236 = vadd.f32 %v1217, %v1232
      %v1238 = vlaneseq
      %v1239 = vshrl.u32 %v1238, 7
      %v1240 = vsub.s32 0, %v1239
      %v1241 = vrot.slane %v1087, %v1240
      %v1243 = vadd.f32 %v1235, %v1241
      %v1244 = vadd.f32 %v1236, %v1241
      %v1245 = vmax.f32 %v1243, 0.0
      %v1246 = vmax.f32 %v1244, 0.0
      %v1247 = vmin.f32 %v1245, 6.0
      %v1248 = vmin.f32 %v1246, 6.0
      %1249 = vst.msk [vmem:[#allocation3] sm:$0xff] %vm979, %v1247
      %1250 = vst.msk [vmem:[#allocation3 + $0x8] sm:$0xff] %vm979, %v1248
      %v1251 = vld [vmem:[%s1137] sm:$0xff]
      %v1252 = vld [vmem:[%s1137 + $0x8] sm:$0xff]
      %v1253 = vld [vmem:[%s1137 + $0x10] sm:$0xff]
      %v1254 = vmul.f32 %v1251, %v1094
      %v1255 = vmul.f32 %v1252, %v1094
      %v1256 = vmul.f32 %v1251, %v1100
      %v1257 = vmul.f32 %v1252, %v1100
      %v1258 = vmul.f32 %v1253, %v1100
      %v1262 = vrot.slane %v1256, 1
      %v1263 = vrot.slane %v1257, 1
      %v1264 = vsel %vm1107, %v1262, %v1263
      %v1265 = vrot.slane %v1258, 1
      %v1266 = vsel %vm1107, %v1263, %v1265
      %v1269 = vadd.f32 %v1254, %v1264
      %v1270 = vadd.f32 %v1255, %v1266
      %v1271 = vmul.f32 %v1251, %v1120
      %v1272 = vmul.f32 %v1252, %v1120
      %v1273 = vmul.f32 %v1253, %v1120
      %v1277 = vrot.slane %v1271, 2
      %v1278 = vrot.slane %v1272, 2
      %v1279 = vsel %vm1127, %v1277, %v1278
      %v1280 = vrot.slane %v1273, 2
      %v1281 = vsel %vm1127, %v1278, %v1280
      %v1284 = vadd.f32 %v1269, %v1279
      %v1285 = vadd.f32 %v1270, %v1281
      %v1286 = vld [vmem:[%s1187] sm:$0xff]
      %v1287 = vld [vmem:[%s1187 + $0x8] sm:$0xff]
      %v1288 = vld [vmem:[%s1187 + $0x10] sm:$0xff]
      %v1289 = vmul.f32 %v1286, %v1144
      %v1290 = vmul.f32 %v1287, %v1144
      %v1291 = vadd.f32 %v1284, %v1289
      %v1292 = vadd.f32 %v1285, %v1290
      %v1293 = vmul.f32 %v1286, %v1152
      %v1294 = vmul.f32 %v1287, %v1152
      %v1295 = vmul.f32 %v1288, %v1152
      %v1299 = vrot.slane %v1293, 1
      %v1300 = vrot.slane %v1294, 1
      %v1301 = vsel %vm1107, %v1299, %v1300
      %v1302 = vrot.slane %v1295, 1
      %v1303 = vsel %vm1107, %v1300, %v1302
      %v1306 = vadd.f32 %v1291, %v1301
      %v1307 = vadd.f32 %v1292, %v1303
      %v1308 = vmul.f32 %v1286, %v1171
      %v1309 = vmul.f32 %v1287, %v1171
      %v1310 = vmul.f32 %v1288, %v1171
      %v1314 = vrot.slane %v1308, 2
      %v1315 = vrot.slane %v1309, 2
      %v1316 = vsel %vm1127, %v1314, %v1315
      %v1317 = vrot.slane %v1310, 2
      %v1318 = vsel %vm1127, %v1315, %v1317
      %v1321 = vadd.f32 %v1306, %v1316
      %v1322 = vadd.f32 %v1307, %v1318
      %s1323 = scalar_lea.vmem [#allocation2], 72
      %v1324 = vld [vmem:[%s1323] sm:$0xff]
      %v1325 = vld [vmem:[%s1323 + $0x8] sm:$0xff]
      %v1326 = vld [vmem:[%s1323 + $0x10] sm:$0xff]
      %v1327 = vmul.f32 %v1324, %v1194
      %v1328 = vmul.f32 %v1325, %v1194
      %v1329 = vadd.f32 %v1321, %v1327
      %v1330 = vadd.f32 %v1322, %v1328
      %v1331 = vmul.f32 %v1324, %v1202
      %v1332 = vmul.f32 %v1325, %v1202
      %v1333 = vmul.f32 %v1326, %v1202
      %v1337 = vrot.slane %v1331, 1
      %v1338 = vrot.slane %v1332, 1
      %v1339 = vsel %vm1107, %v1337, %v1338
      %v1340 = vrot.slane %v1333, 1
      %v1341 = vsel %vm1107, %v1338, %v1340
      %v1344 = vadd.f32 %v1329, %v1339
      %v1345 = vadd.f32 %v1330, %v1341
      %v1346 = vmul.f32 %v1324, %v1221
      %v1347 = vmul.f32 %v1325, %v1221
      %v1348 = vmul.f32 %v1326, %v1221
      %v1352 = vrot.slane %v1346, 2
      %v1353 = vrot.slane %v1347, 2
      %v1354 = vsel %vm1127, %v1352, %v1353
      %v1355 = vrot.slane %v1348, 2
      %v1356 = vsel %vm1127, %v1353, %v1355
      %v1359 = vadd.f32 %v1344, %v1354
      %v1360 = vadd.f32 %v1345, %v1356
      %v1361 = vadd.f32 %v1359, %v1241
      %v1362 = vadd.f32 %v1360, %v1241
      %v1363 = vmax.f32 %v1361, 0.0
      %v1364 = vmax.f32 %v1362, 0.0
      %v1365 = vmin.f32 %v1363, 6.0
      %v1366 = vmin.f32 %v1364, 6.0
      %1367 = vst.msk [vmem:[#allocation3 + $0x10] sm:$0xff] %vm979, %v1365
      %1368 = vst.msk [vmem:[#allocation3 + $0x18] sm:$0xff] %vm979, %v1366
      %v1369 = vld [vmem:[%s1187] sm:$0xff]
      %v1370 = vld [vmem:[%s1187 + $0x8] sm:$0xff]
      %v1371 = vld [vmem:[%s1187 + $0x10] sm:$0xff]
      %v1372 = vmul.f32 %v1369, %v1094
      %v1373 = vmul.f32 %v1370, %v1094
      %v1374 = vmul.f32 %v1369, %v1100
      %v1375 = vmul.f32 %v1370, %v1100
      %v1376 = vmul.f32 %v1371, %v1100
      %v1380 = vrot.slane %v1374, 1
      %v1381 = vrot.slane %v1375, 1
      %v1382 = vsel %vm1107, %v1380, %v1381
      %v1383 = vrot.slane %v1376, 1
      %v1384 = vsel %vm1107, %v1381, %v1383
      %v1387 = vadd.f32 %v1372, %v1382
      %v1388 = vadd.f32 %v1373, %v1384
      %v1389 = vmul.f32 %v1369, %v1120
      %v1390 = vmul.f32 %v1370, %v1120
      %v1391 = vmul.f32 %v1371, %v1120
      %v1395 = vrot.slane %v1389, 2
      %v1396 = vrot.slane %v1390, 2
      %v1397 = vsel %vm1127, %v1395, %v1396
      %v1398 = vrot.slane %v1391, 2
      %v1399 = vsel %vm1127, %v1396, %v1398
      %v1402 = vadd.f32 %v1387, %v1397
      %v1403 = vadd.f32 %v1388, %v1399
      %v1404 = vld [vmem:[%s1323] sm:$0xff]
      %v1405 = vld [vmem:[%s1323 + $0x8] sm:$0xff]
      %v1406 = vld [vmem:[%s1323 + $0x10] sm:$0xff]
      %v1407 = vmul.f32 %v1404, %v1144
      %v1408 = vmul.f32 %v1405, %v1144
      %v1409 = vadd.f32 %v1402, %v1407
      %v1410 = vadd.f32 %v1403, %v1408
      %v1411 = vmul.f32 %v1404, %v1152
      %v1412 = vmul.f32 %v1405, %v1152
      %v1413 = vmul.f32 %v1406, %v1152
      %v1417 = vrot.slane %v1411, 1
      %v1418 = vrot.slane %v1412, 1
      %v1419 = vsel %vm1107, %v1417, %v1418
      %v1420 = vrot.slane %v1413, 1
      %v1421 = vsel %vm1107, %v1418, %v1420
      %v1424 = vadd.f32 %v1409, %v1419
      %v1425 = vadd.f32 %v1410, %v1421
      %v1426 = vmul.f32 %v1404, %v1171
      %v1427 = vmul.f32 %v1405, %v1171
      %v1428 = vmul.f32 %v1406, %v1171
      %v1432 = vrot.slane %v1426, 2
      %v1433 = vrot.slane %v1427, 2
      %v1434 = vsel %vm1127, %v1432, %v1433
      %v1435 = vrot.slane %v1428, 2
      %v1436 = vsel %vm1127, %v1433, %v1435
      %v1439 = vadd.f32 %v1424, %v1434
      %v1440 = vadd.f32 %v1425, %v1436
      %s1441 = scalar_lea.vmem [#allocation2], 96
      %v1442 = vld [vmem:[%s1441] sm:$0xff]
      %v1443 = vld [vmem:[%s1441 + $0x8] sm:$0xff]
      %v1444 = vld [vmem:[%s1441 + $0x10] sm:$0xff]
      %v1445 = vmul.f32 %v1442, %v1194
      %v1446 = vmul.f32 %v1443, %v1194
      %v1447 = vadd.f32 %v1439, %v1445
      %v1448 = vadd.f32 %v1440, %v1446
      %v1449 = vmul.f32 %v1442, %v1202
      %v1450 = vmul.f32 %v1443, %v1202
      %v1451 = vmul.f32 %v1444, %v1202
      %v1455 = vrot.slane %v1449, 1
      %v1456 = vrot.slane %v1450, 1
      %v1457 = vsel %vm1107, %v1455, %v1456
      %v1458 = vrot.slane %v1451, 1
      %v1459 = vsel %vm1107, %v1456, %v1458
      %v1462 = vadd.f32 %v1447, %v1457
      %v1463 = vadd.f32 %v1448, %v1459
      %v1464 = vmul.f32 %v1442, %v1221
      %v1465 = vmul.f32 %v1443, %v1221
      %v1466 = vmul.f32 %v1444, %v1221
      %v1470 = vrot.slane %v1464, 2
      %v1471 = vrot.slane %v1465, 2
      %v1472 = vsel %vm1127, %v1470, %v1471
      %v1473 = vrot.slane %v1466, 2
      %v1474 = vsel %vm1127, %v1471, %v1473
      %v1477 = vadd.f32 %v1462, %v1472
      %v1478 = vadd.f32 %v1463, %v1474
      %v1479 = vadd.f32 %v1477, %v1241
      %v1480 = vadd.f32 %v1478, %v1241
      %v1481 = vmax.f32 %v1479, 0.0
      %v1482 = vmax.f32 %v1480, 0.0
      %v1483 = vmin.f32 %v1481, 6.0
      %v1484 = vmin.f32 %v1482, 6.0
      %1485 = vst.msk [vmem:[#allocation3 + $0x20] sm:$0xff] %vm979, %v1483
      %1486 = vst.msk [vmem:[#allocation3 + $0x28] sm:$0xff] %vm979, %v1484
      %v1487 = vld [vmem:[%s1323] sm:$0xff]
      %v1488 = vld [vmem:[%s1323 + $0x8] sm:$0xff]
      %v1489 = vld [vmem:[%s1323 + $0x10] sm:$0xff]
      %v1490 = vmul.f32 %v1487, %v1094
      %v1491 = vmul.f32 %v1488, %v1094
      %v1492 = vmul.f32 %v1487, %v1100
      %v1493 = vmul.f32 %v1488, %v1100
      %v1494 = vmul.f32 %v1489, %v1100
      %v1498 = vrot.slane %v1492, 1
      %v1499 = vrot.slane %v1493, 1
      %v1500 = vsel %vm1107, %v1498, %v1499
      %v1501 = vrot.slane %v1494, 1
      %v1502 = vsel %vm1107, %v1499, %v1501
      %v1505 = vadd.f32 %v1490, %v1500
      %v1506 = vadd.f32 %v1491, %v1502
      %v1507 = vmul.f32 %v1487, %v1120
      %v1508 = vmul.f32 %v1488, %v1120
      %v1509 = vmul.f32 %v1489, %v1120
      %v1513 = vrot.slane %v1507, 2
      %v1514 = vrot.slane %v1508, 2
      %v1515 = vsel %vm1127, %v1513, %v1514
      %v1516 = vrot.slane %v1509, 2
      %v1517 = vsel %vm1127, %v1514, %v1516
      %v1520 = vadd.f32 %v1505, %v1515
      %v1521 = vadd.f32 %v1506, %v1517
      %v1522 = vld [vmem:[%s1441] sm:$0xff]
      %v1523 = vld [vmem:[%s1441 + $0x8] sm:$0xff]
      %v1524 = vld [vmem:[%s1441 + $0x10] sm:$0xff]
      %v1525 = vmul.f32 %v1522, %v1144
      %v1526 = vmul.f32 %v1523, %v1144
      %v1527 = vadd.f32 %v1520, %v1525
      %v1528 = vadd.f32 %v1521, %v1526
      %v1529 = vmul.f32 %v1522, %v1152
      %v1530 = vmul.f32 %v1523, %v1152
      %v1531 = vmul.f32 %v1524, %v1152
      %v1535 = vrot.slane %v1529, 1
      %v1536 = vrot.slane %v1530, 1
      %v1537 = vsel %vm1107, %v1535, %v1536
      %v1538 = vrot.slane %v1531, 1
      %v1539 = vsel %vm1107, %v1536, %v1538
      %v1542 = vadd.f32 %v1527, %v1537
      %v1543 = vadd.f32 %v1528, %v1539
      %v1544 = vmul.f32 %v1522, %v1171
      %v1545 = vmul.f32 %v1523, %v1171
      %v1546 = vmul.f32 %v1524, %v1171
      %v1550 = vrot.slane %v1544, 2
      %v1551 = vrot.slane %v1545, 2
      %v1552 = vsel %vm1127, %v1550, %v1551
      %v1553 = vrot.slane %v1546, 2
      %v1554 = vsel %vm1127, %v1551, %v1553
      %v1557 = vadd.f32 %v1542, %v1552
      %v1558 = vadd.f32 %v1543, %v1554
      %s1559 = scalar_lea.vmem [#allocation2], 120
      %v1560 = vld [vmem:[%s1559] sm:$0xff]
      %v1561 = vld [vmem:[%s1559 + $0x8] sm:$0xff]
      %v1562 = vld [vmem:[%s1559 + $0x10] sm:$0xff]
      %v1563 = vmul.f32 %v1560, %v1194
      %v1564 = vmul.f32 %v1561, %v1194
      %v1565 = vadd.f32 %v1557, %v1563
      %v1566 = vadd.f32 %v1558, %v1564
      %v1567 = vmul.f32 %v1560, %v1202
      %v1568 = vmul.f32 %v1561, %v1202
      %v1569 = vmul.f32 %v1562, %v1202
      %v1573 = vrot.slane %v1567, 1
      %v1574 = vrot.slane %v1568, 1
      %v1575 = vsel %vm1107, %v1573, %v1574
      %v1576 = vrot.slane %v1569, 1
      %v1577 = vsel %vm1107, %v1574, %v1576
      %v1580 = vadd.f32 %v1565, %v1575
      %v1581 = vadd.f32 %v1566, %v1577
      %v1582 = vmul.f32 %v1560, %v1221
      %v1583 = vmul.f32 %v1561, %v1221
      %v1584 = vmul.f32 %v1562, %v1221
      %v1588 = vrot.slane %v1582, 2
      %v1589 = vrot.slane %v1583, 2
      %v1590 = vsel %vm1127, %v1588, %v1589
      %v1591 = vrot.slane %v1584, 2
      %v1592 = vsel %vm1127, %v1589, %v1591
      %v1595 = vadd.f32 %v1580, %v1590
      %v1596 = vadd.f32 %v1581, %v1592
      %v1597 = vadd.f32 %v1595, %v1241
      %v1598 = vadd.f32 %v1596, %v1241
      %v1599 = vmax.f32 %v1597, 0.0
      %v1600 = vmax.f32 %v1598, 0.0
      %v1601 = vmin.f32 %v1599, 6.0
      %v1602 = vmin.f32 %v1600, 6.0
      %1603 = vst.msk [vmem:[#allocation3 + $0x30] sm:$0xff] %vm979, %v1601
      %1604 = vst.msk [vmem:[#allocation3 + $0x38] sm:$0xff] %vm979, %v1602
      %v1605 = vld [vmem:[%s1441] sm:$0xff]
      %v1606 = vld [vmem:[%s1441 + $0x8] sm:$0xff]
      %v1607 = vld [vmem:[%s1441 + $0x10] sm:$0xff]
      %v1608 = vmul.f32 %v1605, %v1094
      %v1609 = vmul.f32 %v1606, %v1094
      %v1610 = vmul.f32 %v1605, %v1100
      %v1611 = vmul.f32 %v1606, %v1100
      %v1612 = vmul.f32 %v1607, %v1100
      %v1616 = vrot.slane %v1610, 1
      %v1617 = vrot.slane %v1611, 1
      %v1618 = vsel %vm1107, %v1616, %v1617
      %v1619 = vrot.slane %v1612, 1
      %v1620 = vsel %vm1107, %v1617, %v1619
      %v1623 = vadd.f32 %v1608, %v1618
      %v1624 = vadd.f32 %v1609, %v1620
      %v1625 = vmul.f32 %v1605, %v1120
      %v1626 = vmul.f32 %v1606, %v1120
      %v1627 = vmul.f32 %v1607, %v1120
      %v1631 = vrot.slane %v1625, 2
      %v1632 = vrot.slane %v1626, 2
      %v1633 = vsel %vm1127, %v1631, %v1632
      %v1634 = vrot.slane %v1627, 2
      %v1635 = vsel %vm1127, %v1632, %v1634
      %v1638 = vadd.f32 %v1623, %v1633
      %v1639 = vadd.f32 %v1624, %v1635
      %v1640 = vld [vmem:[%s1559] sm:$0xff]
      %v1641 = vld [vmem:[%s1559 + $0x8] sm:$0xff]
      %v1642 = vld [vmem:[%s1559 + $0x10] sm:$0xff]
      %v1643 = vmul.f32 %v1640, %v1144
      %v1644 = vmul.f32 %v1641, %v1144
      %v1645 = vadd.f32 %v1638, %v1643
      %v1646 = vadd.f32 %v1639, %v1644
      %v1647 = vmul.f32 %v1640, %v1152
      %v1648 = vmul.f32 %v1641, %v1152
      %v1649 = vmul.f32 %v1642, %v1152
      %v1653 = vrot.slane %v1647, 1
      %v1654 = vrot.slane %v1648, 1
      %v1655 = vsel %vm1107, %v1653, %v1654
      %v1656 = vrot.slane %v1649, 1
      %v1657 = vsel %vm1107, %v1654, %v1656
      %v1660 = vadd.f32 %v1645, %v1655
      %v1661 = vadd.f32 %v1646, %v1657
      %v1662 = vmul.f32 %v1640, %v1171
      %v1663 = vmul.f32 %v1641, %v1171
      %v1664 = vmul.f32 %v1642, %v1171
      %v1668 = vrot.slane %v1662, 2
      %v1669 = vrot.slane %v1663, 2
      %v1670 = vsel %vm1127, %v1668, %v1669
      %v1671 = vrot.slane %v1664, 2
      %v1672 = vsel %vm1127, %v1669, %v1671
      %v1675 = vadd.f32 %v1660, %v1670
      %v1676 = vadd.f32 %v1661, %v1672
      %s1677 = scalar_lea.vmem [#allocation2], 144
      %v1678 = vld [vmem:[%s1677] sm:$0xff]
      %v1679 = vld [vmem:[%s1677 + $0x8] sm:$0xff]
      %v1680 = vld [vmem:[%s1677 + $0x10] sm:$0xff]
      %v1681 = vmul.f32 %v1678, %v1194
      %v1682 = vmul.f32 %v1679, %v1194
      %v1683 = vadd.f32 %v1675, %v1681
      %v1684 = vadd.f32 %v1676, %v1682
      %v1685 = vmul.f32 %v1678, %v1202
      %v1686 = vmul.f32 %v1679, %v1202
      %v1687 = vmul.f32 %v1680, %v1202
      %v1691 = vrot.slane %v1685, 1
      %v1692 = vrot.slane %v1686, 1
      %v1693 = vsel %vm1107, %v1691, %v1692
      %v1694 = vrot.slane %v1687, 1
      %v1695 = vsel %vm1107, %v1692, %v1694
      %v1698 = vadd.f32 %v1683, %v1693
      %v1699 = vadd.f32 %v1684, %v1695
      %v1700 = vmul.f32 %v1678, %v1221
      %v1701 = vmul.f32 %v1679, %v1221
      %v1702 = vmul.f32 %v1680, %v1221
      %v1706 = vrot.slane %v1700, 2
      %v1707 = vrot.slane %v1701, 2
      %v1708 = vsel %vm1127, %v1706, %v1707
      %v1709 = vrot.slane %v1702, 2
      %v1710 = vsel %vm1127, %v1707, %v1709
      %v1713 = vadd.f32 %v1698, %v1708
      %v1714 = vadd.f32 %v1699, %v1710
      %v1715 = vadd.f32 %v1713, %v1241
      %v1716 = vadd.f32 %v1714, %v1241
      %v1717 = vmax.f32 %v1715, 0.0
      %v1718 = vmax.f32 %v1716, 0.0
      %v1719 = vmin.f32 %v1717, 6.0
      %v1720 = vmin.f32 %v1718, 6.0
      %1721 = vst.msk [vmem:[#allocation3 + $0x40] sm:$0xff] %vm979, %v1719
      %1722 = vst.msk [vmem:[#allocation3 + $0x48] sm:$0xff] %vm979, %v1720
      %v1723 = vld [vmem:[%s1559] sm:$0xff]
      %v1724 = vld [vmem:[%s1559 + $0x8] sm:$0xff]
      %v1725 = vld [vmem:[%s1559 + $0x10] sm:$0xff]
      %v1726 = vmul.f32 %v1723, %v1094
      %v1727 = vmul.f32 %v1724, %v1094
      %v1728 = vmul.f32 %v1723, %v1100
      %v1729 = vmul.f32 %v1724, %v1100
      %v1730 = vmul.f32 %v1725, %v1100
      %v1734 = vrot.slane %v1728, 1
      %v1735 = vrot.slane %v1729, 1
      %v1736 = vsel %vm1107, %v1734, %v1735
      %v1737 = vrot.slane %v1730, 1
      %v1738 = vsel %vm1107, %v1735, %v1737
      %v1741 = vadd.f32 %v1726, %v1736
      %v1742 = vadd.f32 %v1727, %v1738
      %v1743 = vmul.f32 %v1723, %v1120
      %v1744 = vmul.f32 %v1724, %v1120
      %v1745 = vmul.f32 %v1725, %v1120
      %v1749 = vrot.slane %v1743, 2
      %v1750 = vrot.slane %v1744, 2
      %v1751 = vsel %vm1127, %v1749, %v1750
      %v1752 = vrot.slane %v1745, 2
      %v1753 = vsel %vm1127, %v1750, %v1752
      %v1756 = vadd.f32 %v1741, %v1751
      %v1757 = vadd.f32 %v1742, %v1753
      %v1758 = vld [vmem:[%s1677] sm:$0xff]
      %v1759 = vld [vmem:[%s1677 + $0x8] sm:$0xff]
      %v1760 = vld [vmem:[%s1677 + $0x10] sm:$0xff]
      %v1761 = vmul.f32 %v1758, %v1144
      %v1762 = vmul.f32 %v1759, %v1144
      %v1763 = vadd.f32 %v1756, %v1761
      %v1764 = vadd.f32 %v1757, %v1762
      %v1765 = vmul.f32 %v1758, %v1152
      %v1766 = vmul.f32 %v1759, %v1152
      %v1767 = vmul.f32 %v1760, %v1152
      %v1771 = vrot.slane %v1765, 1
      %v1772 = vrot.slane %v1766, 1
      %v1773 = vsel %vm1107, %v1771, %v1772
      %v1774 = vrot.slane %v1767, 1
      %v1775 = vsel %vm1107, %v1772, %v1774
      %v1778 = vadd.f32 %v1763, %v1773
      %v1779 = vadd.f32 %v1764, %v1775
      %v1780 = vmul.f32 %v1758, %v1171
      %v1781 = vmul.f32 %v1759, %v1171
      %v1782 = vmul.f32 %v1760, %v1171
      %v1786 = vrot.slane %v1780, 2
      %v1787 = vrot.slane %v1781, 2
      %v1788 = vsel %vm1127, %v1786, %v1787
      %v1789 = vrot.slane %v1782, 2
      %v1790 = vsel %vm1127, %v1787, %v1789
      %v1793 = vadd.f32 %v1778, %v1788
      %v1794 = vadd.f32 %v1779, %v1790
      %s1795 = scalar_lea.vmem [#allocation2], 168
      %v1796 = vld [vmem:[%s1795] sm:$0xff]
      %v1797 = vld [vmem:[%s1795 + $0x8] sm:$0xff]
      %v1798 = vld [vmem:[%s1795 + $0x10] sm:$0xff]
      %v1799 = vmul.f32 %v1796, %v1194
      %v1800 = vmul.f32 %v1797, %v1194
      %v1801 = vadd.f32 %v1793, %v1799
      %v1802 = vadd.f32 %v1794, %v1800
      %v1803 = vmul.f32 %v1796, %v1202
      %v1804 = vmul.f32 %v1797, %v1202
      %v1805 = vmul.f32 %v1798, %v1202
      %v1809 = vrot.slane %v1803, 1
      %v1810 = vrot.slane %v1804, 1
      %v1811 = vsel %vm1107, %v1809, %v1810
      %v1812 = vrot.slane %v1805, 1
      %v1813 = vsel %vm1107, %v1810, %v1812
      %v1816 = vadd.f32 %v1801, %v1811
      %v1817 = vadd.f32 %v1802, %v1813
      %v1818 = vmul.f32 %v1796, %v1221
      %v1819 = vmul.f32 %v1797, %v1221
      %v1820 = vmul.f32 %v1798, %v1221
      %v1824 = vrot.slane %v1818, 2
      %v1825 = vrot.slane %v1819, 2
      %v1826 = vsel %vm1127, %v1824, %v1825
      %v1827 = vrot.slane %v1820, 2
      %v1828 = vsel %vm1127, %v1825, %v1827
      %v1831 = vadd.f32 %v1816, %v1826
      %v1832 = vadd.f32 %v1817, %v1828
      %v1833 = vadd.f32 %v1831, %v1241
      %v1834 = vadd.f32 %v1832, %v1241
      %v1835 = vmax.f32 %v1833, 0.0
      %v1836 = vmax.f32 %v1834, 0.0
      %v1837 = vmin.f32 %v1835, 6.0
      %v1838 = vmin.f32 %v1836, 6.0
      %1839 = vst.msk [vmem:[#allocation3 + $0x50] sm:$0xff] %vm979, %v1837
      %1840 = vst.msk [vmem:[#allocation3 + $0x58] sm:$0xff] %vm979, %v1838
      %v1841 = vld [vmem:[%s1677] sm:$0xff]
      %v1842 = vld [vmem:[%s1677 + $0x8] sm:$0xff]
      %v1843 = vld [vmem:[%s1677 + $0x10] sm:$0xff]
      %v1844 = vmul.f32 %v1841, %v1094
      %v1845 = vmul.f32 %v1842, %v1094
      %v1846 = vmul.f32 %v1841, %v1100
      %v1847 = vmul.f32 %v1842, %v1100
      %v1848 = vmul.f32 %v1843, %v1100
      %v1852 = vrot.slane %v1846, 1
      %v1853 = vrot.slane %v1847, 1
      %v1854 = vsel %vm1107, %v1852, %v1853
      %v1855 = vrot.slane %v1848, 1
      %v1856 = vsel %vm1107, %v1853, %v1855
      %v1859 = vadd.f32 %v1844, %v1854
      %v1860 = vadd.f32 %v1845, %v1856
      %v1861 = vmul.f32 %v1841, %v1120
      %v1862 = vmul.f32 %v1842, %v1120
      %v1863 = vmul.f32 %v1843, %v1120
      %v1867 = vrot.slane %v1861, 2
      %v1868 = vrot.slane %v1862, 2
      %v1869 = vsel %vm1127, %v1867, %v1868
      %v1870 = vrot.slane %v1863, 2
      %v1871 = vsel %vm1127, %v1868, %v1870
      %v1874 = vadd.f32 %v1859, %v1869
      %v1875 = vadd.f32 %v1860, %v1871
      %v1876 = vld [vmem:[%s1795] sm:$0xff]
      %v1877 = vld [vmem:[%s1795 + $0x8] sm:$0xff]
      %v1878 = vld [vmem:[%s1795 + $0x10] sm:$0xff]
      %v1879 = vmul.f32 %v1876, %v1144
      %v1880 = vmul.f32 %v1877, %v1144
      %v1881 = vadd.f32 %v1874, %v1879
      %v1882 = vadd.f32 %v1875, %v1880
      %v1883 = vmul.f32 %v1876, %v1152
      %v1884 = vmul.f32 %v1877, %v1152
      %v1885 = vmul.f32 %v1878, %v1152
      %v1889 = vrot.slane %v1883, 1
      %v1890 = vrot.slane %v1884, 1
      %v1891 = vsel %vm1107, %v1889, %v1890
      %v1892 = vrot.slane %v1885, 1
      %v1893 = vsel %vm1107, %v1890, %v1892
      %v1896 = vadd.f32 %v1881, %v1891
      %v1897 = vadd.f32 %v1882, %v1893
      %v1898 = vmul.f32 %v1876, %v1171
      %v1899 = vmul.f32 %v1877, %v1171
      %v1900 = vmul.f32 %v1878, %v1171
      %v1904 = vrot.slane %v1898, 2
      %v1905 = vrot.slane %v1899, 2
      %v1906 = vsel %vm1127, %v1904, %v1905
      %v1907 = vrot.slane %v1900, 2
      %v1908 = vsel %vm1127, %v1905, %v1907
      %v1911 = vadd.f32 %v1896, %v1906
      %v1912 = vadd.f32 %v1897, %v1908
      %s1913 = scalar_lea.vmem [#allocation2], 192
      %v1914 = vld [vmem:[%s1913] sm:$0xff]
      %v1915 = vld [vmem:[%s1913 + $0x8] sm:$0xff]
      %v1916 = vld [vmem:[%s1913 + $0x10] sm:$0xff]
      %v1917 = vmul.f32 %v1914, %v1194
      %v1918 = vmul.f32 %v1915, %v1194
      %v1919 = vadd.f32 %v1911, %v1917
      %v1920 = vadd.f32 %v1912, %v1918
      %v1921 = vmul.f32 %v1914, %v1202
      %v1922 = vmul.f32 %v1915, %v1202
      %v1923 = vmul.f32 %v1916, %v1202
      %v1927 = vrot.slane %v1921, 1
      %v1928 = vrot.slane %v1922, 1
      %v1929 = vsel %vm1107, %v1927, %v1928
      %v1930 = vrot.slane %v1923, 1
      %v1931 = vsel %vm1107, %v1928, %v1930
      %v1934 = vadd.f32 %v1919, %v1929
      %v1935 = vadd.f32 %v1920, %v1931
      %v1936 = vmul.f32 %v1914, %v1221
      %v1937 = vmul.f32 %v1915, %v1221
      %v1938 = vmul.f32 %v1916, %v1221
      %v1942 = vrot.slane %v1936, 2
      %v1943 = vrot.slane %v1937, 2
      %v1944 = vsel %vm1127, %v1942, %v1943
      %v1945 = vrot.slane %v1938, 2
      %v1946 = vsel %vm1127, %v1943, %v1945
      %v1949 = vadd.f32 %v1934, %v1944
      %v1950 = vadd.f32 %v1935, %v1946
      %v1951 = vadd.f32 %v1949, %v1241
      %v1952 = vadd.f32 %v1950, %v1241
      %v1953 = vmax.f32 %v1951, 0.0
      %v1954 = vmax.f32 %v1952, 0.0
      %v1955 = vmin.f32 %v1953, 6.0
      %v1956 = vmin.f32 %v1954, 6.0
      %1957 = vst.msk [vmem:[#allocation3 + $0x60] sm:$0xff] %vm979, %v1955
      %1958 = vst.msk [vmem:[#allocation3 + $0x68] sm:$0xff] %vm979, %v1956
      %v1959 = vld [vmem:[%s1795] sm:$0xff]
      %v1960 = vld [vmem:[%s1795 + $0x8] sm:$0xff]
      %v1961 = vld [vmem:[%s1795 + $0x10] sm:$0xff]
      %v1962 = vmul.f32 %v1959, %v1094
      %v1963 = vmul.f32 %v1960, %v1094
      %v1964 = vmul.f32 %v1959, %v1100
      %v1965 = vmul.f32 %v1960, %v1100
      %v1966 = vmul.f32 %v1961, %v1100
      %v1970 = vrot.slane %v1964, 1
      %v1971 = vrot.slane %v1965, 1
      %v1972 = vsel %vm1107, %v1970, %v1971
      %v1973 = vrot.slane %v1966, 1
      %v1974 = vsel %vm1107, %v1971, %v1973
      %v1977 = vadd.f32 %v1962, %v1972
      %v1978 = vadd.f32 %v1963, %v1974
      %v1979 = vmul.f32 %v1959, %v1120
      %v1980 = vmul.f32 %v1960, %v1120
      %v1981 = vmul.f32 %v1961, %v1120
      %v1985 = vrot.slane %v1979, 2
      %v1986 = vrot.slane %v1980, 2
      %v1987 = vsel %vm1127, %v1985, %v1986
      %v1988 = vrot.slane %v1981, 2
      %v1989 = vsel %vm1127, %v1986, %v1988
      %v1992 = vadd.f32 %v1977, %v1987
      %v1993 = vadd.f32 %v1978, %v1989
      %v1994 = vld [vmem:[%s1913] sm:$0xff]
      %v1995 = vld [vmem:[%s1913 + $0x8] sm:$0xff]
      %v1996 = vld [vmem:[%s1913 + $0x10] sm:$0xff]
      %v1997 = vmul.f32 %v1994, %v1144
      %v1998 = vmul.f32 %v1995, %v1144
      %v1999 = vadd.f32 %v1992, %v1997
      %v2000 = vadd.f32 %v1993, %v1998
      %v2001 = vmul.f32 %v1994, %v1152
      %v2002 = vmul.f32 %v1995, %v1152
      %v2003 = vmul.f32 %v1996, %v1152
      %v2007 = vrot.slane %v2001, 1
      %v2008 = vrot.slane %v2002, 1
      %v2009 = vsel %vm1107, %v2007, %v2008
      %v2010 = vrot.slane %v2003, 1
      %v2011 = vsel %vm1107, %v2008, %v2010
      %v2014 = vadd.f32 %v1999, %v2009
      %v2015 = vadd.f32 %v2000, %v2011
      %v2016 = vmul.f32 %v1994, %v1171
      %v2017 = vmul.f32 %v1995, %v1171
      %v2018 = vmul.f32 %v1996, %v1171
      %v2022 = vrot.slane %v2016, 2
      %v2023 = vrot.slane %v2017, 2
      %v2024 = vsel %vm1127, %v2022, %v2023
      %v2025 = vrot.slane %v2018, 2
      %v2026 = vsel %vm1127, %v2023, %v2025
      %v2029 = vadd.f32 %v2014, %v2024
      %v2030 = vadd.f32 %v2015, %v2026
      %s2031 = scalar_lea.vmem [#allocation2], 216
      %v2032 = vld [vmem:[%s2031] sm:$0xff]
      %v2033 = vld [vmem:[%s2031 + $0x8] sm:$0xff]
      %v2034 = vld [vmem:[%s2031 + $0x10] sm:$0xff]
      %v2035 = vmul.f32 %v2032, %v1194
      %v2036 = vmul.f32 %v2033, %v1194
      %v2037 = vadd.f32 %v2029, %v2035
      %v2038 = vadd.f32 %v2030, %v2036
      %v2039 = vmul.f32 %v2032, %v1202
      %v2040 = vmul.f32 %v2033, %v1202
      %v2041 = vmul.f32 %v2034, %v1202
      %v2045 = vrot.slane %v2039, 1
      %v2046 = vrot.slane %v2040, 1
      %v2047 = vsel %vm1107, %v2045, %v2046
      %v2048 = vrot.slane %v2041, 1
      %v2049 = vsel %vm1107, %v2046, %v2048
      %v2052 = vadd.f32 %v2037, %v2047
      %v2053 = vadd.f32 %v2038, %v2049
      %v2054 = vmul.f32 %v2032, %v1221
      %v2055 = vmul.f32 %v2033, %v1221
      %v2056 = vmul.f32 %v2034, %v1221
      %v2060 = vrot.slane %v2054, 2
      %v2061 = vrot.slane %v2055, 2
      %v2062 = vsel %vm1127, %v2060, %v2061
      %v2063 = vrot.slane %v2056, 2
      %v2064 = vsel %vm1127, %v2061, %v2063
      %v2067 = vadd.f32 %v2052, %v2062
      %v2068 = vadd.f32 %v2053, %v2064
      %v2069 = vadd.f32 %v2067, %v1241
      %v2070 = vadd.f32 %v2068, %v1241
      %v2071 = vmax.f32 %v2069, 0.0
      %v2072 = vmax.f32 %v2070, 0.0
      %v2073 = vmin.f32 %v2071, 6.0
      %v2074 = vmin.f32 %v2072, 6.0
      %2075 = vst.msk [vmem:[#allocation3 + $0x70] sm:$0xff] %vm979, %v2073
      %2076 = vst.msk [vmem:[#allocation3 + $0x78] sm:$0xff] %vm979, %v2074
      %v2077 = vld [vmem:[%s1913] sm:$0xff]
      %v2078 = vld [vmem:[%s1913 + $0x8] sm:$0xff]
      %v2079 = vld [vmem:[%s1913 + $0x10] sm:$0xff]
      %v2080 = vmul.f32 %v2077, %v1094
      %v2081 = vmul.f32 %v2078, %v1094
      %v2082 = vmul.f32 %v2077, %v1100
      %v2083 = vmul.f32 %v2078, %v1100
      %v2084 = vmul.f32 %v2079, %v1100
      %v2088 = vrot.slane %v2082, 1
      %v2089 = vrot.slane %v2083, 1
      %v2090 = vsel %vm1107, %v2088, %v2089
      %v2091 = vrot.slane %v2084, 1
      %v2092 = vsel %vm1107, %v2089, %v2091
      %v2095 = vadd.f32 %v2080, %v2090
      %v2096 = vadd.f32 %v2081, %v2092
      %v2097 = vmul.f32 %v2077, %v1120
      %v2098 = vmul.f32 %v2078, %v1120
      %v2099 = vmul.f32 %v2079, %v1120
      %v2103 = vrot.slane %v2097, 2
      %v2104 = vrot.slane %v2098, 2
      %v2105 = vsel %vm1127, %v2103, %v2104
      %v2106 = vrot.slane %v2099, 2
      %v2107 = vsel %vm1127, %v2104, %v2106
      %v2110 = vadd.f32 %v2095, %v2105
      %v2111 = vadd.f32 %v2096, %v2107
      %v2112 = vld [vmem:[%s2031] sm:$0xff]
      %v2113 = vld [vmem:[%s2031 + $0x8] sm:$0xff]
      %v2114 = vld [vmem:[%s2031 + $0x10] sm:$0xff]
      %v2115 = vmul.f32 %v2112, %v1144
      %v2116 = vmul.f32 %v2113, %v1144
      %v2117 = vadd.f32 %v2110, %v2115
      %v2118 = vadd.f32 %v2111, %v2116
      %v2119 = vmul.f32 %v2112, %v1152
      %v2120 = vmul.f32 %v2113, %v1152
      %v2121 = vmul.f32 %v2114, %v1152
      %v2125 = vrot.slane %v2119, 1
      %v2126 = vrot.slane %v2120, 1
      %v2127 = vsel %vm1107, %v2125, %v2126
      %v2128 = vrot.slane %v2121, 1
      %v2129 = vsel %vm1107, %v2126, %v2128
      %v2132 = vadd.f32 %v2117, %v2127
      %v2133 = vadd.f32 %v2118, %v2129
      %v2134 = vmul.f32 %v2112, %v1171
      %v2135 = vmul.f32 %v2113, %v1171
      %v2136 = vmul.f32 %v2114, %v1171
      %v2140 = vrot.slane %v2134, 2
      %v2141 = vrot.slane %v2135, 2
      %v2142 = vsel %vm1127, %v2140, %v2141
      %v2143 = vrot.slane %v2136, 2
      %v2144 = vsel %vm1127, %v2141, %v2143
      %v2147 = vadd.f32 %v2132, %v2142
      %v2148 = vadd.f32 %v2133, %v2144
      %s2149 = scalar_lea.vmem [#allocation2], 240
      %v2150 = vld [vmem:[%s2149] sm:$0xff]
      %v2151 = vld [vmem:[%s2149 + $0x8] sm:$0xff]
      %v2152 = vld [vmem:[%s2149 + $0x10] sm:$0xff]
      %v2153 = vmul.f32 %v2150, %v1194
      %v2154 = vmul.f32 %v2151, %v1194
      %v2155 = vadd.f32 %v2147, %v2153
      %v2156 = vadd.f32 %v2148, %v2154
      %v2157 = vmul.f32 %v2150, %v1202
      %v2158 = vmul.f32 %v2151, %v1202
      %v2159 = vmul.f32 %v2152, %v1202
      %v2163 = vrot.slane %v2157, 1
      %v2164 = vrot.slane %v2158, 1
      %v2165 = vsel %vm1107, %v2163, %v2164
      %v2166 = vrot.slane %v2159, 1
      %v2167 = vsel %vm1107, %v2164, %v2166
      %v2170 = vadd.f32 %v2155, %v2165
      %v2171 = vadd.f32 %v2156, %v2167
      %v2172 = vmul.f32 %v2150, %v1221
      %v2173 = vmul.f32 %v2151, %v1221
      %v2174 = vmul.f32 %v2152, %v1221
      %v2178 = vrot.slane %v2172, 2
      %v2179 = vrot.slane %v2173, 2
      %v2180 = vsel %vm1127, %v2178, %v2179
      %v2181 = vrot.slane %v2174, 2
      %v2182 = vsel %vm1127, %v2179, %v2181
      %v2185 = vadd.f32 %v2170, %v2180
      %v2186 = vadd.f32 %v2171, %v2182
      %v2187 = vadd.f32 %v2185, %v1241
      %v2188 = vadd.f32 %v2186, %v1241
      %v2189 = vmax.f32 %v2187, 0.0
      %v2190 = vmax.f32 %v2188, 0.0
      %v2191 = vmin.f32 %v2189, 6.0
      %v2192 = vmin.f32 %v2190, 6.0
      %2193 = vst.msk [vmem:[#allocation3 + $0x80] sm:$0xff] %vm979, %v2191
      %2194 = vst.msk [vmem:[#allocation3 + $0x88] sm:$0xff] %vm979, %v2192
      %v2195 = vld [vmem:[%s2031] sm:$0xff]
      %v2196 = vld [vmem:[%s2031 + $0x8] sm:$0xff]
      %v2197 = vld [vmem:[%s2031 + $0x10] sm:$0xff]
      %v2198 = vmul.f32 %v2195, %v1094
      %v2199 = vmul.f32 %v2196, %v1094
      %v2200 = vmul.f32 %v2195, %v1100
      %v2201 = vmul.f32 %v2196, %v1100
      %v2202 = vmul.f32 %v2197, %v1100
      %v2206 = vrot.slane %v2200, 1
      %v2207 = vrot.slane %v2201, 1
      %v2208 = vsel %vm1107, %v2206, %v2207
      %v2209 = vrot.slane %v2202, 1
      %v2210 = vsel %vm1107, %v2207, %v2209
      %v2213 = vadd.f32 %v2198, %v2208
      %v2214 = vadd.f32 %v2199, %v2210
      %v2215 = vmul.f32 %v2195, %v1120
      %v2216 = vmul.f32 %v2196, %v1120
      %v2217 = vmul.f32 %v2197, %v1120
      %v2221 = vrot.slane %v2215, 2
      %v2222 = vrot.slane %v2216, 2
      %v2223 = vsel %vm1127, %v2221, %v2222
      %v2224 = vrot.slane %v2217, 2
      %v2225 = vsel %vm1127, %v2222, %v2224
      %v2228 = vadd.f32 %v2213, %v2223
      %v2229 = vadd.f32 %v2214, %v2225
      %v2230 = vld [vmem:[%s2149] sm:$0xff]
      %v2231 = vld [vmem:[%s2149 + $0x8] sm:$0xff]
      %v2232 = vld [vmem:[%s2149 + $0x10] sm:$0xff]
      %v2233 = vmul.f32 %v2230, %v1144
      %v2234 = vmul.f32 %v2231, %v1144
      %v2235 = vadd.f32 %v2228, %v2233
      %v2236 = vadd.f32 %v2229, %v2234
      %v2237 = vmul.f32 %v2230, %v1152
      %v2238 = vmul.f32 %v2231, %v1152
      %v2239 = vmul.f32 %v2232, %v1152
      %v2243 = vrot.slane %v2237, 1
      %v2244 = vrot.slane %v2238, 1
      %v2245 = vsel %vm1107, %v2243, %v2244
      %v2246 = vrot.slane %v2239, 1
      %v2247 = vsel %vm1107, %v2244, %v2246
      %v2250 = vadd.f32 %v2235, %v2245
      %v2251 = vadd.f32 %v2236, %v2247
      %v2252 = vmul.f32 %v2230, %v1171
      %v2253 = vmul.f32 %v2231, %v1171
      %v2254 = vmul.f32 %v2232, %v1171
      %v2258 = vrot.slane %v2252, 2
      %v2259 = vrot.slane %v2253, 2
      %v2260 = vsel %vm1127, %v2258, %v2259
      %v2261 = vrot.slane %v2254, 2
      %v2262 = vsel %vm1127, %v2259, %v2261
      %v2265 = vadd.f32 %v2250, %v2260
      %v2266 = vadd.f32 %v2251, %v2262
      %s2267 = scalar_lea.vmem [#allocation2], 264
      %v2268 = vld [vmem:[%s2267] sm:$0xff]
      %v2269 = vld [vmem:[%s2267 + $0x8] sm:$0xff]
      %v2270 = vld [vmem:[%s2267 + $0x10] sm:$0xff]
      %v2271 = vmul.f32 %v2268, %v1194
      %v2272 = vmul.f32 %v2269, %v1194
      %v2273 = vadd.f32 %v2265, %v2271
      %v2274 = vadd.f32 %v2266, %v2272
      %v2275 = vmul.f32 %v2268, %v1202
      %v2276 = vmul.f32 %v2269, %v1202
      %v2277 = vmul.f32 %v2270, %v1202
      %v2281 = vrot.slane %v2275, 1
      %v2282 = vrot.slane %v2276, 1
      %v2283 = vsel %vm1107, %v2281, %v2282
      %v2284 = vrot.slane %v2277, 1
      %v2285 = vsel %vm1107, %v2282, %v2284
      %v2288 = vadd.f32 %v2273, %v2283
      %v2289 = vadd.f32 %v2274, %v2285
      %v2290 = vmul.f32 %v2268, %v1221
      %v2291 = vmul.f32 %v2269, %v1221
      %v2292 = vmul.f32 %v2270, %v1221
      %v2296 = vrot.slane %v2290, 2
      %v2297 = vrot.slane %v2291, 2
      %v2298 = vsel %vm1127, %v2296, %v2297
      %v2299 = vrot.slane %v2292, 2
      %v2300 = vsel %vm1127, %v2297, %v2299
      %v2303 = vadd.f32 %v2288, %v2298
      %v2304 = vadd.f32 %v2289, %v2300
      %v2305 = vadd.f32 %v2303, %v1241
      %v2306 = vadd.f32 %v2304, %v1241
      %v2307 = vmax.f32 %v2305, 0.0
      %v2308 = vmax.f32 %v2306, 0.0
      %v2309 = vmin.f32 %v2307, 6.0
      %v2310 = vmin.f32 %v2308, 6.0
      %2311 = vst.msk [vmem:[#allocation3 + $0x90] sm:$0xff] %vm979, %v2309
      %2312 = vst.msk [vmem:[#allocation3 + $0x98] sm:$0xff] %vm979, %v2310
      %v2313 = vld [vmem:[%s2149] sm:$0xff]
      %v2314 = vld [vmem:[%s2149 + $0x8] sm:$0xff]
      %v2315 = vld [vmem:[%s2149 + $0x10] sm:$0xff]
      %v2316 = vmul.f32 %v2313, %v1094
      %v2317 = vmul.f32 %v2314, %v1094
      %v2318 = vmul.f32 %v2313, %v1100
      %v2319 = vmul.f32 %v2314, %v1100
      %v2320 = vmul.f32 %v2315, %v1100
      %v2324 = vrot.slane %v2318, 1
      %v2325 = vrot.slane %v2319, 1
      %v2326 = vsel %vm1107, %v2324, %v2325
      %v2327 = vrot.slane %v2320, 1
      %v2328 = vsel %vm1107, %v2325, %v2327
      %v2331 = vadd.f32 %v2316, %v2326
      %v2332 = vadd.f32 %v2317, %v2328
      %v2333 = vmul.f32 %v2313, %v1120
      %v2334 = vmul.f32 %v2314, %v1120
      %v2335 = vmul.f32 %v2315, %v1120
      %v2339 = vrot.slane %v2333, 2
      %v2340 = vrot.slane %v2334, 2
      %v2341 = vsel %vm1127, %v2339, %v2340
      %v2342 = vrot.slane %v2335, 2
      %v2343 = vsel %vm1127, %v2340, %v2342
      %v2346 = vadd.f32 %v2331, %v2341
      %v2347 = vadd.f32 %v2332, %v2343
      %v2348 = vld [vmem:[%s2267] sm:$0xff]
      %v2349 = vld [vmem:[%s2267 + $0x8] sm:$0xff]
      %v2350 = vld [vmem:[%s2267 + $0x10] sm:$0xff]
      %v2351 = vmul.f32 %v2348, %v1144
      %v2352 = vmul.f32 %v2349, %v1144
      %v2353 = vadd.f32 %v2346, %v2351
      %v2354 = vadd.f32 %v2347, %v2352
      %v2355 = vmul.f32 %v2348, %v1152
      %v2356 = vmul.f32 %v2349, %v1152
      %v2357 = vmul.f32 %v2350, %v1152
      %v2361 = vrot.slane %v2355, 1
      %v2362 = vrot.slane %v2356, 1
      %v2363 = vsel %vm1107, %v2361, %v2362
      %v2364 = vrot.slane %v2357, 1
      %v2365 = vsel %vm1107, %v2362, %v2364
      %v2368 = vadd.f32 %v2353, %v2363
      %v2369 = vadd.f32 %v2354, %v2365
      %v2370 = vmul.f32 %v2348, %v1171
      %v2371 = vmul.f32 %v2349, %v1171
      %v2372 = vmul.f32 %v2350, %v1171
      %v2376 = vrot.slane %v2370, 2
      %v2377 = vrot.slane %v2371, 2
      %v2378 = vsel %vm1127, %v2376, %v2377
      %v2379 = vrot.slane %v2372, 2
      %v2380 = vsel %vm1127, %v2377, %v2379
      %v2383 = vadd.f32 %v2368, %v2378
      %v2384 = vadd.f32 %v2369, %v2380
      %s2385 = scalar_lea.vmem [#allocation2], 288
      %v2386 = vld [vmem:[%s2385] sm:$0xff]
      %v2387 = vld [vmem:[%s2385 + $0x8] sm:$0xff]
      %v2388 = vld [vmem:[%s2385 + $0x10] sm:$0xff]
      %v2389 = vmul.f32 %v2386, %v1194
      %v2390 = vmul.f32 %v2387, %v1194
      %v2391 = vadd.f32 %v2383, %v2389
      %v2392 = vadd.f32 %v2384, %v2390
      %v2393 = vmul.f32 %v2386, %v1202
      %v2394 = vmul.f32 %v2387, %v1202
      %v2395 = vmul.f32 %v2388, %v1202
      %v2399 = vrot.slane %v2393, 1
      %v2400 = vrot.slane %v2394, 1
      %v2401 = vsel %vm1107, %v2399, %v2400
      %v2402 = vrot.slane %v2395, 1
      %v2403 = vsel %vm1107, %v2400, %v2402
      %v2406 = vadd.f32 %v2391, %v2401
      %v2407 = vadd.f32 %v2392, %v2403
      %v2408 = vmul.f32 %v2386, %v1221
      %v2409 = vmul.f32 %v2387, %v1221
      %v2410 = vmul.f32 %v2388, %v1221
      %v2414 = vrot.slane %v2408, 2
      %v2415 = vrot.slane %v2409, 2
      %v2416 = vsel %vm1127, %v2414, %v2415
      %v2417 = vrot.slane %v2410, 2
      %v2418 = vsel %vm1127, %v2415, %v2417
      %v2421 = vadd.f32 %v2406, %v2416
      %v2422 = vadd.f32 %v2407, %v2418
      %v2423 = vadd.f32 %v2421, %v1241
      %v2424 = vadd.f32 %v2422, %v1241
      %v2425 = vmax.f32 %v2423, 0.0
      %v2426 = vmax.f32 %v2424, 0.0
      %v2427 = vmin.f32 %v2425, 6.0
      %v2428 = vmin.f32 %v2426, 6.0
      %2429 = vst.msk [vmem:[#allocation3 + $0xa0] sm:$0xff] %vm979, %v2427
      %2430 = vst.msk [vmem:[#allocation3 + $0xa8] sm:$0xff] %vm979, %v2428
      %v2431 = vld [vmem:[%s2267] sm:$0xff]
      %v2432 = vld [vmem:[%s2267 + $0x8] sm:$0xff]
      %v2433 = vld [vmem:[%s2267 + $0x10] sm:$0xff]
      %v2434 = vmul.f32 %v2431, %v1094
      %v2435 = vmul.f32 %v2432, %v1094
      %v2436 = vmul.f32 %v2431, %v1100
      %v2437 = vmul.f32 %v2432, %v1100
      %v2438 = vmul.f32 %v2433, %v1100
      %v2442 = vrot.slane %v2436, 1
      %v2443 = vrot.slane %v2437, 1
      %v2444 = vsel %vm1107, %v2442, %v2443
      %v2445 = vrot.slane %v2438, 1
      %v2446 = vsel %vm1107, %v2443, %v2445
      %v2449 = vadd.f32 %v2434, %v2444
      %v2450 = vadd.f32 %v2435, %v2446
      %v2451 = vmul.f32 %v2431, %v1120
      %v2452 = vmul.f32 %v2432, %v1120
      %v2453 = vmul.f32 %v2433, %v1120
      %v2457 = vrot.slane %v2451, 2
      %v2458 = vrot.slane %v2452, 2
      %v2459 = vsel %vm1127, %v2457, %v2458
      %v2460 = vrot.slane %v2453, 2
      %v2461 = vsel %vm1127, %v2458, %v2460
      %v2464 = vadd.f32 %v2449, %v2459
      %v2465 = vadd.f32 %v2450, %v2461
      %v2466 = vld [vmem:[%s2385] sm:$0xff]
      %v2467 = vld [vmem:[%s2385 + $0x8] sm:$0xff]
      %v2468 = vld [vmem:[%s2385 + $0x10] sm:$0xff]
      %v2469 = vmul.f32 %v2466, %v1144
      %v2470 = vmul.f32 %v2467, %v1144
      %v2471 = vadd.f32 %v2464, %v2469
      %v2472 = vadd.f32 %v2465, %v2470
      %v2473 = vmul.f32 %v2466, %v1152
      %v2474 = vmul.f32 %v2467, %v1152
      %v2475 = vmul.f32 %v2468, %v1152
      %v2479 = vrot.slane %v2473, 1
      %v2480 = vrot.slane %v2474, 1
      %v2481 = vsel %vm1107, %v2479, %v2480
      %v2482 = vrot.slane %v2475, 1
      %v2483 = vsel %vm1107, %v2480, %v2482
      %v2486 = vadd.f32 %v2471, %v2481
      %v2487 = vadd.f32 %v2472, %v2483
      %v2488 = vmul.f32 %v2466, %v1171
      %v2489 = vmul.f32 %v2467, %v1171
      %v2490 = vmul.f32 %v2468, %v1171
      %v2494 = vrot.slane %v2488, 2
      %v2495 = vrot.slane %v2489, 2
      %v2496 = vsel %vm1127, %v2494, %v2495
      %v2497 = vrot.slane %v2490, 2
      %v2498 = vsel %vm1127, %v2495, %v2497
      %v2501 = vadd.f32 %v2486, %v2496
      %v2502 = vadd.f32 %v2487, %v2498
      %s2503 = scalar_lea.vmem [#allocation2], 312
      %v2504 = vld [vmem:[%s2503] sm:$0xff]
      %v2505 = vld [vmem:[%s2503 + $0x8] sm:$0xff]
      %v2506 = vld [vmem:[%s2503 + $0x10] sm:$0xff]
      %v2507 = vmul.f32 %v2504, %v1194
      %v2508 = vmul.f32 %v2505, %v1194
      %v2509 = vadd.f32 %v2501, %v2507
      %v2510 = vadd.f32 %v2502, %v2508
      %v2511 = vmul.f32 %v2504, %v1202
      %v2512 = vmul.f32 %v2505, %v1202
      %v2513 = vmul.f32 %v2506, %v1202
      %v2517 = vrot.slane %v2511, 1
      %v2518 = vrot.slane %v2512, 1
      %v2519 = vsel %vm1107, %v2517, %v2518
      %v2520 = vrot.slane %v2513, 1
      %v2521 = vsel %vm1107, %v2518, %v2520
      %v2524 = vadd.f32 %v2509, %v2519
      %v2525 = vadd.f32 %v2510, %v2521
      %v2526 = vmul.f32 %v2504, %v1221
      %v2527 = vmul.f32 %v2505, %v1221
      %v2528 = vmul.f32 %v2506, %v1221
      %v2532 = vrot.slane %v2526, 2
      %v2533 = vrot.slane %v2527, 2
      %v2534 = vsel %vm1127, %v2532, %v2533
      %v2535 = vrot.slane %v2528, 2
      %v2536 = vsel %vm1127, %v2533, %v2535
      %v2539 = vadd.f32 %v2524, %v2534
      %v2540 = vadd.f32 %v2525, %v2536
      %v2541 = vadd.f32 %v2539, %v1241
      %v2542 = vadd.f32 %v2540, %v1241
      %v2543 = vmax.f32 %v2541, 0.0
      %v2544 = vmax.f32 %v2542, 0.0
      %v2545 = vmin.f32 %v2543, 6.0
      %v2546 = vmin.f32 %v2544, 6.0
      %2547 = vst.msk [vmem:[#allocation3 + $0xb0] sm:$0xff] %vm979, %v2545
      %2548 = vst.msk [vmem:[#allocation3 + $0xb8] sm:$0xff] %vm979, %v2546
      %v2549 = vld [vmem:[%s2385] sm:$0xff]
      %v2550 = vld [vmem:[%s2385 + $0x8] sm:$0xff]
      %v2551 = vld [vmem:[%s2385 + $0x10] sm:$0xff]
      %v2552 = vmul.f32 %v2549, %v1094
      %v2553 = vmul.f32 %v2550, %v1094
      %v2554 = vmul.f32 %v2549, %v1100
      %v2555 = vmul.f32 %v2550, %v1100
      %v2556 = vmul.f32 %v2551, %v1100
      %v2560 = vrot.slane %v2554, 1
      %v2561 = vrot.slane %v2555, 1
      %v2562 = vsel %vm1107, %v2560, %v2561
      %v2563 = vrot.slane %v2556, 1
      %v2564 = vsel %vm1107, %v2561, %v2563
      %v2567 = vadd.f32 %v2552, %v2562
      %v2568 = vadd.f32 %v2553, %v2564
      %v2569 = vmul.f32 %v2549, %v1120
      %v2570 = vmul.f32 %v2550, %v1120
      %v2571 = vmul.f32 %v2551, %v1120
      %v2575 = vrot.slane %v2569, 2
      %v2576 = vrot.slane %v2570, 2
      %v2577 = vsel %vm1127, %v2575, %v2576
      %v2578 = vrot.slane %v2571, 2
      %v2579 = vsel %vm1127, %v2576, %v2578
      %v2582 = vadd.f32 %v2567, %v2577
      %v2583 = vadd.f32 %v2568, %v2579
      %v2584 = vld [vmem:[%s2503] sm:$0xff]
      %v2585 = vld [vmem:[%s2503 + $0x8] sm:$0xff]
      %v2586 = vld [vmem:[%s2503 + $0x10] sm:$0xff]
      %v2587 = vmul.f32 %v2584, %v1144
      %v2588 = vmul.f32 %v2585, %v1144
      %v2589 = vadd.f32 %v2582, %v2587
      %v2590 = vadd.f32 %v2583, %v2588
      %v2591 = vmul.f32 %v2584, %v1152
      %v2592 = vmul.f32 %v2585, %v1152
      %v2593 = vmul.f32 %v2586, %v1152
      %v2597 = vrot.slane %v2591, 1
      %v2598 = vrot.slane %v2592, 1
      %v2599 = vsel %vm1107, %v2597, %v2598
      %v2600 = vrot.slane %v2593, 1
      %v2601 = vsel %vm1107, %v2598, %v2600
      %v2604 = vadd.f32 %v2589, %v2599
      %v2605 = vadd.f32 %v2590, %v2601
      %v2606 = vmul.f32 %v2584, %v1171
      %v2607 = vmul.f32 %v2585, %v1171
      %v2608 = vmul.f32 %v2586, %v1171
      %v2612 = vrot.slane %v2606, 2
      %v2613 = vrot.slane %v2607, 2
      %v2614 = vsel %vm1127, %v2612, %v2613
      %v2615 = vrot.slane %v2608, 2
      %v2616 = vsel %vm1127, %v2613, %v2615
      %v2619 = vadd.f32 %v2604, %v2614
      %v2620 = vadd.f32 %v2605, %v2616
      %s2621 = scalar_lea.vmem [#allocation2], 336
      %v2622 = vld [vmem:[%s2621] sm:$0xff]
      %v2623 = vld [vmem:[%s2621 + $0x8] sm:$0xff]
      %v2624 = vld [vmem:[%s2621 + $0x10] sm:$0xff]
      %v2625 = vmul.f32 %v2622, %v1194
      %v2626 = vmul.f32 %v2623, %v1194
      %v2627 = vadd.f32 %v2619, %v2625
      %v2628 = vadd.f32 %v2620, %v2626
      %v2629 = vmul.f32 %v2622, %v1202
      %v2630 = vmul.f32 %v2623, %v1202
      %v2631 = vmul.f32 %v2624, %v1202
      %v2635 = vrot.slane %v2629, 1
      %v2636 = vrot.slane %v2630, 1
      %v2637 = vsel %vm1107, %v2635, %v2636
      %v2638 = vrot.slane %v2631, 1
      %v2639 = vsel %vm1107, %v2636, %v2638
      %v2642 = vadd.f32 %v2627, %v2637
      %v2643 = vadd.f32 %v2628, %v2639
      %v2644 = vmul.f32 %v2622, %v1221
      %v2645 = vmul.f32 %v2623, %v1221
      %v2646 = vmul.f32 %v2624, %v1221
      %v2650 = vrot.slane %v2644, 2
      %v2651 = vrot.slane %v2645, 2
      %v2652 = vsel %vm1127, %v2650, %v2651
      %v2653 = vrot.slane %v2646, 2
      %v2654 = vsel %vm1127, %v2651, %v2653
      %v2657 = vadd.f32 %v2642, %v2652
      %v2658 = vadd.f32 %v2643, %v2654
      %v2659 = vadd.f32 %v2657, %v1241
      %v2660 = vadd.f32 %v2658, %v1241
      %v2661 = vmax.f32 %v2659, 0.0
      %v2662 = vmax.f32 %v2660, 0.0
      %v2663 = vmin.f32 %v2661, 6.0
      %v2664 = vmin.f32 %v2662, 6.0
      %2665 = vst.msk [vmem:[#allocation3 + $0xc0] sm:$0xff] %vm979, %v2663
      %2666 = vst.msk [vmem:[#allocation3 + $0xc8] sm:$0xff] %vm979, %v2664
      %v2667 = vld [vmem:[%s2503] sm:$0xff]
      %v2668 = vld [vmem:[%s2503 + $0x8] sm:$0xff]
      %v2669 = vld [vmem:[%s2503 + $0x10] sm:$0xff]
      %v2670 = vmul.f32 %v2667, %v1094
      %v2671 = vmul.f32 %v2668, %v1094
      %v2672 = vmul.f32 %v2667, %v1100
      %v2673 = vmul.f32 %v2668, %v1100
      %v2674 = vmul.f32 %v2669, %v1100
      %v2678 = vrot.slane %v2672, 1
      %v2679 = vrot.slane %v2673, 1
      %v2680 = vsel %vm1107, %v2678, %v2679
      %v2681 = vrot.slane %v2674, 1
      %v2682 = vsel %vm1107, %v2679, %v2681
      %v2685 = vadd.f32 %v2670, %v2680
      %v2686 = vadd.f32 %v2671, %v2682
      %v2687 = vmul.f32 %v2667, %v1120
      %v2688 = vmul.f32 %v2668, %v1120
      %v2689 = vmul.f32 %v2669, %v1120
      %v2693 = vrot.slane %v2687, 2
      %v2694 = vrot.slane %v2688, 2
      %v2695 = vsel %vm1127, %v2693, %v2694
      %v2696 = vrot.slane %v2689, 2
      %v2697 = vsel %vm1127, %v2694, %v2696
      %v2700 = vadd.f32 %v2685, %v2695
      %v2701 = vadd.f32 %v2686, %v2697
      %v2702 = vld [vmem:[%s2621] sm:$0xff]
      %v2703 = vld [vmem:[%s2621 + $0x8] sm:$0xff]
      %v2704 = vld [vmem:[%s2621 + $0x10] sm:$0xff]
      %v2705 = vmul.f32 %v2702, %v1144
      %v2706 = vmul.f32 %v2703, %v1144
      %v2707 = vadd.f32 %v2700, %v2705
      %v2708 = vadd.f32 %v2701, %v2706
      %v2709 = vmul.f32 %v2702, %v1152
      %v2710 = vmul.f32 %v2703, %v1152
      %v2711 = vmul.f32 %v2704, %v1152
      %v2715 = vrot.slane %v2709, 1
      %v2716 = vrot.slane %v2710, 1
      %v2717 = vsel %vm1107, %v2715, %v2716
      %v2718 = vrot.slane %v2711, 1
      %v2719 = vsel %vm1107, %v2716, %v2718
      %v2722 = vadd.f32 %v2707, %v2717
      %v2723 = vadd.f32 %v2708, %v2719
      %v2724 = vmul.f32 %v2702, %v1171
      %v2725 = vmul.f32 %v2703, %v1171
      %v2726 = vmul.f32 %v2704, %v1171
      %v2730 = vrot.slane %v2724, 2
      %v2731 = vrot.slane %v2725, 2
      %v2732 = vsel %vm1127, %v2730, %v2731
      %v2733 = vrot.slane %v2726, 2
      %v2734 = vsel %vm1127, %v2731, %v2733
      %v2737 = vadd.f32 %v2722, %v2732
      %v2738 = vadd.f32 %v2723, %v2734
      %s2739 = scalar_lea.vmem [#allocation2], 360
      %v2740 = vld [vmem:[%s2739] sm:$0xff]
      %v2741 = vld [vmem:[%s2739 + $0x8] sm:$0xff]
      %v2742 = vld [vmem:[%s2739 + $0x10] sm:$0xff]
      %v2743 = vmul.f32 %v2740, %v1194
      %v2744 = vmul.f32 %v2741, %v1194
      %v2745 = vadd.f32 %v2737, %v2743
      %v2746 = vadd.f32 %v2738, %v2744
      %v2747 = vmul.f32 %v2740, %v1202
      %v2748 = vmul.f32 %v2741, %v1202
      %v2749 = vmul.f32 %v2742, %v1202
      %v2753 = vrot.slane %v2747, 1
      %v2754 = vrot.slane %v2748, 1
      %v2755 = vsel %vm1107, %v2753, %v2754
      %v2756 = vrot.slane %v2749, 1
      %v2757 = vsel %vm1107, %v2754, %v2756
      %v2760 = vadd.f32 %v2745, %v2755
      %v2761 = vadd.f32 %v2746, %v2757
      %v2762 = vmul.f32 %v2740, %v1221
      %v2763 = vmul.f32 %v2741, %v1221
      %v2764 = vmul.f32 %v2742, %v1221
      %v2768 = vrot.slane %v2762, 2
      %v2769 = vrot.slane %v2763, 2
      %v2770 = vsel %vm1127, %v2768, %v2769
      %v2771 = vrot.slane %v2764, 2
      %v2772 = vsel %vm1127, %v2769, %v2771
      %v2775 = vadd.f32 %v2760, %v2770
      %v2776 = vadd.f32 %v2761, %v2772
      %v2777 = vadd.f32 %v2775, %v1241
      %v2778 = vadd.f32 %v2776, %v1241
      %v2779 = vmax.f32 %v2777, 0.0
      %v2780 = vmax.f32 %v2778, 0.0
      %v2781 = vmin.f32 %v2779, 6.0
      %v2782 = vmin.f32 %v2780, 6.0
      %2783 = vst.msk [vmem:[#allocation3 + $0xd0] sm:$0xff] %vm979, %v2781
      %2784 = vst.msk [vmem:[#allocation3 + $0xd8] sm:$0xff] %vm979, %v2782
      %v2785 = vld [vmem:[%s2621] sm:$0xff]
      %v2786 = vld [vmem:[%s2621 + $0x8] sm:$0xff]
      %v2787 = vld [vmem:[%s2621 + $0x10] sm:$0xff]
      %v2788 = vmul.f32 %v2785, %v1094
      %v2789 = vmul.f32 %v2786, %v1094
      %v2790 = vmul.f32 %v2785, %v1100
      %v2791 = vmul.f32 %v2786, %v1100
      %v2792 = vmul.f32 %v2787, %v1100
      %v2796 = vrot.slane %v2790, 1
      %v2797 = vrot.slane %v2791, 1
      %v2798 = vsel %vm1107, %v2796, %v2797
      %v2799 = vrot.slane %v2792, 1
      %v2800 = vsel %vm1107, %v2797, %v2799
      %v2803 = vadd.f32 %v2788, %v2798
      %v2804 = vadd.f32 %v2789, %v2800
      %v2805 = vmul.f32 %v2785, %v1120
      %v2806 = vmul.f32 %v2786, %v1120
      %v2807 = vmul.f32 %v2787, %v1120
      %v2811 = vrot.slane %v2805, 2
      %v2812 = vrot.slane %v2806, 2
      %v2813 = vsel %vm1127, %v2811, %v2812
      %v2814 = vrot.slane %v2807, 2
      %v2815 = vsel %vm1127, %v2812, %v2814
      %v2818 = vadd.f32 %v2803, %v2813
      %v2819 = vadd.f32 %v2804, %v2815
      %v2820 = vld [vmem:[%s2739] sm:$0xff]
      %v2821 = vld [vmem:[%s2739 + $0x8] sm:$0xff]
      %v2822 = vld [vmem:[%s2739 + $0x10] sm:$0xff]
      %v2823 = vmul.f32 %v2820, %v1144
      %v2824 = vmul.f32 %v2821, %v1144
      %v2825 = vadd.f32 %v2818, %v2823
      %v2826 = vadd.f32 %v2819, %v2824
      %v2827 = vmul.f32 %v2820, %v1152
      %v2828 = vmul.f32 %v2821, %v1152
      %v2829 = vmul.f32 %v2822, %v1152
      %v2833 = vrot.slane %v2827, 1
      %v2834 = vrot.slane %v2828, 1
      %v2835 = vsel %vm1107, %v2833, %v2834
      %v2836 = vrot.slane %v2829, 1
      %v2837 = vsel %vm1107, %v2834, %v2836
      %v2840 = vadd.f32 %v2825, %v2835
      %v2841 = vadd.f32 %v2826, %v2837
      %v2842 = vmul.f32 %v2820, %v1171
      %v2843 = vmul.f32 %v2821, %v1171
      %v2844 = vmul.f32 %v2822, %v1171
      %v2848 = vrot.slane %v2842, 2
      %v2849 = vrot.slane %v2843, 2
      %v2850 = vsel %vm1127, %v2848, %v2849
      %v2851 = vrot.slane %v2844, 2
      %v2852 = vsel %vm1127, %v2849, %v2851
      %v2855 = vadd.f32 %v2840, %v2850
      %v2856 = vadd.f32 %v2841, %v2852
      %s2857 = scalar_lea.vmem [#allocation2], 384
      %v2858 = vld [vmem:[%s2857] sm:$0xff]
      %v2859 = vld [vmem:[%s2857 + $0x8] sm:$0xff]
      %v2860 = vld [vmem:[%s2857 + $0x10] sm:$0xff]
      %v2861 = vmul.f32 %v2858, %v1194
      %v2862 = vmul.f32 %v2859, %v1194
      %v2863 = vadd.f32 %v2855, %v2861
      %v2864 = vadd.f32 %v2856, %v2862
      %v2865 = vmul.f32 %v2858, %v1202
      %v2866 = vmul.f32 %v2859, %v1202
      %v2867 = vmul.f32 %v2860, %v1202
      %v2871 = vrot.slane %v2865, 1
      %v2872 = vrot.slane %v2866, 1
      %v2873 = vsel %vm1107, %v2871, %v2872
      %v2874 = vrot.slane %v2867, 1
      %v2875 = vsel %vm1107, %v2872, %v2874
      %v2878 = vadd.f32 %v2863, %v2873
      %v2879 = vadd.f32 %v2864, %v2875
      %v2880 = vmul.f32 %v2858, %v1221
      %v2881 = vmul.f32 %v2859, %v1221
      %v2882 = vmul.f32 %v2860, %v1221
      %v2886 = vrot.slane %v2880, 2
      %v2887 = vrot.slane %v2881, 2
      %v2888 = vsel %vm1127, %v2886, %v2887
      %v2889 = vrot.slane %v2882, 2
      %v2890 = vsel %vm1127, %v2887, %v2889
      %v2893 = vadd.f32 %v2878, %v2888
      %v2894 = vadd.f32 %v2879, %v2890
      %v2895 = vadd.f32 %v2893, %v1241
      %v2896 = vadd.f32 %v2894, %v1241
      %v2897 = vmax.f32 %v2895, 0.0
      %v2898 = vmax.f32 %v2896, 0.0
      %v2899 = vmin.f32 %v2897, 6.0
      %v2900 = vmin.f32 %v2898, 6.0
      %2901 = vst.msk [vmem:[#allocation3 + $0xe0] sm:$0xff] %vm979, %v2899
      %2902 = vst.msk [vmem:[#allocation3 + $0xe8] sm:$0xff] %vm979, %v2900
      %v2903 = vld [vmem:[%s2739] sm:$0xff]
      %v2904 = vld [vmem:[%s2739 + $0x8] sm:$0xff]
      %v2905 = vld [vmem:[%s2739 + $0x10] sm:$0xff]
      %v2906 = vmul.f32 %v2903, %v1094
      %v2907 = vmul.f32 %v2904, %v1094
      %v2908 = vmul.f32 %v2903, %v1100
      %v2909 = vmul.f32 %v2904, %v1100
      %v2910 = vmul.f32 %v2905, %v1100
      %v2914 = vrot.slane %v2908, 1
      %v2915 = vrot.slane %v2909, 1
      %v2916 = vsel %vm1107, %v2914, %v2915
      %v2917 = vrot.slane %v2910, 1
      %v2918 = vsel %vm1107, %v2915, %v2917
      %v2921 = vadd.f32 %v2906, %v2916
      %v2922 = vadd.f32 %v2907, %v2918
      %v2923 = vmul.f32 %v2903, %v1120
      %v2924 = vmul.f32 %v2904, %v1120
      %v2925 = vmul.f32 %v2905, %v1120
      %v2929 = vrot.slane %v2923, 2
      %v2930 = vrot.slane %v2924, 2
      %v2931 = vsel %vm1127, %v2929, %v2930
      %v2932 = vrot.slane %v2925, 2
      %v2933 = vsel %vm1127, %v2930, %v2932
      %v2936 = vadd.f32 %v2921, %v2931
      %v2937 = vadd.f32 %v2922, %v2933
      %v2938 = vld [vmem:[%s2857] sm:$0xff]
      %v2939 = vld [vmem:[%s2857 + $0x8] sm:$0xff]
      %v2940 = vld [vmem:[%s2857 + $0x10] sm:$0xff]
      %v2941 = vmul.f32 %v2938, %v1144
      %v2942 = vmul.f32 %v2939, %v1144
      %v2943 = vadd.f32 %v2936, %v2941
      %v2944 = vadd.f32 %v2937, %v2942
      %v2945 = vmul.f32 %v2938, %v1152
      %v2946 = vmul.f32 %v2939, %v1152
      %v2947 = vmul.f32 %v2940, %v1152
      %v2951 = vrot.slane %v2945, 1
      %v2952 = vrot.slane %v2946, 1
      %v2953 = vsel %vm1107, %v2951, %v2952
      %v2954 = vrot.slane %v2947, 1
      %v2955 = vsel %vm1107, %v2952, %v2954
      %v2958 = vadd.f32 %v2943, %v2953
      %v2959 = vadd.f32 %v2944, %v2955
      %v2960 = vmul.f32 %v2938, %v1171
      %v2961 = vmul.f32 %v2939, %v1171
      %v2962 = vmul.f32 %v2940, %v1171
      %v2966 = vrot.slane %v2960, 2
      %v2967 = vrot.slane %v2961, 2
      %v2968 = vsel %vm1127, %v2966, %v2967
      %v2969 = vrot.slane %v2962, 2
      %v2970 = vsel %vm1127, %v2967, %v2969
      %v2973 = vadd.f32 %v2958, %v2968
      %v2974 = vadd.f32 %v2959, %v2970
      %v2975 = vld [vmem:[%s1074] sm:$0xff]
      %v2976 = vld [vmem:[%s1074 + $0x8] sm:$0xff]
      %v2977 = vld [vmem:[%s1074 + $0x10] sm:$0xff]
      %v2978 = vmul.f32 %v2975, %v1194
      %v2979 = vmul.f32 %v2976, %v1194
      %v2980 = vadd.f32 %v2973, %v2978
      %v2981 = vadd.f32 %v2974, %v2979
      %v2982 = vmul.f32 %v2975, %v1202
      %v2983 = vmul.f32 %v2976, %v1202
      %v2984 = vmul.f32 %v2977, %v1202
      %v2988 = vrot.slane %v2982, 1
      %v2989 = vrot.slane %v2983, 1
      %v2990 = vsel %vm1107, %v2988, %v2989
      %v2991 = vrot.slane %v2984, 1
      %v2992 = vsel %vm1107, %v2989, %v2991
      %v2995 = vadd.f32 %v2980, %v2990
      %v2996 = vadd.f32 %v2981, %v2992
      %v2997 = vmul.f32 %v2975, %v1221
      %v2998 = vmul.f32 %v2976, %v1221
      %v2999 = vmul.f32 %v2977, %v1221
      %v3003 = vrot.slane %v2997, 2
      %v3004 = vrot.slane %v2998, 2
      %v3005 = vsel %vm1127, %v3003, %v3004
      %v3006 = vrot.slane %v2999, 2
      %v3007 = vsel %vm1127, %v3004, %v3006
      %v3010 = vadd.f32 %v2995, %v3005
      %v3011 = vadd.f32 %v2996, %v3007
      %v3012 = vadd.f32 %v3010, %v1241
      %v3013 = vadd.f32 %v3011, %v1241
      %v3014 = vmax.f32 %v3012, 0.0
      %v3015 = vmax.f32 %v3013, 0.0
      %v3016 = vmin.f32 %v3014, 6.0
      %v3017 = vmin.f32 %v3015, 6.0
      %3018 = vst.msk [vmem:[#allocation3 + $0xf0] sm:$0xff] %vm979, %v3016
      %3019 = vst.msk [vmem:[#allocation3 + $0xf8] sm:$0xff] %vm979, %v3017
      %v3020 = vld [vmem:[#allocation3] sm:$0xff]
      %v3021 = vld [vmem:[#allocation3 + $0x8] sm:$0xff]
      %v3022 = vld [vmem:[#allocation3 + $0x10] sm:$0xff]
      %v3023 = vld [vmem:[#allocation3 + $0x18] sm:$0xff]
      %v3024 = vld [vmem:[#allocation3 + $0x20] sm:$0xff]
      %v3025 = vld [vmem:[#allocation3 + $0x28] sm:$0xff]
      %v3026 = vld [vmem:[#allocation3 + $0x30] sm:$0xff]
      %v3027 = vld [vmem:[#allocation3 + $0x38] sm:$0xff]
      %v3028 = vld [vmem:[#allocation3 + $0x40] sm:$0xff]
      %v3029 = vld [vmem:[#allocation3 + $0x48] sm:$0xff]
      %v3030 = vld [vmem:[#allocation3 + $0x50] sm:$0xff]
      %v3031 = vld [vmem:[#allocation3 + $0x58] sm:$0xff]
      %v3032 = vld [vmem:[#allocation3 + $0x60] sm:$0xff]
      %v3033 = vld [vmem:[#allocation3 + $0x68] sm:$0xff]
      %v3034 = vld [vmem:[#allocation3 + $0x70] sm:$0xff]
      %v3035 = vld [vmem:[#allocation3 + $0x78] sm:$0xff]
      %v3036 = vld [vmem:[#allocation3 + $0x80] sm:$0xff]
      %v3037 = vld [vmem:[#allocation3 + $0x88] sm:$0xff]
      %v3038 = vld [vmem:[#allocation3 + $0x90] sm:$0xff]
      %v3039 = vld [vmem:[#allocation3 + $0x98] sm:$0xff]
      %v3040 = vld [vmem:[#allocation3 + $0xa0] sm:$0xff]
      %v3041 = vld [vmem:[#allocation3 + $0xa8] sm:$0xff]
      %v3042 = vld [vmem:[#allocation3 + $0xb0] sm:$0xff]
      %v3043 = vld [vmem:[#allocation3 + $0xb8] sm:$0xff]
      %v3044 = vld [vmem:[#allocation3 + $0xc0] sm:$0xff]
      %v3045 = vld [vmem:[#allocation3 + $0xc8] sm:$0xff]
      %v3046 = vld [vmem:[#allocation3 + $0xd0] sm:$0xff]
      %v3047 = vld [vmem:[#allocation3 + $0xd8] sm:$0xff]
      %v3048 = vld [vmem:[#allocation3 + $0xe0] sm:$0xff]
      %v3049 = vld [vmem:[#allocation3 + $0xe8] sm:$0xff]
      %v3050 = vld [vmem:[#allocation3 + $0xf0] sm:$0xff]
      %v3051 = vld [vmem:[#allocation3 + $0xf8] sm:$0xff]
      %v3052 = vld [vmem:[%s5] sm:$0xff]
      %v3053 = vld [vmem:[%s5 + $0x8] sm:$0xff]
      %v3054 = vld [vmem:[%s6] sm:$0x1]
      %v3056 = vlaneseq
      %v3057 = vshrl.u32 %v3056, 7
      %v3058 = vsub.s32 0, %v3057
      %v3059 = vrot.slane %v3054, %v3058
      %v3062 = vsel %vm979, %v3020, 0
      %v3065 = vsel %vm979, %v3021, 0
      %v3068 = vsel %vm979, %v3022, 0
      %v3071 = vsel %vm979, %v3023, 0
      %v3074 = vsel %vm979, %v3024, 0
      %v3077 = vsel %vm979, %v3025, 0
      %v3080 = vsel %vm979, %v3026, 0
      %v3083 = vsel %vm979, %v3027, 0
      %v3086 = vsel %vm979, %v3028, 0
      %v3089 = vsel %vm979, %v3029, 0
      %v3092 = vsel %vm979, %v3030, 0
      %v3095 = vsel %vm979, %v3031, 0
      %v3098 = vsel %vm979, %v3032, 0
      %v3101 = vsel %vm979, %v3033, 0
      %v3104 = vsel %vm979, %v3034, 0
      %v3107 = vsel %vm979, %v3035, 0
      %v3110 = vsel %vm979, %v3036, 0
      %v3113 = vsel %vm979, %v3037, 0
      %v3116 = vsel %vm979, %v3038, 0
      %v3119 = vsel %vm979, %v3039, 0
      %v3122 = vsel %vm979, %v3040, 0
      %v3125 = vsel %vm979, %v3041, 0
      %v3128 = vsel %vm979, %v3042, 0
      %v3131 = vsel %vm979, %v3043, 0
      %v3134 = vsel %vm979, %v3044, 0
      %v3137 = vsel %vm979, %v3045, 0
      %v3140 = vsel %vm979, %v3046, 0
      %v3143 = vsel %vm979, %v3047, 0
      %v3146 = vsel %vm979, %v3048, 0
      %v3149 = vsel %vm979, %v3049, 0
      %v3152 = vsel %vm979, %v3050, 0
      %v3155 = vsel %vm979, %v3051, 0
      %3157 = vmatprep.subr.mxu0 0.0
      %3158 = vmatpush1.msra.mxu0 %v3052
      %3159 = vmatprep.subr.mxu0 0.0
      %3160 = vmatpush1.msra.mxu0 %v3053
      %3161 = vmatprep.subr.mxu0 0.0
      %3162 = vmatpush1.msra.mxu0 0.0
      %3163 = vmatprep.subr.mxu0 0.0
      %3164 = vmatpush1.msra.mxu0 0.0
      %3165 = vmatprep.subr.mxu0 0.0
      %3166 = vmatpush1.msra.mxu0 0.0
      %3167 = vmatprep.subr.mxu0 0.0
      %3168 = vmatpush1.msra.mxu0 0.0
      %3169 = vmatprep.subr.mxu0 0.0
      %3170 = vmatpush1.msra.mxu0 0.0
      %3171 = vmatprep.subr.mxu0 0.0
      %3172 = vmatpush1.msra.mxu0 0.0
      %3173 = vmatprep.subr.mxu0 0.0
      %3174 = vmatpush1.msra.mxu0 0.0
      %3175 = vmatprep.subr.mxu0 0.0
      %3176 = vmatpush1.msra.mxu0 0.0
      %3177 = vmatprep.subr.mxu0 0.0
      %3178 = vmatpush1.msra.mxu0 0.0
      %3179 = vmatprep.subr.mxu0 0.0
      %3180 = vmatpush1.msra.mxu0 0.0
      %3181 = vmatprep.subr.mxu0 0.0
      %3182 = vmatpush1.msra.mxu0 0.0
      %3183 = vmatprep.subr.mxu0 0.0
      %3184 = vmatpush1.msra.mxu0 0.0
      %3185 = vmatprep.subr.mxu0 0.0
      %3186 = vmatpush1.msra.mxu0 0.0
      %3187 = vmatprep.subr.mxu0 0.0
      %3188 = vmatpush1.msra.mxu0 0.0
      %3189 = vmatprep.subr.mxu0 0.0
      %3190 = vmatpush1.msra.mxu0 0.0
      %3191 = vmatprep.subr.mxu0 0.0
      %3192 = vmatpush1.msra.mxu0 0.0
      %3193 = vmatprep.subr.mxu0 0.0
      %3194 = vmatpush1.msra.mxu0 0.0
      %3195 = vmatprep.subr.mxu0 0.0
      %3196 = vmatpush1.msra.mxu0 0.0
      %3197 = vmatprep.subr.mxu0 0.0
      %3198 = vmatpush1.msra.mxu0 0.0
      %3199 = vmatprep.subr.mxu0 0.0
      %3200 = vmatpush1.msra.mxu0 0.0
      %3201 = vmatprep.subr.mxu0 0.0
      %3202 = vmatpush1.msra.mxu0 0.0
      %3203 = vmatprep.subr.mxu0 0.0
      %3204 = vmatpush1.msra.mxu0 0.0
      %3205 = vmatprep.subr.mxu0 0.0
      %3206 = vmatpush1.msra.mxu0 0.0
      %3207 = vmatprep.subr.mxu0 0.0
      %3208 = vmatpush1.msra.mxu0 0.0
      %3209 = vmatprep.subr.mxu0 0.0
      %3210 = vmatpush1.msra.mxu0 0.0
      %3211 = vmatprep.subr.mxu0 0.0
      %3212 = vmatpush1.msra.mxu0 0.0
      %3213 = vmatprep.subr.mxu0 0.0
      %3214 = vmatpush1.msra.mxu0 0.0
      %3215 = vmatprep.subr.mxu0 0.0
      %3216 = vmatpush1.msra.mxu0 0.0
      %3217 = vmatprep.subr.mxu0 0.0
      %3218 = vmatpush1.msra.mxu0 0.0
      %3219 = vmatprep.subr.mxu0 0.0
      %3220 = vmatpush1.msra.mxu0 0.0
      %3221 = vmatprep.mubr.f32.mxu0 0.0
      %3222 = vmatmul.mubr.f32.gmra.mrb[0].mxu0 %v3062
      %v3223 = vpop.f32.mrb[0].mxu0
      %v3224 = vadd.f32 %v3059, %v3223
      %v3225 = vpop.f32.mrb[0].mxu0
      %3226 = vmatprep.mubr.f32.mxu0 0.0
      %3227 = vmatmul.mubr.f32.gmra.mrb[0].mxu0 %v3065
      %v3228 = vpop.f32.mrb[0].mxu0
      %v3229 = vadd.f32 %v3059, %v3228
      %v3230 = vpop.f32.mrb[0].mxu0
      %3231 = vmatprep.mubr.f32.mxu0 0.0
      %3232 = vmatmul.mubr.f32.gmra.mrb[0].mxu0 %v3068
      %v3233 = vpop.f32.mrb[0].mxu0
      %v3234 = vadd.f32 %v3059, %v3233
      %v3235 = vpop.f32.mrb[0].mxu0
      %3236 = vmatprep.mubr.f32.mxu0 0.0
      %3237 = vmatmul.mubr.f32.gmra.mrb[0].mxu0 %v3071
      %v3238 = vpop.f32.mrb[0].mxu0
      %v3239 = vadd.f32 %v3059, %v3238
      %v3240 = vpop.f32.mrb[0].mxu0
      %3241 = vmatprep.mubr.f32.mxu0 0.0
      %3242 = vmatmul.mubr.f32.gmra.mrb[0].mxu0 %v3074
      %v3243 = vpop.f32.mrb[0].mxu0
      %v3244 = vadd.f32 %v3059, %v3243
      %v3245 = vpop.f32.mrb[0].mxu0
      %3246 = vmatprep.mubr.f32.mxu0 0.0
      %3247 = vmatmul.mubr.f32.gmra.mrb[0].mxu0 %v3077
      %v3248 = vpop.f32.mrb[0].mxu0
      %v3249 = vadd.f32 %v3059, %v3248
      %v3250 = vpop.f32.mrb[0].mxu0
      %3251 = vmatprep.mubr.f32.mxu0 0.0
      %3252 = vmatmul.mubr.f32.gmra.mrb[0].mxu0 %v3080
      %v3253 = vpop.f32.mrb[0].mxu0
      %v3254 = vadd.f32 %v3059, %v3253
      %v3255 = vpop.f32.mrb[0].mxu0
      %3256 = vmatprep.mubr.f32.mxu0 0.0
      %3257 = vmatmul.mubr.f32.gmra.mrb[0].mxu0 %v3083
      %v3258 = vpop.f32.mrb[0].mxu0
      %v3259 = vadd.f32 %v3059, %v3258
      %v3260 = vpop.f32.mrb[0].mxu0
      %3261 = vmatprep.mubr.f32.mxu0 0.0
      %3262 = vmatmul.mubr.f32.gmra.mrb[0].mxu0 %v3086
      %v3263 = vpop.f32.mrb[0].mxu0
      %v3264 = vadd.f32 %v3059, %v3263
      %v3265 = vpop.f32.mrb[0].mxu0
      %3266 = vmatprep.mubr.f32.mxu0 0.0
      %3267 = vmatmul.mubr.f32.gmra.mrb[0].mxu0 %v3089
      %v3268 = vpop.f32.mrb[0].mxu0
      %v3269 = vadd.f32 %v3059, %v3268
      %v3270 = vpop.f32.mrb[0].mxu0
      %3271 = vmatprep.mubr.f32.mxu0 0.0
      %3272 = vmatmul.mubr.f32.gmra.mrb[0].mxu0 %v3092
      %v3273 = vpop.f32.mrb[0].mxu0
      %v3274 = vadd.f32 %v3059, %v3273
      %v3275 = vpop.f32.mrb[0].mxu0
      %3276 = vmatprep.mubr.f32.mxu0 0.0
      %3277 = vmatmul.mubr.f32.gmra.mrb[0].mxu0 %v3095
      %v3278 = vpop.f32.mrb[0].mxu0
      %v3279 = vadd.f32 %v3059, %v3278
      %v3280 = vpop.f32.mrb[0].mxu0
      %3281 = vmatprep.mubr.f32.mxu0 0.0
      %3282 = vmatmul.mubr.f32.gmra.mrb[0].mxu0 %v3098
      %v3283 = vpop.f32.mrb[0].mxu0
      %v3284 = vadd.f32 %v3059, %v3283
      %v3285 = vpop.f32.mrb[0].mxu0
      %3286 = vmatprep.mubr.f32.mxu0 0.0
      %3287 = vmatmul.mubr.f32.gmra.mrb[0].mxu0 %v3101
      %v3288 = vpop.f32.mrb[0].mxu0
      %v3289 = vadd.f32 %v3059, %v3288
      %v3290 = vpop.f32.mrb[0].mxu0
      %3291 = vmatprep.mubr.f32.mxu0 0.0
      %3292 = vmatmul.mubr.f32.gmra.mrb[0].mxu0 %v3104
      %v3293 = vpop.f32.mrb[0].mxu0
      %v3294 = vadd.f32 %v3059, %v3293
      %v3295 = vpop.f32.mrb[0].mxu0
      %3296 = vmatprep.mubr.f32.mxu0 0.0
      %3297 = vmatmul.mubr.f32.gmra.mrb[0].mxu0 %v3107
      %v3298 = vpop.f32.mrb[0].mxu0
      %v3299 = vadd.f32 %v3059, %v3298
      %v3300 = vpop.f32.mrb[0].mxu0
      %3301 = vmatprep.mubr.f32.mxu0 0.0
      %3302 = vmatmul.mubr.f32.gmra.mrb[0].mxu0 %v3110
      %v3303 = vpop.f32.mrb[0].mxu0
      %v3304 = vadd.f32 %v3059, %v3303
      %v3305 = vpop.f32.mrb[0].mxu0
      %3306 = vmatprep.mubr.f32.mxu0 0.0
      %3307 = vmatmul.mubr.f32.gmra.mrb[0].mxu0 %v3113
      %v3308 = vpop.f32.mrb[0].mxu0
      %v3309 = vadd.f32 %v3059, %v3308
      %v3310 = vpop.f32.mrb[0].mxu0
      %3311 = vmatprep.mubr.f32.mxu0 0.0
      %3312 = vmatmul.mubr.f32.gmra.mrb[0].mxu0 %v3116
      %v3313 = vpop.f32.mrb[0].mxu0
      %v3314 = vadd.f32 %v3059, %v3313
      %v3315 = vpop.f32.mrb[0].mxu0
      %3316 = vmatprep.mubr.f32.mxu0 0.0
      %3317 = vmatmul.mubr.f32.gmra.mrb[0].mxu0 %v3119
      %v3318 = vpop.f32.mrb[0].mxu0
      %v3319 = vadd.f32 %v3059, %v3318
      %v3320 = vpop.f32.mrb[0].mxu0
      %3321 = vmatprep.mubr.f32.mxu0 0.0
      %3322 = vmatmul.mubr.f32.gmra.mrb[0].mxu0 %v3122
      %v3323 = vpop.f32.mrb[0].mxu0
      %v3324 = vadd.f32 %v3059, %v3323
      %v3325 = vpop.f32.mrb[0].mxu0
      %3326 = vmatprep.mubr.f32.mxu0 0.0
      %3327 = vmatmul.mubr.f32.gmra.mrb[0].mxu0 %v3125
      %v3328 = vpop.f32.mrb[0].mxu0
      %v3329 = vadd.f32 %v3059, %v3328
      %v3330 = vpop.f32.mrb[0].mxu0
      %3331 = vmatprep.mubr.f32.mxu0 0.0
      %3332 = vmatmul.mubr.f32.gmra.mrb[0].mxu0 %v3128
      %v3333 = vpop.f32.mrb[0].mxu0
      %v3334 = vadd.f32 %v3059, %v3333
      %v3335 = vpop.f32.mrb[0].mxu0
      %3336 = vmatprep.mubr.f32.mxu0 0.0
      %3337 = vmatmul.mubr.f32.gmra.mrb[0].mxu0 %v3131
      %v3338 = vpop.f32.mrb[0].mxu0
      %v3339 = vadd.f32 %v3059, %v3338
      %v3340 = vpop.f32.mrb[0].mxu0
      %3341 = vmatprep.mubr.f32.mxu0 0.0
      %3342 = vmatmul.mubr.f32.gmra.mrb[0].mxu0 %v3134
      %v3343 = vpop.f32.mrb[0].mxu0
      %v3344 = vadd.f32 %v3059, %v3343
      %v3345 = vpop.f32.mrb[0].mxu0
      %3346 = vmatprep.mubr.f32.mxu0 0.0
      %3347 = vmatmul.mubr.f32.gmra.mrb[0].mxu0 %v3137
      %v3348 = vpop.f32.mrb[0].mxu0
      %v3349 = vadd.f32 %v3059, %v3348
      %v3350 = vpop.f32.mrb[0].mxu0
      %3351 = vmatprep.mubr.f32.mxu0 0.0
      %3352 = vmatmul.mubr.f32.gmra.mrb[0].mxu0 %v3140
      %v3353 = vpop.f32.mrb[0].mxu0
      %v3354 = vadd.f32 %v3059, %v3353
      %v3355 = vpop.f32.mrb[0].mxu0
      %3356 = vmatprep.mubr.f32.mxu0 0.0
      %3357 = vmatmul.mubr.f32.gmra.mrb[0].mxu0 %v3143
      %v3358 = vpop.f32.mrb[0].mxu0
      %v3359 = vadd.f32 %v3059, %v3358
      %v3360 = vpop.f32.mrb[0].mxu0
      %3361 = vmatprep.mubr.f32.mxu0 0.0
      %3362 = vmatmul.mubr.f32.gmra.mrb[0].mxu0 %v3146
      %v3363 = vpop.f32.mrb[0].mxu0
      %v3364 = vadd.f32 %v3059, %v3363
      %v3365 = vpop.f32.mrb[0].mxu0
      %3366 = vmatprep.mubr.f32.mxu0 0.0
      %3367 = vmatmul.mubr.f32.gmra.mrb[0].mxu0 %v3149
      %v3368 = vpop.f32.mrb[0].mxu0
      %v3369 = vadd.f32 %v3059, %v3368
      %v3370 = vpop.f32.mrb[0].mxu0
      %3371 = vmatprep.mubr.f32.mxu0 0.0
      %3372 = vmatmul.mubr.f32.gmra.mrb[0].mxu0 %v3152
      %v3373 = vpop.f32.mrb[0].mxu0
      %v3374 = vadd.f32 %v3059, %v3373
      %v3375 = vpop.f32.mrb[0].mxu0
      %3376 = vmatprep.mubr.f32.mxu0 0.0
      %3377 = vmatmul.mubr.f32.gmra.mrb[0].mxu0 %v3155
      %v3378 = vpop.f32.mrb[0].mxu0
      %v3379 = vadd.f32 %v3059, %v3378
      %v3380 = vpop.f32.mrb[0].mxu0
      %3381 = vdwg.mxu0
      %s3382 = sadd.s32 %s304, 1
      %s3383 = smul.u32 %s3382, 24
      %s3384 = scalar_lea.vmem %s292, %s3383
      %v3385 = vld [vmem:[%s3384 + $0x1] sm:$0xff]
      %v3386 = vld [vmem:[%s3384 + $0x9] sm:$0xff]
      %v3387 = vld [vmem:[%s3384 + $0x19] sm:$0xff]
      %v3388 = vld [vmem:[%s3384 + $0x21] sm:$0xff]
      %v3389 = vld [vmem:[%s3384 + $0x31] sm:$0xff]
      %v3390 = vld [vmem:[%s3384 + $0x39] sm:$0xff]
      %v3391 = vld [vmem:[%s3384 + $0x49] sm:$0xff]
      %v3392 = vld [vmem:[%s3384 + $0x51] sm:$0xff]
      %v3393 = vld [vmem:[%s3384 + $0x61] sm:$0xff]
      %v3394 = vld [vmem:[%s3384 + $0x69] sm:$0xff]
      %v3395 = vld [vmem:[%s3384 + $0x79] sm:$0xff]
      %v3396 = vld [vmem:[%s3384 + $0x81] sm:$0xff]
      %v3397 = vld [vmem:[%s3384 + $0x91] sm:$0xff]
      %v3398 = vld [vmem:[%s3384 + $0x99] sm:$0xff]
      %v3399 = vld [vmem:[%s3384 + $0xa9] sm:$0xff]
      %v3400 = vld [vmem:[%s3384 + $0xb1] sm:$0xff]
      %v3401 = vld [vmem:[%s3384 + $0xc1] sm:$0xff]
      %v3402 = vld [vmem:[%s3384 + $0xc9] sm:$0xff]
      %v3403 = vld [vmem:[%s3384 + $0xd9] sm:$0xff]
      %v3404 = vld [vmem:[%s3384 + $0xe1] sm:$0xff]
      %v3405 = vld [vmem:[%s3384 + $0xf1] sm:$0xff]
      %v3406 = vld [vmem:[%s3384 + $0xf9] sm:$0xff]
      %v3407 = vld [vmem:[%s3384 + $0x109] sm:$0xff]
      %v3408 = vld [vmem:[%s3384 + $0x111] sm:$0xff]
      %v3409 = vld [vmem:[%s3384 + $0x121] sm:$0xff]
      %v3410 = vld [vmem:[%s3384 + $0x129] sm:$0xff]
      %v3411 = vld [vmem:[%s3384 + $0x139] sm:$0xff]
      %v3412 = vld [vmem:[%s3384 + $0x141] sm:$0xff]
      %v3413 = vld [vmem:[%s3384 + $0x151] sm:$0xff]
      %v3414 = vld [vmem:[%s3384 + $0x159] sm:$0xff]
      %v3415 = vld [vmem:[%s3384 + $0x169] sm:$0xff]
      %v3416 = vld [vmem:[%s3384 + $0x171] sm:$0xff]
      %v3417 = vadd.f32 %v3224, %v3385
      %v3418 = vadd.f32 %v3229, %v3386
      %v3419 = vadd.f32 %v3234, %v3387
      %v3420 = vadd.f32 %v3239, %v3388
      %v3421 = vadd.f32 %v3244, %v3389
      %v3422 = vadd.f32 %v3249, %v3390
      %v3423 = vadd.f32 %v3254, %v3391
      %v3424 = vadd.f32 %v3259, %v3392
      %v3425 = vadd.f32 %v3264, %v3393
      %v3426 = vadd.f32 %v3269, %v3394
      %v3427 = vadd.f32 %v3274, %v3395
      %v3428 = vadd.f32 %v3279, %v3396
      %v3429 = vadd.f32 %v3284, %v3397
      %v3430 = vadd.f32 %v3289, %v3398
      %v3431 = vadd.f32 %v3294, %v3399
      %v3432 = vadd.f32 %v3299, %v3400
      %v3433 = vadd.f32 %v3304, %v3401
      %v3434 = vadd.f32 %v3309, %v3402
      %v3435 = vadd.f32 %v3314, %v3403
      %v3436 = vadd.f32 %v3319, %v3404
      %v3437 = vadd.f32 %v3324, %v3405
      %v3438 = vadd.f32 %v3329, %v3406
      %v3439 = vadd.f32 %v3334, %v3407
      %v3440 = vadd.f32 %v3339, %v3408
      %v3441 = vadd.f32 %v3344, %v3409
      %v3442 = vadd.f32 %v3349, %v3410
      %v3443 = vadd.f32 %v3354, %v3411
      %v3444 = vadd.f32 %v3359, %v3412
      %v3445 = vadd.f32 %v3364, %v3413
      %v3446 = vadd.f32 %v3369, %v3414
      %v3447 = vadd.f32 %v3374, %v3415
      %v3448 = vadd.f32 %v3379, %v3416
      %3449 = vst.msk [vmem:[%s302] sm:$0xff] %vm369, %v3417
      %3450 = vst.msk [vmem:[%s302 + $0x8] sm:$0xff] %vm369, %v3418
      %3451 = vst.msk [vmem:[%s302 + $0x10] sm:$0xff] %vm369, %v3419
      %3452 = vst.msk [vmem:[%s302 + $0x18] sm:$0xff] %vm369, %v3420
      %3453 = vst.msk [vmem:[%s302 + $0x20] sm:$0xff] %vm369, %v3421
      %3454 = vst.msk [vmem:[%s302 + $0x28] sm:$0xff] %vm369, %v3422
      %3455 = vst.msk [vmem:[%s302 + $0x30] sm:$0xff] %vm369, %v3423
      %3456 = vst.msk [vmem:[%s302 + $0x38] sm:$0xff] %vm369, %v3424
      %3457 = vst.msk [vmem:[%s302 + $0x40] sm:$0xff] %vm369, %v3425
      %3458 = vst.msk [vmem:[%s302 + $0x48] sm:$0xff] %vm369, %v3426
      %3459 = vst.msk [vmem:[%s302 + $0x50] sm:$0xff] %vm369, %v3427
      %3460 = vst.msk [vmem:[%s302 + $0x58] sm:$0xff] %vm369, %v3428
      %3461 = vst.msk [vmem:[%s302 + $0x60] sm:$0xff] %vm369, %v3429
      %3462 = vst.msk [vmem:[%s302 + $0x68] sm:$0xff] %vm369, %v3430
      %3463 = vst.msk [vmem:[%s302 + $0x70] sm:$0xff] %vm369, %v3431
      %3464 = vst.msk [vmem:[%s302 + $0x78] sm:$0xff] %vm369, %v3432
      %3465 = vst.msk [vmem:[%s302 + $0x80] sm:$0xff] %vm369, %v3433
      %3466 = vst.msk [vmem:[%s302 + $0x88] sm:$0xff] %vm369, %v3434
      %3467 = vst.msk [vmem:[%s302 + $0x90] sm:$0xff] %vm369, %v3435
      %3468 = vst.msk [vmem:[%s302 + $0x98] sm:$0xff] %vm369, %v3436
      %3469 = vst.msk [vmem:[%s302 + $0xa0] sm:$0xff] %vm369, %v3437
      %3470 = vst.msk [vmem:[%s302 + $0xa8] sm:$0xff] %vm369, %v3438
      %3471 = vst.msk [vmem:[%s302 + $0xb0] sm:$0xff] %vm369, %v3439
      %3472 = vst.msk [vmem:[%s302 + $0xb8] sm:$0xff] %vm369, %v3440
      %3473 = vst.msk [vmem:[%s302 + $0xc0] sm:$0xff] %vm369, %v3441
      %3474 = vst.msk [vmem:[%s302 + $0xc8] sm:$0xff] %vm369, %v3442
      %3475 = vst.msk [vmem:[%s302 + $0xd0] sm:$0xff] %vm369, %v3443
      %3476 = vst.msk [vmem:[%s302 + $0xd8] sm:$0xff] %vm369, %v3444
      %3477 = vst.msk [vmem:[%s302 + $0xe0] sm:$0xff] %vm369, %v3445
      %3478 = vst.msk [vmem:[%s302 + $0xe8] sm:$0xff] %vm369, %v3446
      %3479 = vst.msk [vmem:[%s302 + $0xf0] sm:$0xff] %vm369, %v3447
      %3480 = vst.msk [vmem:[%s302 + $0xf8] sm:$0xff] %vm369, %v3448
      %s3481 = smul.u32 16, %s23
      %p3482 = scmp.lt.s32.totalorder %s22, 1
      %s3483 = scalar_select %p3482, %s22, 1
      %p3484 = scmp.lt.s32.totalorder %s3481, 15
      %s3485 = scalar_select %p3484, %s3481, 15
      %s3486 = smul.addr %s3485, 2
      %s3487 = smul.addr %s3483, 32
      %s3488 = sadd.s32 %s3486, %s3487
      %s3489 = smul.addr %s3488, 8
      %s3490 = scalar_lea.vmem %s7, %s3489
      // Predicated region
      $region49: #{tpu_custom_call.1} parent=47 // pred_check
        %p3491 = pneg %p202
      $region50: #{tpu_custom_call.1} parent=47 // pred_check_branch
        %3493 = sbr.rel (%p3491) target = $region52
      $region51: #{tpu_custom_call.1} parent=47 // pred_region
        %s3494 = smul.u32 16, %s23
      $region52: #{tpu_custom_call.1} parent=47 // pred_fallthru
        _
    $region48: #{tpu_custom_call.1} parent=5 // pred_fallthru
      _
    %p3495 = scmp.le.s32.totalorder 2, %s13
    // Predicated region
    $region53: #{tpu_custom_call.1} parent=5 // pred_check
      %p3496 = pneg %p3495
    $region54: #{tpu_custom_call.1} parent=5 // pred_check_branch
      %3498 = sbr.rel (%p3496) target = $region56
    $region55: #{tpu_custom_call.1} parent=5 // pred_region
      %s3499 = ssub.s32 %s13, 2
      // Predicated region
      $region57: #{tpu_custom_call.1} parent=55 // pred_check
        %p3500 = pneg %p208
      $region58: #{tpu_custom_call.1} parent=55 // pred_check_branch
        %3502 = sbr.rel (%p3500) target = $region60
      $region59: #{tpu_custom_call.1} parent=55 // pred_region
        %s3503 = smul.u32 16, %s25
        %p3504 = scmp.lt.s32.totalorder %s24, 1
        %s3505 = scalar_select %p3504, %s24, 1
        %p3506 = scmp.lt.s32.totalorder %s3503, 15
        %s3507 = scalar_select %p3506, %s3503, 15
        %s3508 = smul.addr %s3507, 2
        %s3509 = smul.addr %s3505, 32
        %s3510 = sadd.s32 %s3508, %s3509
        %s3511 = smul.addr %s3510, 8
        %s3512 = scalar_lea.vmem %s7, %s3511
      $region60: #{tpu_custom_call.1} parent=55 // pred_fallthru
        _
    $region56: #{tpu_custom_call.1} parent=5 // pred_fallthru
      _
  $region6: #{tpu_custom_call.1} parent=0 // loop_footer
    %s17 = sadd.s32 1, %s13
  $region7: #{tpu_custom_call.1} parent=0 // loop_footer_branch
    %12 = sbr.rel target = $region3
  $region8: #{tpu_custom_call.1} parent=0 // loop_exit
    _

</llo_original>
